<compile_context>
chip_gen: v7x
topology: tpu7x:2x2x1
jax: 0.10.0
libtpu: 0.0.40
codegen_flags: <defaults>
</compile_context>

<pallas_src>
import math
import functools

import jax
import jax.numpy as jnp
from jax.experimental import pallas as pl
from jax.experimental.pallas import tpu as pltpu


_VMEM_LIMIT_BYTES = 32 * 1024 * 1024      # explicit scoped-VMEM limit (safe on v5e/v6e/v7x)
_VMEM_TILE_BUDGET = 20 * 1024 * 1024      # budget used when picking the pixel tile


def _layer_norm_cm(x, g, b, eps):
    """Channel-major LayerNorm: x is (C, P), normalize over the channel (sublane) axis."""
    mu = jnp.mean(x, axis=0, keepdims=True)
    xc = x - mu
    var = jnp.mean(xc * xc, axis=0, keepdims=True)
    return xc * jax.lax.rsqrt(var + eps) * g + b


def _fusion_kernel(rec_ref,                                   # SMEM (B,) int32 (scalar prefetch)
                   k_ref, v_ref,                              # (1, Nmax, C, TP) tiles
                   wkq_ref, bkq_ref, wv_ref, bv_ref, wo_ref, bo_ref,
                   w1_ref, b1_ref, w2_ref, b2_ref,
                   g1_ref, be1_ref, g2_ref, be2_ref,
                   hblk_ref,                                  # (C, C) block-diagonal head matrix
                   o_ref,                                     # (1, C, TP)
                   *, n_max, ln_eps):
    f32, bf16 = jnp.float32, jnp.bfloat16
    c = o_ref.shape[1]
    rec = rec_ref[pl.program_id(0)]           # number of valid agents for this batch
    # (record_len >= 1 is assumed: the ego agent is always valid, so the softmax
    #  denominator is never zero.)

    hblk = hblk_ref[...]                      # (C, C) bf16, ones on each head's block
    wkq = wkq_ref[...]                        # (2C, C) bf16: rows [0:C]=Wk, [C:2C]=Wq*scale
    bkq = bkq_ref[...]                        # (2C, 1) f32
    wk, bk = wkq[:c], bkq[:c]

    # ---- ego agent: fused K / (pre-scaled) Q projection, channel-major (C, TP) ----
    k0 = k_ref[0, 0]                          # ego input; also the attention residual
    kq0 = jnp.dot(wkq, k0.astype(bf16), preferred_element_type=f32) + bkq
    kp0, qp = kq0[:c], kq0[c:]                # K-proj / scaled Q-proj of the ego agent

    # ---- per-agent scores, replicated across each head's channels (block-diag matmul) ----
    neg = jnp.float32(-1e30)
    s_list = [jnp.dot(hblk, (qp * kp0).astype(bf16), preferred_element_type=f32)]
    for n in range(1, n_max):
        kn = jnp.dot(wk, k_ref[0, n].astype(bf16), preferred_element_type=f32) + bk
        sn = jnp.dot(hblk, (qp * kn).astype(bf16), preferred_element_type=f32)
        s_list.append(jnp.where(n < rec, sn, neg))            # mask invalid agents

    # ---- softmax over agents (f32 stats; masked agents underflow to exactly 0) ----
    m = s_list[0]
    for s in s_list[1:]:
        m = jnp.maximum(m, s)
    p_list = [jnp.exp(s - m) for s in s_list]
    denom = p_list[0]
    for p in p_list[1:]:
        denom = denom + p
    inv = pl.reciprocal(denom, approx=True)

    # ---- V projection *after* the softmax (short live range), weighted agent sum ----
    wv, bv = wv_ref[...], bv_ref[...]
    ctx = None
    for n in range(n_max):
        vn = jnp.dot(wv, v_ref[0, n].astype(bf16), preferred_element_type=f32) + bv
        t = p_list[n] * vn
        ctx = t if ctx is None else ctx + t
    ctx = ctx * inv

    # ---- output projection, residual + norm1 ----
    ctx = jnp.dot(wo_ref[...], ctx.astype(bf16), preferred_element_type=f32) + bo_ref[...]
    x1 = _layer_norm_cm(k0.astype(f32) + ctx, g1_ref[...], be1_ref[...], ln_eps)

    # ---- feed-forward, residual + norm2 ----
    h = jnp.maximum(
        jnp.dot(w1_ref[...], x1.astype(bf16), preferred_element_type=f32) + b1_ref[...], 0.0)
    ff = jnp.dot(w2_ref[...], h.astype(bf16), preferred_element_type=f32) + b2_ref[...]
    x2 = _layer_norm_cm(x1 + ff, g2_ref[...], be2_ref[...], ln_eps)

    o_ref[0] = x2.astype(o_ref.dtype)


def _pick_pixel_tile(hw, n_max, c, batch, budget_bytes=_VMEM_TILE_BUDGET):
    """Pick the pixel-tile width TP (lane axis) and the padded pixel count."""
    lane = 128
    # rough per-pixel f32 footprint: double-buffered k/v tiles, double-buffered output
    # tile, and the in-kernel f32 temporaries (scores / exp / context / FFN).
    per_px = 4 * c * (7 * n_max + 12)
    cap = max(1, budget_bytes // per_px)
    cap_lane = max(lane, min((cap // lane) * lane, 4096))
    if hw <= cap:
        tp, hw_pad = hw, hw                       # one full-width tile (full-dim block)
    else:
        tp = cap_lane
        hw_pad = -(-hw // tp) * tp                # pad pixels up to a tile multiple
    # v7x megacore: make sure there are enough grid steps to shard + pipeline.
    while batch * (hw_pad // tp) < 8 and tp % (2 * lane) == 0:
        tp //= 2
    return tp, hw_pad


def transformer_fusion_forward(batch_neighbor_feature, batch_neighbor_feature_pe,
                               record_len, params, *, n_head, with_spe=True,
                               ln_eps=1e-5):
    """batch_neighbor_feature / _pe: (B, Nmax, C, H, W); record_len: (B,) int."""
    # TODO(synk): the with_scm branch (confidence/quality-map weighted attention) is a
    # non-standard nn.MultiheadAttention extension and is not implemented here.
    nf = batch_neighbor_feature
    pe = batch_neighbor_feature_pe
    B, n_max, C, H, W = nf.shape
    HW = H * W
    assert C % n_head == 0

    # channel-major (lanes = pixels) views: plain reshapes, no HBM transposes.
    v_flat = nf.reshape(B, n_max, C, HW)
    k_flat = (pe if with_spe else nf).reshape(B, n_max, C, HW)

    tp, hw_pad = _pick_pixel_tile(HW, n_max, C, B)
    if hw_pad != HW:
        pad = ((0, 0), (0, 0), (0, 0), (0, hw_pad - HW))
        v_flat = jnp.pad(v_flat, pad)
        k_flat = jnp.pad(k_flat, pad)

    f32 = jnp.float32
    wdt = jnp.bfloat16                        # MXU operand dtype (accumulation stays f32)
    scale = 1.0 / math.sqrt(C // n_head)

    win, bin_ = params["in_proj_weight"], params["in_proj_bias"]
    wq, wk, wv = win[:C], win[C:2 * C], win[2 * C:]
    bq, bk, bv = bin_[:C], bin_[C:2 * C], bin_[2 * C:]
    # fused K / scaled-Q projection (attention scale folded into Wq, bq on the host)
    wkq = jnp.concatenate([wk, wq * scale], axis=0).astype(wdt)              # (2C, C)
    bkq = jnp.concatenate([bk, bq * scale], axis=0).reshape(2 * C, 1).astype(f32)

    col = lambda a: a.reshape(C, 1).astype(f32)
    wv_m = wv.astype(wdt)
    wo_m = params["out_proj_weight"].astype(wdt)
    w1_m = params["linear1_weight"].astype(wdt)
    w2_m = params["linear2_weight"].astype(wdt)
    bv_c, bo_c = col(bv), col(params["out_proj_bias"])
    b1_c, b2_c = col(params["linear1_bias"]), col(params["linear2_bias"])
    g1_c, be1_c = col(params["norm1_weight"]), col(params["norm1_bias"])
    g2_c, be2_c = col(params["norm2_weight"]), col(params["norm2_bias"])

    head = jnp.arange(C) // (C // n_head)
    hblk = (head[:, None] == head[None, :]).astype(wdt)                      # (C, C)

    grid = (B, hw_pad // tp)
    rec = record_len.astype(jnp.int32)
    kernel = functools.partial(_fusion_kernel, n_max=n_max, ln_eps=ln_eps)

    kv_spec = pl.BlockSpec((1, n_max, C, tp), lambda b, p, rec: (b, 0, 0, p))
    cmat = lambda b, p, rec: (0, 0)

    out_flat = pl.pallas_call(
        kernel,
        out_shape=jax.ShapeDtypeStruct((B, C, hw_pad), nf.dtype),
        grid_spec=pltpu.PrefetchScalarGridSpec(
            num_scalar_prefetch=1,
            grid=grid,
            in_specs=[
                kv_spec,                                  # k (+pe); agent 0 is q/residual
                kv_spec,                                  # v (raw features)
                pl.BlockSpec((2 * C, C), cmat),           # wkq (Wk ; scale*Wq)
                pl.BlockSpec((2 * C, 1), cmat),           # bkq
                pl.BlockSpec((C, C), cmat),               # wv
                pl.BlockSpec((C, 1), cmat),               # bv
                pl.BlockSpec((C, C), cmat),               # wo
                pl.BlockSpec((C, 1), cmat),               # bo
                pl.BlockSpec((C, C), cmat),               # w1
                pl.BlockSpec((C, 1), cmat),               # b1
                pl.BlockSpec((C, C), cmat),               # w2
                pl.BlockSpec((C, 1), cmat),               # b2
                pl.BlockSpec((C, 1), cmat),               # ln1 gamma
                pl.BlockSpec((C, 1), cmat),               # ln1 beta
                pl.BlockSpec((C, 1), cmat),               # ln2 gamma
                pl.BlockSpec((C, 1), cmat),               # ln2 beta
                pl.BlockSpec((C, C), cmat),               # block-diagonal head matrix
            ],
            out_specs=pl.BlockSpec((1, C, tp), lambda b, p, rec: (b, 0, p)),
        ),
        compiler_params=pltpu.CompilerParams(
            dimension_semantics=("parallel", "parallel"),
            vmem_limit_bytes=_VMEM_LIMIT_BYTES),
    )(rec, k_flat, v_flat,
      wkq, bkq, wv_m, bv_c, wo_m, bo_c, w1_m, b1_c, w2_m, b2_c,
      g1_c, be1_c, g2_c, be2_c, hblk)

    return out_flat[:, :, :HW].reshape(B, C, H, W)


# ----------------------------- pure-JAX reference -----------------------------

def _ref_layer_norm(x, g, b, eps=1e-5):
    mu = x.mean(-1, keepdims=True)
    var = ((x - mu) ** 2).mean(-1, keepdims=True)
    return (x - mu) / jnp.sqrt(var + eps) * g + b


def ref_transformer_fusion(nf, pe, record_len, params, *, n_head, with_spe=True):
    B, n_max, C, H, W = nf.shape
    HW = H * W
    hd = C // n_head
    win, bin_ = params["in_proj_weight"], params["in_proj_bias"]
    Wq, Wk, Wv = win[:C], win[C:2 * C], win[2 * C:]
    bq, bk, bv = bin_[:C], bin_[C:2 * C], bin_[2 * C:]
    outs = []
    with jax.default_matmul_precision("highest"):
        for b in range(B):
            N = int(record_len[b])
            v = jnp.transpose(nf[b, :N].reshape(N, C, HW), (0, 2, 1))      # (N, HW, C)
            src = pe if with_spe else nf
            k = jnp.transpose(src[b, :N].reshape(N, C, HW), (0, 2, 1))
            q = k[0:1]                                                     # (1, HW, C)
            qp = q @ Wq.T + bq
            kp = k @ Wk.T + bk
            vp = v @ Wv.T + bv
            qh = qp.reshape(1, HW, n_head, hd)
            kh = kp.reshape(N, HW, n_head, hd)
            vh = vp.reshape(N, HW, n_head, hd)
            scores = jnp.einsum("qphd,kphd->phqk", qh, kh) / math.sqrt(hd)
            attn = jax.nn.softmax(scores, axis=-1)
            ctx = jnp.einsum("phqk,kphd->qphd", attn, vh).reshape(1, HW, C)
            ctx = ctx @ params["out_proj_weight"].T + params["out_proj_bias"]
            x1 = _ref_layer_norm(q + ctx, params["norm1_weight"], params["norm1_bias"])
            hid = jax.nn.relu(x1 @ params["linear1_weight"].T + params["linear1_bias"])
            ff = hid @ params["linear2_weight"].T + params["linear2_bias"]
            x2 = _ref_layer_norm(x1 + ff, params["norm2_weight"], params["norm2_bias"])
            outs.append(jnp.transpose(x2, (0, 2, 1)).reshape(1, C, H, W))
    return jnp.concatenate(outs, axis=0)


if __name__ == "__main__":
    # Small shapes consistent with the module (channels=128, 8 heads, 8x8 map,
    # batch=2, up to 3 collaborating agents with variable record_len).
    B, n_max, C, H, W = 2, 3, 128, 8, 8
    n_head = 8
    record_len = jnp.array([3, 2], dtype=jnp.int32)

    key = jax.random.PRNGKey(0)
    keys = jax.random.split(key, 14)

    nf = jax.random.normal(keys[0], (B, n_max, C, H, W), dtype=jnp.float32)
    pe = nf + 0.1 * jax.random.normal(keys[1], (B, n_max, C, H, W), dtype=jnp.float32)

    bound = 1.0 / math.sqrt(C)
    u = lambda k, s: jax.random.uniform(k, s, minval=-bound, maxval=bound,
                                        dtype=jnp.float32)
    params = {
        "in_proj_weight": u(keys[2], (3 * C, C)),
        "in_proj_bias":   u(keys[3], (3 * C,)),
        "out_proj_weight": u(keys[4], (C, C)),
        "out_proj_bias":   u(keys[5], (C,)),
        "linear1_weight":  u(keys[6], (C, C)),
        "linear1_bias":    u(keys[7], (C,)),
        "linear2_weight":  u(keys[8], (C, C)),
        "linear2_bias":    u(keys[9], (C,)),
        "norm1_weight": 1.0 + 0.1 * u(keys[10], (C,)),
        "norm1_bias":   0.1 * u(keys[11], (C,)),
        "norm2_weight": 1.0 + 0.1 * u(keys[12], (C,)),
        "norm2_bias":   0.1 * u(keys[13], (C,)),
    }

    out = transformer_fusion_forward(nf, pe, record_len, params, n_head=n_head)
    out = jax.block_until_ready(out)

    expected = ref_transformer_fusion(nf, pe, record_len, params, n_head=n_head)
    expected = jax.block_until_ready(expected)

    assert out.shape == (B, C, H, W)
    max_diff = float(jnp.max(jnp.abs(out - expected)))
    # MXU operands are bf16 (f32 accumulation), so the tolerance is bf16-level,
    # not f32-level; softmax / LayerNorm / residual math stays in f32.
    assert jnp.allclose(out, expected, atol=5e-2, rtol=5e-2), (
        f"mismatch vs reference, max abs diff = {max_diff}")

    print("KERNEL_OK")
</pallas_src>

<mosaic_0001>
module attributes {stable_mosaic.version = 11 : i64} {
  func.func @_fusion_kernel(%arg0: i32, %arg1: i32, %arg2: memref<2xi32, #tpu.memory_space<smem>>, %arg3: memref<1x3x128x64xf32, #tpu.memory_space<vmem>>, %arg4: memref<1x3x128x64xf32, #tpu.memory_space<vmem>>, %arg5: memref<256x128xbf16, #tpu.memory_space<vmem>>, %arg6: memref<256x1xf32, #tpu.memory_space<vmem>>, %arg7: memref<128x128xbf16, #tpu.memory_space<vmem>>, %arg8: memref<128x1xf32, #tpu.memory_space<vmem>>, %arg9: memref<128x128xbf16, #tpu.memory_space<vmem>>, %arg10: memref<128x1xf32, #tpu.memory_space<vmem>>, %arg11: memref<128x128xbf16, #tpu.memory_space<vmem>>, %arg12: memref<128x1xf32, #tpu.memory_space<vmem>>, %arg13: memref<128x128xbf16, #tpu.memory_space<vmem>>, %arg14: memref<128x1xf32, #tpu.memory_space<vmem>>, %arg15: memref<128x1xf32, #tpu.memory_space<vmem>>, %arg16: memref<128x1xf32, #tpu.memory_space<vmem>>, %arg17: memref<128x1xf32, #tpu.memory_space<vmem>>, %arg18: memref<128x1xf32, #tpu.memory_space<vmem>>, %arg19: memref<128x128xbf16, #tpu.memory_space<vmem>>, %arg20: memref<1x128x64xf32, #tpu.memory_space<vmem>>) attributes {dimension_semantics = [#tpu.dimension_semantics<parallel>, #tpu.dimension_semantics<parallel>], iteration_bounds = array<i64: 2, 1>, scalar_prefetch = 1 : i64, scratch_operands = 0 : i64, tpu.core_type = #tpu.core_type<tc>, window_params = [{transform_indices = @transform_0, window_bounds = array<i64: 1, 3, 128, 64>}, {transform_indices = @transform_1, window_bounds = array<i64: 1, 3, 128, 64>}, {pipeline_mode = #tpu.pipeline_mode<synchronous>, transform_indices = @transform_2, window_bounds = array<i64: 256, 128>}, {pipeline_mode = #tpu.pipeline_mode<synchronous>, transform_indices = @transform_3, window_bounds = array<i64: 256, 1>}, {pipeline_mode = #tpu.pipeline_mode<synchronous>, transform_indices = @transform_4, window_bounds = array<i64: 128, 128>}, {pipeline_mode = #tpu.pipeline_mode<synchronous>, transform_indices = @transform_5, window_bounds = array<i64: 128, 1>}, {pipeline_mode = #tpu.pipeline_mode<synchronous>, transform_indices = @transform_6, window_bounds = array<i64: 128, 128>}, {pipeline_mode = #tpu.pipeline_mode<synchronous>, transform_indices = @transform_7, window_bounds = array<i64: 128, 1>}, {pipeline_mode = #tpu.pipeline_mode<synchronous>, transform_indices = @transform_8, window_bounds = array<i64: 128, 128>}, {pipeline_mode = #tpu.pipeline_mode<synchronous>, transform_indices = @transform_9, window_bounds = array<i64: 128, 1>}, {pipeline_mode = #tpu.pipeline_mode<synchronous>, transform_indices = @transform_10, window_bounds = array<i64: 128, 128>}, {pipeline_mode = #tpu.pipeline_mode<synchronous>, transform_indices = @transform_11, window_bounds = array<i64: 128, 1>}, {pipeline_mode = #tpu.pipeline_mode<synchronous>, transform_indices = @transform_12, window_bounds = array<i64: 128, 1>}, {pipeline_mode = #tpu.pipeline_mode<synchronous>, transform_indices = @transform_13, window_bounds = array<i64: 128, 1>}, {pipeline_mode = #tpu.pipeline_mode<synchronous>, transform_indices = @transform_14, window_bounds = array<i64: 128, 1>}, {pipeline_mode = #tpu.pipeline_mode<synchronous>, transform_indices = @transform_15, window_bounds = array<i64: 128, 1>}, {pipeline_mode = #tpu.pipeline_mode<synchronous>, transform_indices = @transform_16, window_bounds = array<i64: 128, 128>}, {transform_indices = @transform_17, window_bounds = array<i64: 1, 128, 64>}]} {
    %0 = arith.index_cast %arg0 : i32 to index
    %1 = memref.load %arg2[%0] : memref<2xi32, #tpu.memory_space<smem>>
    %c0 = arith.constant 0 : index
    %c0_0 = arith.constant 0 : index
    %2 = vector.load %arg19[%c0, %c0_0] : memref<128x128xbf16, #tpu.memory_space<vmem>>, vector<128x128xbf16>
    %c0_1 = arith.constant 0 : index
    %c0_2 = arith.constant 0 : index
    %3 = vector.load %arg5[%c0_1, %c0_2] : memref<256x128xbf16, #tpu.memory_space<vmem>>, vector<256x128xbf16>
    %c0_3 = arith.constant 0 : index
    %c0_4 = arith.constant 0 : index
    %4 = vector.load %arg6[%c0_3, %c0_4] : memref<256x1xf32, #tpu.memory_space<vmem>>, vector<256x1xf32>
    %5 = vector.extract_strided_slice %3 {offsets = [0, 0], sizes = [128, 128], strides = [1, 1]} : vector<256x128xbf16> to vector<128x128xbf16>
    %6 = vector.extract_strided_slice %4 {offsets = [0, 0], sizes = [128, 1], strides = [1, 1]} : vector<256x1xf32> to vector<128x1xf32>
    %c0_5 = arith.constant 0 : index
    %c0_6 = arith.constant 0 : index
    %c0_7 = arith.constant 0 : index
    %c0_8 = arith.constant 0 : index
    %7 = vector.load %arg3[%c0_5, %c0_6, %c0_7, %c0_8] : memref<1x3x128x64xf32, #tpu.memory_space<vmem>>, vector<1x1x128x64xf32>
    %8 = vector.shape_cast %7 : vector<1x1x128x64xf32> to vector<128x64xf32>
    %9 = arith.truncf %8 : vector<128x64xf32> to vector<128x64xbf16>
    %cst = arith.constant dense<0.000000e+00> : vector<256x64xf32>
    %10 = tpu.matmul %3, %9, %cst {dimension_numbers = #tpu.dot_dimension_numbers<[1], [0], [0], [1], [0, 0, 1, 1], [], []>} : vector<256x128xbf16>, vector<128x64xbf16>, vector<256x64xf32> -> vector<256x64xf32>
    %11 = vector.broadcast %4 : vector<256x1xf32> to vector<256x64xf32>
    %12 = arith.addf %10, %11 : vector<256x64xf32>
    %13 = vector.extract_strided_slice %12 {offsets = [0, 0], sizes = [128, 64], strides = [1, 1]} : vector<256x64xf32> to vector<128x64xf32>
    %14 = vector.extract_strided_slice %12 {offsets = [128, 0], sizes = [128, 64], strides = [1, 1]} : vector<256x64xf32> to vector<128x64xf32>
    %15 = arith.mulf %14, %13 : vector<128x64xf32>
    %16 = arith.truncf %15 : vector<128x64xf32> to vector<128x64xbf16>
    %cst_9 = arith.constant dense<0.000000e+00> : vector<128x64xf32>
    %17 = tpu.matmul %2, %16, %cst_9 {dimension_numbers = #tpu.dot_dimension_numbers<[1], [0], [0], [1], [0, 0, 1, 1], [], []>} : vector<128x128xbf16>, vector<128x64xbf16>, vector<128x64xf32> -> vector<128x64xf32>
    %c0_10 = arith.constant 0 : index
    %c1 = arith.constant 1 : index
    %c0_11 = arith.constant 0 : index
    %c0_12 = arith.constant 0 : index
    %18 = vector.load %arg3[%c0_10, %c1, %c0_11, %c0_12] : memref<1x3x128x64xf32, #tpu.memory_space<vmem>>, vector<1x1x128x64xf32>
    %19 = vector.shape_cast %18 : vector<1x1x128x64xf32> to vector<128x64xf32>
    %20 = arith.truncf %19 : vector<128x64xf32> to vector<128x64xbf16>
    %cst_13 = arith.constant dense<0.000000e+00> : vector<128x64xf32>
    %21 = tpu.matmul %5, %20, %cst_13 {dimension_numbers = #tpu.dot_dimension_numbers<[1], [0], [0], [1], [0, 0, 1, 1], [], []>} : vector<128x128xbf16>, vector<128x64xbf16>, vector<128x64xf32> -> vector<128x64xf32>
    %22 = vector.broadcast %6 : vector<128x1xf32> to vector<128x64xf32>
    %23 = arith.addf %21, %22 : vector<128x64xf32>
    %24 = arith.mulf %14, %23 : vector<128x64xf32>
    %25 = arith.truncf %24 : vector<128x64xf32> to vector<128x64xbf16>
    %cst_14 = arith.constant dense<0.000000e+00> : vector<128x64xf32>
    %26 = tpu.matmul %2, %25, %cst_14 {dimension_numbers = #tpu.dot_dimension_numbers<[1], [0], [0], [1], [0, 0, 1, 1], [], []>} : vector<128x128xbf16>, vector<128x64xbf16>, vector<128x64xf32> -> vector<128x64xf32>
    %c1_i32 = arith.constant 1 : i32
    %27 = arith.cmpi sgt, %1, %c1_i32 : i32
    %cst_15 = arith.constant -1.000000e+30 : f32
    %28 = vector.broadcast %cst_15 : f32 to vector<128x64xf32>
    %29 = arith.select %27, %26, %28 : vector<128x64xf32>
    %c0_16 = arith.constant 0 : index
    %c2 = arith.constant 2 : index
    %c0_17 = arith.constant 0 : index
    %c0_18 = arith.constant 0 : index
    %30 = vector.load %arg3[%c0_16, %c2, %c0_17, %c0_18] : memref<1x3x128x64xf32, #tpu.memory_space<vmem>>, vector<1x1x128x64xf32>
    %31 = vector.shape_cast %30 : vector<1x1x128x64xf32> to vector<128x64xf32>
    %32 = arith.truncf %31 : vector<128x64xf32> to vector<128x64xbf16>
    %cst_19 = arith.constant dense<0.000000e+00> : vector<128x64xf32>
    %33 = tpu.matmul %5, %32, %cst_19 {dimension_numbers = #tpu.dot_dimension_numbers<[1], [0], [0], [1], [0, 0, 1, 1], [], []>} : vector<128x128xbf16>, vector<128x64xbf16>, vector<128x64xf32> -> vector<128x64xf32>
    %34 = vector.broadcast %6 : vector<128x1xf32> to vector<128x64xf32>
    %35 = arith.addf %33, %34 : vector<128x64xf32>
    %36 = arith.mulf %14, %35 : vector<128x64xf32>
    %37 = arith.truncf %36 : vector<128x64xf32> to vector<128x64xbf16>
    %cst_20 = arith.constant dense<0.000000e+00> : vector<128x64xf32>
    %38 = tpu.matmul %2, %37, %cst_20 {dimension_numbers = #tpu.dot_dimension_numbers<[1], [0], [0], [1], [0, 0, 1, 1], [], []>} : vector<128x128xbf16>, vector<128x64xbf16>, vector<128x64xf32> -> vector<128x64xf32>
    %c2_i32 = arith.constant 2 : i32
    %39 = arith.cmpi sgt, %1, %c2_i32 : i32
    %cst_21 = arith.constant -1.000000e+30 : f32
    %40 = vector.broadcast %cst_21 : f32 to vector<128x64xf32>
    %41 = arith.select %39, %38, %40 : vector<128x64xf32>
    %42 = arith.maximumf %17, %29 : vector<128x64xf32>
    %43 = arith.maximumf %42, %41 : vector<128x64xf32>
    %44 = arith.subf %17, %43 : vector<128x64xf32>
    %45 = math.exp %44 : vector<128x64xf32>
    %46 = arith.subf %29, %43 : vector<128x64xf32>
    %47 = math.exp %46 : vector<128x64xf32>
    %48 = arith.subf %41, %43 : vector<128x64xf32>
    %49 = math.exp %48 : vector<128x64xf32>
    %50 = arith.addf %45, %47 : vector<128x64xf32>
    %51 = arith.addf %50, %49 : vector<128x64xf32>
    %52 = tpu.reciprocal %51 {approx = true} : vector<128x64xf32> -> vector<128x64xf32>
    %c0_22 = arith.constant 0 : index
    %c0_23 = arith.constant 0 : index
    %53 = vector.load %arg7[%c0_22, %c0_23] : memref<128x128xbf16, #tpu.memory_space<vmem>>, vector<128x128xbf16>
    %c0_24 = arith.constant 0 : index
    %c0_25 = arith.constant 0 : index
    %54 = vector.load %arg8[%c0_24, %c0_25] : memref<128x1xf32, #tpu.memory_space<vmem>>, vector<128x1xf32>
    %c0_26 = arith.constant 0 : index
    %c0_27 = arith.constant 0 : index
    %c0_28 = arith.constant 0 : index
    %c0_29 = arith.constant 0 : index
    %55 = vector.load %arg4[%c0_26, %c0_27, %c0_28, %c0_29] : memref<1x3x128x64xf32, #tpu.memory_space<vmem>>, vector<1x1x128x64xf32>
    %56 = vector.shape_cast %55 : vector<1x1x128x64xf32> to vector<128x64xf32>
    %57 = arith.truncf %56 : vector<128x64xf32> to vector<128x64xbf16>
    %cst_30 = arith.constant dense<0.000000e+00> : vector<128x64xf32>
    %58 = tpu.matmul %53, %57, %cst_30 {dimension_numbers = #tpu.dot_dimension_numbers<[1], [0], [0], [1], [0, 0, 1, 1], [], []>} : vector<128x128xbf16>, vector<128x64xbf16>, vector<128x64xf32> -> vector<128x64xf32>
    %59 = vector.broadcast %54 : vector<128x1xf32> to vector<128x64xf32>
    %60 = arith.addf %58, %59 : vector<128x64xf32>
    %61 = arith.mulf %45, %60 : vector<128x64xf32>
    %c0_31 = arith.constant 0 : index
    %c1_32 = arith.constant 1 : index
    %c0_33 = arith.constant 0 : index
    %c0_34 = arith.constant 0 : index
    %62 = vector.load %arg4[%c0_31, %c1_32, %c0_33, %c0_34] : memref<1x3x128x64xf32, #tpu.memory_space<vmem>>, vector<1x1x128x64xf32>
    %63 = vector.shape_cast %62 : vector<1x1x128x64xf32> to vector<128x64xf32>
    %64 = arith.truncf %63 : vector<128x64xf32> to vector<128x64xbf16>
    %cst_35 = arith.constant dense<0.000000e+00> : vector<128x64xf32>
    %65 = tpu.matmul %53, %64, %cst_35 {dimension_numbers = #tpu.dot_dimension_numbers<[1], [0], [0], [1], [0, 0, 1, 1], [], []>} : vector<128x128xbf16>, vector<128x64xbf16>, vector<128x64xf32> -> vector<128x64xf32>
    %66 = vector.broadcast %54 : vector<128x1xf32> to vector<128x64xf32>
    %67 = arith.addf %65, %66 : vector<128x64xf32>
    %68 = arith.mulf %47, %67 : vector<128x64xf32>
    %69 = arith.addf %61, %68 : vector<128x64xf32>
    %c0_36 = arith.constant 0 : index
    %c2_37 = arith.constant 2 : index
    %c0_38 = arith.constant 0 : index
    %c0_39 = arith.constant 0 : index
    %70 = vector.load %arg4[%c0_36, %c2_37, %c0_38, %c0_39] : memref<1x3x128x64xf32, #tpu.memory_space<vmem>>, vector<1x1x128x64xf32>
    %71 = vector.shape_cast %70 : vector<1x1x128x64xf32> to vector<128x64xf32>
    %72 = arith.truncf %71 : vector<128x64xf32> to vector<128x64xbf16>
    %cst_40 = arith.constant dense<0.000000e+00> : vector<128x64xf32>
    %73 = tpu.matmul %53, %72, %cst_40 {dimension_numbers = #tpu.dot_dimension_numbers<[1], [0], [0], [1], [0, 0, 1, 1], [], []>} : vector<128x128xbf16>, vector<128x64xbf16>, vector<128x64xf32> -> vector<128x64xf32>
    %74 = vector.broadcast %54 : vector<128x1xf32> to vector<128x64xf32>
    %75 = arith.addf %73, %74 : vector<128x64xf32>
    %76 = arith.mulf %49, %75 : vector<128x64xf32>
    %77 = arith.addf %69, %76 : vector<128x64xf32>
    %78 = arith.mulf %77, %52 : vector<128x64xf32>
    %c0_41 = arith.constant 0 : index
    %c0_42 = arith.constant 0 : index
    %79 = vector.load %arg9[%c0_41, %c0_42] : memref<128x128xbf16, #tpu.memory_space<vmem>>, vector<128x128xbf16>
    %80 = arith.truncf %78 : vector<128x64xf32> to vector<128x64xbf16>
    %cst_43 = arith.constant dense<0.000000e+00> : vector<128x64xf32>
    %81 = tpu.matmul %79, %80, %cst_43 {dimension_numbers = #tpu.dot_dimension_numbers<[1], [0], [0], [1], [0, 0, 1, 1], [], []>} : vector<128x128xbf16>, vector<128x64xbf16>, vector<128x64xf32> -> vector<128x64xf32>
    %c0_44 = arith.constant 0 : index
    %c0_45 = arith.constant 0 : index
    %82 = vector.load %arg10[%c0_44, %c0_45] : memref<128x1xf32, #tpu.memory_space<vmem>>, vector<128x1xf32>
    %83 = vector.broadcast %82 : vector<128x1xf32> to vector<128x64xf32>
    %84 = arith.addf %81, %83 : vector<128x64xf32>
    %85 = arith.addf %8, %84 : vector<128x64xf32>
    %c0_46 = arith.constant 0 : index
    %c0_47 = arith.constant 0 : index
    %86 = vector.load %arg15[%c0_46, %c0_47] : memref<128x1xf32, #tpu.memory_space<vmem>>, vector<128x1xf32>
    %c0_48 = arith.constant 0 : index
    %c0_49 = arith.constant 0 : index
    %87 = vector.load %arg16[%c0_48, %c0_49] : memref<128x1xf32, #tpu.memory_space<vmem>>, vector<128x1xf32>
    %cst_50 = arith.constant dense<0.000000e+00> : vector<64xf32>
    %88 = vector.multi_reduction <add>, %85, %cst_50 [0] : vector<128x64xf32> to vector<64xf32>
    %89 = vector.shape_cast %88 : vector<64xf32> to vector<1x64xf32>
    %cst_51 = arith.constant 1.280000e+02 : f32
    %90 = vector.broadcast %cst_51 : f32 to vector<1x64xf32>
    %91 = arith.divf %89, %90 : vector<1x64xf32>
    %92 = vector.broadcast %91 : vector<1x64xf32> to vector<128x64xf32>
    %93 = arith.subf %85, %92 : vector<128x64xf32>
    %94 = arith.mulf %93, %93 : vector<128x64xf32>
    %cst_52 = arith.constant dense<0.000000e+00> : vector<64xf32>
    %95 = vector.multi_reduction <add>, %94, %cst_52 [0] : vector<128x64xf32> to vector<64xf32>
    %96 = vector.shape_cast %95 : vector<64xf32> to vector<1x64xf32>
    %cst_53 = arith.constant 1.280000e+02 : f32
    %97 = vector.broadcast %cst_53 : f32 to vector<1x64xf32>
    %98 = arith.divf %96, %97 : vector<1x64xf32>
    %cst_54 = arith.constant 9.99999974E-6 : f32
    %99 = vector.broadcast %cst_54 : f32 to vector<1x64xf32>
    %100 = arith.addf %98, %99 : vector<1x64xf32>
    %101 = math.rsqrt %100 : vector<1x64xf32>
    %102 = vector.broadcast %101 : vector<1x64xf32> to vector<128x64xf32>
    %103 = arith.mulf %93, %102 : vector<128x64xf32>
    %104 = vector.broadcast %86 : vector<128x1xf32> to vector<128x64xf32>
    %105 = arith.mulf %103, %104 : vector<128x64xf32>
    %106 = vector.broadcast %87 : vector<128x1xf32> to vector<128x64xf32>
    %107 = arith.addf %105, %106 : vector<128x64xf32>
    %c0_55 = arith.constant 0 : index
    %c0_56 = arith.constant 0 : index
    %108 = vector.load %arg11[%c0_55, %c0_56] : memref<128x128xbf16, #tpu.memory_space<vmem>>, vector<128x128xbf16>
    %109 = arith.truncf %107 : vector<128x64xf32> to vector<128x64xbf16>
    %cst_57 = arith.constant dense<0.000000e+00> : vector<128x64xf32>
    %110 = tpu.matmul %108, %109, %cst_57 {dimension_numbers = #tpu.dot_dimension_numbers<[1], [0], [0], [1], [0, 0, 1, 1], [], []>} : vector<128x128xbf16>, vector<128x64xbf16>, vector<128x64xf32> -> vector<128x64xf32>
    %c0_58 = arith.constant 0 : index
    %c0_59 = arith.constant 0 : index
    %111 = vector.load %arg12[%c0_58, %c0_59] : memref<128x1xf32, #tpu.memory_space<vmem>>, vector<128x1xf32>
    %112 = vector.broadcast %111 : vector<128x1xf32> to vector<128x64xf32>
    %113 = arith.addf %110, %112 : vector<128x64xf32>
    %cst_60 = arith.constant 0.000000e+00 : f32
    %114 = vector.broadcast %cst_60 : f32 to vector<128x64xf32>
    %115 = arith.maximumf %113, %114 : vector<128x64xf32>
    %c0_61 = arith.constant 0 : index
    %c0_62 = arith.constant 0 : index
    %116 = vector.load %arg13[%c0_61, %c0_62] : memref<128x128xbf16, #tpu.memory_space<vmem>>, vector<128x128xbf16>
    %117 = arith.truncf %115 : vector<128x64xf32> to vector<128x64xbf16>
    %cst_63 = arith.constant dense<0.000000e+00> : vector<128x64xf32>
    %118 = tpu.matmul %116, %117, %cst_63 {dimension_numbers = #tpu.dot_dimension_numbers<[1], [0], [0], [1], [0, 0, 1, 1], [], []>} : vector<128x128xbf16>, vector<128x64xbf16>, vector<128x64xf32> -> vector<128x64xf32>
    %c0_64 = arith.constant 0 : index
    %c0_65 = arith.constant 0 : index
    %119 = vector.load %arg14[%c0_64, %c0_65] : memref<128x1xf32, #tpu.memory_space<vmem>>, vector<128x1xf32>
    %120 = vector.broadcast %119 : vector<128x1xf32> to vector<128x64xf32>
    %121 = arith.addf %118, %120 : vector<128x64xf32>
    %122 = arith.addf %107, %121 : vector<128x64xf32>
    %c0_66 = arith.constant 0 : index
    %c0_67 = arith.constant 0 : index
    %123 = vector.load %arg17[%c0_66, %c0_67] : memref<128x1xf32, #tpu.memory_space<vmem>>, vector<128x1xf32>
    %c0_68 = arith.constant 0 : index
    %c0_69 = arith.constant 0 : index
    %124 = vector.load %arg18[%c0_68, %c0_69] : memref<128x1xf32, #tpu.memory_space<vmem>>, vector<128x1xf32>
    %cst_70 = arith.constant dense<0.000000e+00> : vector<64xf32>
    %125 = vector.multi_reduction <add>, %122, %cst_70 [0] : vector<128x64xf32> to vector<64xf32>
    %126 = vector.shape_cast %125 : vector<64xf32> to vector<1x64xf32>
    %cst_71 = arith.constant 1.280000e+02 : f32
    %127 = vector.broadcast %cst_71 : f32 to vector<1x64xf32>
    %128 = arith.divf %126, %127 : vector<1x64xf32>
    %129 = vector.broadcast %128 : vector<1x64xf32> to vector<128x64xf32>
    %130 = arith.subf %122, %129 : vector<128x64xf32>
    %131 = arith.mulf %130, %130 : vector<128x64xf32>
    %cst_72 = arith.constant dense<0.000000e+00> : vector<64xf32>
    %132 = vector.multi_reduction <add>, %131, %cst_72 [0] : vector<128x64xf32> to vector<64xf32>
    %133 = vector.shape_cast %132 : vector<64xf32> to vector<1x64xf32>
    %cst_73 = arith.constant 1.280000e+02 : f32
    %134 = vector.broadcast %cst_73 : f32 to vector<1x64xf32>
    %135 = arith.divf %133, %134 : vector<1x64xf32>
    %cst_74 = arith.constant 9.99999974E-6 : f32
    %136 = vector.broadcast %cst_74 : f32 to vector<1x64xf32>
    %137 = arith.addf %135, %136 : vector<1x64xf32>
    %138 = math.rsqrt %137 : vector<1x64xf32>
    %139 = vector.broadcast %138 : vector<1x64xf32> to vector<128x64xf32>
    %140 = arith.mulf %130, %139 : vector<128x64xf32>
    %141 = vector.broadcast %123 : vector<128x1xf32> to vector<128x64xf32>
    %142 = arith.mulf %140, %141 : vector<128x64xf32>
    %143 = vector.broadcast %124 : vector<128x1xf32> to vector<128x64xf32>
    %144 = arith.addf %142, %143 : vector<128x64xf32>
    %c0_75 = arith.constant 0 : index
    %c0_76 = arith.constant 0 : index
    %c0_77 = arith.constant 0 : index
    %145 = vector.load %arg20[%c0_75, %c0_76, %c0_77] : memref<1x128x64xf32, #tpu.memory_space<vmem>>, vector<1x128x64xf32>
    %146 = vector.shape_cast %145 : vector<1x128x64xf32> to vector<128x64xf32>
    %147 = vector.shape_cast %144 : vector<128x64xf32> to vector<1x128x64xf32>
    tpu.vector_store %arg20[%c0_75, %c0_76, %c0_77], %147 {strides = array<i32>} : memref<1x128x64xf32, #tpu.memory_space<vmem>>, vector<1x128x64xf32>,
    return
  }
  func.func @transform_0(%arg0: i32, %arg1: i32, %arg2: memref<2xi32, #tpu.memory_space<smem>>) -> (i32, i32, i32, i32) {
    %c0_i32 = arith.constant 0 : i32
    %c0_i32_0 = arith.constant 0 : i32
    %c0_i32_1 = arith.constant 0 : i32
    return %arg0, %c0_i32, %c0_i32_0, %arg1 : i32, i32, i32, i32
  }
  func.func @transform_1(%arg0: i32, %arg1: i32, %arg2: memref<2xi32, #tpu.memory_space<smem>>) -> (i32, i32, i32, i32) {
    %c0_i32 = arith.constant 0 : i32
    %c0_i32_0 = arith.constant 0 : i32
    %c0_i32_1 = arith.constant 0 : i32
    return %arg0, %c0_i32, %c0_i32_0, %arg1 : i32, i32, i32, i32
  }
  func.func @transform_2(%arg0: i32, %arg1: i32, %arg2: memref<2xi32, #tpu.memory_space<smem>>) -> (i32, i32) {
    %c0_i32 = arith.constant 0 : i32
    %c0_i32_0 = arith.constant 0 : i32
    %c0_i32_1 = arith.constant 0 : i32
    return %c0_i32, %c0_i32_0 : i32, i32
  }
  func.func @transform_3(%arg0: i32, %arg1: i32, %arg2: memref<2xi32, #tpu.memory_space<smem>>) -> (i32, i32) {
    %c0_i32 = arith.constant 0 : i32
    %c0_i32_0 = arith.constant 0 : i32
    %c0_i32_1 = arith.constant 0 : i32
    return %c0_i32, %c0_i32_0 : i32, i32
  }
  func.func @transform_4(%arg0: i32, %arg1: i32, %arg2: memref<2xi32, #tpu.memory_space<smem>>) -> (i32, i32) {
    %c0_i32 = arith.constant 0 : i32
    %c0_i32_0 = arith.constant 0 : i32
    %c0_i32_1 = arith.constant 0 : i32
    return %c0_i32, %c0_i32_0 : i32, i32
  }
  func.func @transform_5(%arg0: i32, %arg1: i32, %arg2: memref<2xi32, #tpu.memory_space<smem>>) -> (i32, i32) {
    %c0_i32 = arith.constant 0 : i32
    %c0_i32_0 = arith.constant 0 : i32
    %c0_i32_1 = arith.constant 0 : i32
    return %c0_i32, %c0_i32_0 : i32, i32
  }
  func.func @transform_6(%arg0: i32, %arg1: i32, %arg2: memref<2xi32, #tpu.memory_space<smem>>) -> (i32, i32) {
    %c0_i32 = arith.constant 0 : i32
    %c0_i32_0 = arith.constant 0 : i32
    %c0_i32_1 = arith.constant 0 : i32
    return %c0_i32, %c0_i32_0 : i32, i32
  }
  func.func @transform_7(%arg0: i32, %arg1: i32, %arg2: memref<2xi32, #tpu.memory_space<smem>>) -> (i32, i32) {
    %c0_i32 = arith.constant 0 : i32
    %c0_i32_0 = arith.constant 0 : i32
    %c0_i32_1 = arith.constant 0 : i32
    return %c0_i32, %c0_i32_0 : i32, i32
  }
  func.func @transform_8(%arg0: i32, %arg1: i32, %arg2: memref<2xi32, #tpu.memory_space<smem>>) -> (i32, i32) {
    %c0_i32 = arith.constant 0 : i32
    %c0_i32_0 = arith.constant 0 : i32
    %c0_i32_1 = arith.constant 0 : i32
    return %c0_i32, %c0_i32_0 : i32, i32
  }
  func.func @transform_9(%arg0: i32, %arg1: i32, %arg2: memref<2xi32, #tpu.memory_space<smem>>) -> (i32, i32) {
    %c0_i32 = arith.constant 0 : i32
    %c0_i32_0 = arith.constant 0 : i32
    %c0_i32_1 = arith.constant 0 : i32
    return %c0_i32, %c0_i32_0 : i32, i32
  }
  func.func @transform_10(%arg0: i32, %arg1: i32, %arg2: memref<2xi32, #tpu.memory_space<smem>>) -> (i32, i32) {
    %c0_i32 = arith.constant 0 : i32
    %c0_i32_0 = arith.constant 0 : i32
    %c0_i32_1 = arith.constant 0 : i32
    return %c0_i32, %c0_i32_0 : i32, i32
  }
  func.func @transform_11(%arg0: i32, %arg1: i32, %arg2: memref<2xi32, #tpu.memory_space<smem>>) -> (i32, i32) {
    %c0_i32 = arith.constant 0 : i32
    %c0_i32_0 = arith.constant 0 : i32
    %c0_i32_1 = arith.constant 0 : i32
    return %c0_i32, %c0_i32_0 : i32, i32
  }
  func.func @transform_12(%arg0: i32, %arg1: i32, %arg2: memref<2xi32, #tpu.memory_space<smem>>) -> (i32, i32) {
    %c0_i32 = arith.constant 0 : i32
    %c0_i32_0 = arith.constant 0 : i32
    %c0_i32_1 = arith.constant 0 : i32
    return %c0_i32, %c0_i32_0 : i32, i32
  }
  func.func @transform_13(%arg0: i32, %arg1: i32, %arg2: memref<2xi32, #tpu.memory_space<smem>>) -> (i32, i32) {
    %c0_i32 = arith.constant 0 : i32
    %c0_i32_0 = arith.constant 0 : i32
    %c0_i32_1 = arith.constant 0 : i32
    return %c0_i32, %c0_i32_0 : i32, i32
  }
  func.func @transform_14(%arg0: i32, %arg1: i32, %arg2: memref<2xi32, #tpu.memory_space<smem>>) -> (i32, i32) {
    %c0_i32 = arith.constant 0 : i32
    %c0_i32_0 = arith.constant 0 : i32
    %c0_i32_1 = arith.constant 0 : i32
    return %c0_i32, %c0_i32_0 : i32, i32
  }
  func.func @transform_15(%arg0: i32, %arg1: i32, %arg2: memref<2xi32, #tpu.memory_space<smem>>) -> (i32, i32) {
    %c0_i32 = arith.constant 0 : i32
    %c0_i32_0 = arith.constant 0 : i32
    %c0_i32_1 = arith.constant 0 : i32
    return %c0_i32, %c0_i32_0 : i32, i32
  }
  func.func @transform_16(%arg0: i32, %arg1: i32, %arg2: memref<2xi32, #tpu.memory_space<smem>>) -> (i32, i32) {
    %c0_i32 = arith.constant 0 : i32
    %c0_i32_0 = arith.constant 0 : i32
    %c0_i32_1 = arith.constant 0 : i32
    return %c0_i32, %c0_i32_0 : i32, i32
  }
  func.func @transform_17(%arg0: i32, %arg1: i32, %arg2: memref<2xi32, #tpu.memory_space<smem>>) -> (i32, i32, i32) {
    %c0_i32 = arith.constant 0 : i32
    %c0_i32_0 = arith.constant 0 : i32
    return %arg0, %c0_i32, %arg1 : i32, i32, i32
  }
}

</mosaic_0001>

<llo_original>
// kernel: tpu_custom_call.1
$region0: #{tpu_custom_call.1}
  #allocation0 [shape = 'u32[]', space=smem, size = 0x4, offset = 0x4, fixed_abs, tag = 'smem constant byte address 0x4 - core index']
  #allocation1 [shape = 'u32[144,128]{1,0:T(1,128)}', space=vmem, size = 0x12000, scoped, tag = 'internal scratch']
  #allocation2 [shape = 's32[1]{0}', space=sflag, size = 0x4, scoped, tag = 'scoped memory for tpu_custom_call.1']
  #allocation3 [shape = 'u8[512]{0}', space=smem, size = 0x200, scoped, tag = 'prefetched SMEM operand 0']
  %s0 = inlined_call_operand.vmem [shape: s32[2], index: 0, kind: input, shape index: {}]
  %s1 = inlined_call_operand.vmem [shape: f32[2,3,128,64], index: 1, kind: input, shape index: {}]
  %s2 = inlined_call_operand.vmem [shape: f32[2,3,128,64], index: 2, kind: input, shape index: {}]
  %s3 = inlined_call_operand.vmem [shape: bf16[256,128], index: 3, kind: input, shape index: {}]
  %s4 = inlined_call_operand.vmem [shape: f32[256,1], index: 4, kind: input, shape index: {}]
  %s5 = inlined_call_operand.vmem [shape: bf16[128,128], index: 5, kind: input, shape index: {}]
  %s6 = inlined_call_operand.vmem [shape: f32[128,1], index: 6, kind: input, shape index: {}]
  %s7 = inlined_call_operand.vmem [shape: bf16[128,128], index: 7, kind: input, shape index: {}]
  %s8 = inlined_call_operand.vmem [shape: f32[128,1], index: 8, kind: input, shape index: {}]
  %s9 = inlined_call_operand.vmem [shape: bf16[128,128], index: 9, kind: input, shape index: {}]
  %s10 = inlined_call_operand.vmem [shape: f32[128,1], index: 10, kind: input, shape index: {}]
  %s11 = inlined_call_operand.vmem [shape: bf16[128,128], index: 11, kind: input, shape index: {}]
  %s12 = inlined_call_operand.vmem [shape: f32[128,1], index: 12, kind: input, shape index: {}]
  %s13 = inlined_call_operand.vmem [shape: f32[128,1], index: 13, kind: input, shape index: {}]
  %s14 = inlined_call_operand.vmem [shape: f32[128,1], index: 14, kind: input, shape index: {}]
  %s15 = inlined_call_operand.vmem [shape: f32[128,1], index: 15, kind: input, shape index: {}]
  %s16 = inlined_call_operand.vmem [shape: f32[128,1], index: 16, kind: input, shape index: {}]
  %s17 = inlined_call_operand.vmem [shape: bf16[128,128], index: 17, kind: input, shape index: {}]
  %s18 = inlined_call_operand.vmem [shape: f32[2,128,64], index: 18, kind: output, shape index: {}]
  %s19 = sld [smem:[#allocation0]]
  $region101: #{tpu_custom_call.1} parent=0
    _
  %s21 = ssub.s32 1, %s19
  %s22 = scalar_select 0, %s21, %s19
  %s23 = sshll.u32 %s0, 4
  %s24 = int_to_ptr.vmem [resolvable:$true] %s23
  %26 = dma.vmem_to_smem %s24, 16, [#allocation3], [#allocation2]
  %27 = dma.done [#allocation2], 16
  %28 = sfence
  loop: start=0, step=1, limit=4
  $region2: #{tpu_custom_call.1} parent=0 // loop_pre_header
    _
  $region3: #{tpu_custom_call.1} parent=0 // loop_header
    %s30 = sphi 0, %s34
    %p31 = scmp.ge.s32.totalorder %s30, 4
    %s37 = sphi 0, %s49
    %s38 = sphi 0, %s45
    %s39 = sphi 0, %s37
    %s40 = sphi 0, %s38
    %s41 = sphi 0, %s39
    %s42 = sphi 0, %s40
    %s54 = sphi 0, %s56
    %s57 = sphi 0, %s54
    %s58 = sphi 0, %s57
    %s74 = sphi 0, %s58
    %s82 = sphi 0, %s84
    %s85 = sphi 0, %s82
    %s86 = sphi 0, %s85
    %s102 = sphi 0, %s86
    %s106 = sphi 0, %s106
    %s108 = sphi 0, %s106
    %s109 = sphi 0, %s108
    %s123 = sphi 0, %s109
    %s127 = sphi 0, %s127
    %s129 = sphi 0, %s127
    %s130 = sphi 0, %s129
    %s144 = sphi 0, %s130
    %s148 = sphi 0, %s148
    %s150 = sphi 0, %s148
    %s151 = sphi 0, %s150
    %s165 = sphi 0, %s151
    %s169 = sphi 0, %s169
    %s171 = sphi 0, %s169
    %s172 = sphi 0, %s171
    %s186 = sphi 0, %s172
    %s190 = sphi 0, %s190
    %s192 = sphi 0, %s190
    %s193 = sphi 0, %s192
    %s207 = sphi 0, %s193
    %s211 = sphi 0, %s211
    %s213 = sphi 0, %s211
    %s214 = sphi 0, %s213
    %s228 = sphi 0, %s214
    %s232 = sphi 0, %s232
    %s234 = sphi 0, %s232
    %s235 = sphi 0, %s234
    %s249 = sphi 0, %s235
    %s253 = sphi 0, %s253
    %s255 = sphi 0, %s253
    %s256 = sphi 0, %s255
    %s270 = sphi 0, %s256
    %s274 = sphi 0, %s274
    %s276 = sphi 0, %s274
    %s277 = sphi 0, %s276
    %s291 = sphi 0, %s277
    %s295 = sphi 0, %s295
    %s297 = sphi 0, %s295
    %s298 = sphi 0, %s297
    %s312 = sphi 0, %s298
    %s316 = sphi 0, %s316
    %s318 = sphi 0, %s316
    %s319 = sphi 0, %s318
    %s333 = sphi 0, %s319
    %s337 = sphi 0, %s337
    %s339 = sphi 0, %s337
    %s340 = sphi 0, %s339
    %s354 = sphi 0, %s340
    %s358 = sphi 0, %s358
    %s360 = sphi 0, %s358
    %s361 = sphi 0, %s360
    %s375 = sphi 0, %s361
    %s379 = sphi 0, %s379
    %s381 = sphi 0, %s379
    %s382 = sphi 0, %s381
    %s396 = sphi 0, %s382
    %s400 = sphi 0, %s400
    %s402 = sphi 0, %s400
    %s403 = sphi 0, %s402
    %s417 = sphi 0, %s403
    %s425 = sphi 0, %s427
    %s428 = sphi 0, %s425
    %s429 = sphi 0, %s428
    %s445 = sphi 0, %s429
  $region4: #{tpu_custom_call.1} parent=0 // loop_header_branch
    %33 = sbr.rel (%p31) target = $region8
  $region5: #{tpu_custom_call.1} parent=0 // loop_body
    %s35 = ssub.s32 %s30, 1
    %s36 = ssub.s32 %s30, 2
    %s43 = sadd.s32 1, %s38
    %p44 = scmp.ge.s32.totalorder %s43, 1
    %s45 = scalar_select %p44, 0, %s43
    %s46 = sadd.s32 1, %s37
    %s47 = scalar_select %p44, %s46, %s37
    %p48 = scmp.ge.s32.totalorder %s47, 2
    %s49 = scalar_select %p48, 0, %s47
    %s50 = ssub.s32 %s37, %s49
    %s51 = ssub.s32 %s38, %s45
    %s52 = sor.u32 %s50, %s51
    %p53 = scmp.eq.s32.totalorder %s52, 0
    %s55 = sadd.s32 %s54, 1
    %s56 = scalar_select %p53, %s54, %s55
    %p59 = pneg %p53
    %p60 = scmp.eq.s32.totalorder %s30, 1
    %p61 = por %p59, %p60
    %p62 = scmp.ne.s32.totalorder %s54, %s57
    %p63 = scmp.eq.s32.totalorder %s30, 0
    %p64 = por %p62, %p63
    %p65 = scmp.ne.s32.totalorder %s54, %s57
    %p66 = scmp.eq.s32.totalorder %s35, 1
    %p67 = por %p65, %p66
    %p68 = scmp.ne.s32.totalorder %s57, %s58
    %p69 = scmp.eq.s32.totalorder %s35, 0
    %p70 = por %p68, %p69
    %p71 = scmp.ne.s32.totalorder %s57, %s58
    %p72 = scmp.eq.s32.totalorder %s36, 1
    %p73 = por %p71, %p72
    %p75 = scmp.ne.s32.totalorder %s58, %s74
    %p76 = scmp.eq.s32.totalorder %s36, 0
    %p77 = por %p75, %p76
    %s78 = ssub.s32 %s37, %s49
    %s79 = ssub.s32 %s38, %s45
    %s80 = sor.u32 %s78, %s79
    %p81 = scmp.eq.s32.totalorder %s80, 0
    %s83 = sadd.s32 %s82, 1
    %s84 = scalar_select %p81, %s82, %s83
    %p87 = pneg %p81
    %p88 = scmp.eq.s32.totalorder %s30, 1
    %p89 = por %p87, %p88
    %p90 = scmp.ne.s32.totalorder %s82, %s85
    %p91 = scmp.eq.s32.totalorder %s30, 0
    %p92 = por %p90, %p91
    %p93 = scmp.ne.s32.totalorder %s82, %s85
    %p94 = scmp.eq.s32.totalorder %s35, 1
    %p95 = por %p93, %p94
    %p96 = scmp.ne.s32.totalorder %s85, %s86
    %p97 = scmp.eq.s32.totalorder %s35, 0
    %p98 = por %p96, %p97
    %p99 = scmp.ne.s32.totalorder %s85, %s86
    %p100 = scmp.eq.s32.totalorder %s36, 1
    %p101 = por %p99, %p100
    %p103 = scmp.ne.s32.totalorder %s86, %s102
    %p104 = scmp.eq.s32.totalorder %s36, 0
    %p105 = por %p103, %p104
    %s107 = sadd.s32 %s106, 1
    %p110 = scmp.eq.s32.totalorder %s30, 1
    %p111 = scmp.ne.s32.totalorder %s106, %s108
    %p112 = scmp.eq.s32.totalorder %s30, 0
    %p113 = por %p111, %p112
    %p114 = scmp.ne.s32.totalorder %s106, %s108
    %p115 = scmp.eq.s32.totalorder %s35, 1
    %p116 = por %p114, %p115
    %p117 = scmp.ne.s32.totalorder %s108, %s109
    %p118 = scmp.eq.s32.totalorder %s35, 0
    %p119 = por %p117, %p118
    %p120 = scmp.ne.s32.totalorder %s108, %s109
    %p121 = scmp.eq.s32.totalorder %s36, 1
    %p122 = por %p120, %p121
    %p124 = scmp.ne.s32.totalorder %s109, %s123
    %p125 = scmp.eq.s32.totalorder %s36, 0
    %p126 = por %p124, %p125
    %s128 = sadd.s32 %s127, 1
    %p131 = scmp.eq.s32.totalorder %s30, 1
    %p132 = scmp.ne.s32.totalorder %s127, %s129
    %p133 = scmp.eq.s32.totalorder %s30, 0
    %p134 = por %p132, %p133
    %p135 = scmp.ne.s32.totalorder %s127, %s129
    %p136 = scmp.eq.s32.totalorder %s35, 1
    %p137 = por %p135, %p136
    %p138 = scmp.ne.s32.totalorder %s129, %s130
    %p139 = scmp.eq.s32.totalorder %s35, 0
    %p140 = por %p138, %p139
    %p141 = scmp.ne.s32.totalorder %s129, %s130
    %p142 = scmp.eq.s32.totalorder %s36, 1
    %p143 = por %p141, %p142
    %p145 = scmp.ne.s32.totalorder %s130, %s144
    %p146 = scmp.eq.s32.totalorder %s36, 0
    %p147 = por %p145, %p146
    %s149 = sadd.s32 %s148, 1
    %p152 = scmp.eq.s32.totalorder %s30, 1
    %p153 = scmp.ne.s32.totalorder %s148, %s150
    %p154 = scmp.eq.s32.totalorder %s30, 0
    %p155 = por %p153, %p154
    %p156 = scmp.ne.s32.totalorder %s148, %s150
    %p157 = scmp.eq.s32.totalorder %s35, 1
    %p158 = por %p156, %p157
    %p159 = scmp.ne.s32.totalorder %s150, %s151
    %p160 = scmp.eq.s32.totalorder %s35, 0
    %p161 = por %p159, %p160
    %p162 = scmp.ne.s32.totalorder %s150, %s151
    %p163 = scmp.eq.s32.totalorder %s36, 1
    %p164 = por %p162, %p163
    %p166 = scmp.ne.s32.totalorder %s151, %s165
    %p167 = scmp.eq.s32.totalorder %s36, 0
    %p168 = por %p166, %p167
    %s170 = sadd.s32 %s169, 1
    %p173 = scmp.eq.s32.totalorder %s30, 1
    %p174 = scmp.ne.s32.totalorder %s169, %s171
    %p175 = scmp.eq.s32.totalorder %s30, 0
    %p176 = por %p174, %p175
    %p177 = scmp.ne.s32.totalorder %s169, %s171
    %p178 = scmp.eq.s32.totalorder %s35, 1
    %p179 = por %p177, %p178
    %p180 = scmp.ne.s32.totalorder %s171, %s172
    %p181 = scmp.eq.s32.totalorder %s35, 0
    %p182 = por %p180, %p181
    %p183 = scmp.ne.s32.totalorder %s171, %s172
    %p184 = scmp.eq.s32.totalorder %s36, 1
    %p185 = por %p183, %p184
    %p187 = scmp.ne.s32.totalorder %s172, %s186
    %p188 = scmp.eq.s32.totalorder %s36, 0
    %p189 = por %p187, %p188
    %s191 = sadd.s32 %s190, 1
    %p194 = scmp.eq.s32.totalorder %s30, 1
    %p195 = scmp.ne.s32.totalorder %s190, %s192
    %p196 = scmp.eq.s32.totalorder %s30, 0
    %p197 = por %p195, %p196
    %p198 = scmp.ne.s32.totalorder %s190, %s192
    %p199 = scmp.eq.s32.totalorder %s35, 1
    %p200 = por %p198, %p199
    %p201 = scmp.ne.s32.totalorder %s192, %s193
    %p202 = scmp.eq.s32.totalorder %s35, 0
    %p203 = por %p201, %p202
    %p204 = scmp.ne.s32.totalorder %s192, %s193
    %p205 = scmp.eq.s32.totalorder %s36, 1
    %p206 = por %p204, %p205
    %p208 = scmp.ne.s32.totalorder %s193, %s207
    %p209 = scmp.eq.s32.totalorder %s36, 0
    %p210 = por %p208, %p209
    %s212 = sadd.s32 %s211, 1
    %p215 = scmp.eq.s32.totalorder %s30, 1
    %p216 = scmp.ne.s32.totalorder %s211, %s213
    %p217 = scmp.eq.s32.totalorder %s30, 0
    %p218 = por %p216, %p217
    %p219 = scmp.ne.s32.totalorder %s211, %s213
    %p220 = scmp.eq.s32.totalorder %s35, 1
    %p221 = por %p219, %p220
    %p222 = scmp.ne.s32.totalorder %s213, %s214
    %p223 = scmp.eq.s32.totalorder %s35, 0
    %p224 = por %p222, %p223
    %p225 = scmp.ne.s32.totalorder %s213, %s214
    %p226 = scmp.eq.s32.totalorder %s36, 1
    %p227 = por %p225, %p226
    %p229 = scmp.ne.s32.totalorder %s214, %s228
    %p230 = scmp.eq.s32.totalorder %s36, 0
    %p231 = por %p229, %p230
    %s233 = sadd.s32 %s232, 1
    %p236 = scmp.eq.s32.totalorder %s30, 1
    %p237 = scmp.ne.s32.totalorder %s232, %s234
    %p238 = scmp.eq.s32.totalorder %s30, 0
    %p239 = por %p237, %p238
    %p240 = scmp.ne.s32.totalorder %s232, %s234
    %p241 = scmp.eq.s32.totalorder %s35, 1
    %p242 = por %p240, %p241
    %p243 = scmp.ne.s32.totalorder %s234, %s235
    %p244 = scmp.eq.s32.totalorder %s35, 0
    %p245 = por %p243, %p244
    %p246 = scmp.ne.s32.totalorder %s234, %s235
    %p247 = scmp.eq.s32.totalorder %s36, 1
    %p248 = por %p246, %p247
    %p250 = scmp.ne.s32.totalorder %s235, %s249
    %p251 = scmp.eq.s32.totalorder %s36, 0
    %p252 = por %p250, %p251
    %s254 = sadd.s32 %s253, 1
    %p257 = scmp.eq.s32.totalorder %s30, 1
    %p258 = scmp.ne.s32.totalorder %s253, %s255
    %p259 = scmp.eq.s32.totalorder %s30, 0
    %p260 = por %p258, %p259
    %p261 = scmp.ne.s32.totalorder %s253, %s255
    %p262 = scmp.eq.s32.totalorder %s35, 1
    %p263 = por %p261, %p262
    %p264 = scmp.ne.s32.totalorder %s255, %s256
    %p265 = scmp.eq.s32.totalorder %s35, 0
    %p266 = por %p264, %p265
    %p267 = scmp.ne.s32.totalorder %s255, %s256
    %p268 = scmp.eq.s32.totalorder %s36, 1
    %p269 = por %p267, %p268
    %p271 = scmp.ne.s32.totalorder %s256, %s270
    %p272 = scmp.eq.s32.totalorder %s36, 0
    %p273 = por %p271, %p272
    %s275 = sadd.s32 %s274, 1
    %p278 = scmp.eq.s32.totalorder %s30, 1
    %p279 = scmp.ne.s32.totalorder %s274, %s276
    %p280 = scmp.eq.s32.totalorder %s30, 0
    %p281 = por %p279, %p280
    %p282 = scmp.ne.s32.totalorder %s274, %s276
    %p283 = scmp.eq.s32.totalorder %s35, 1
    %p284 = por %p282, %p283
    %p285 = scmp.ne.s32.totalorder %s276, %s277
    %p286 = scmp.eq.s32.totalorder %s35, 0
    %p287 = por %p285, %p286
    %p288 = scmp.ne.s32.totalorder %s276, %s277
    %p289 = scmp.eq.s32.totalorder %s36, 1
    %p290 = por %p288, %p289
    %p292 = scmp.ne.s32.totalorder %s277, %s291
    %p293 = scmp.eq.s32.totalorder %s36, 0
    %p294 = por %p292, %p293
    %s296 = sadd.s32 %s295, 1
    %p299 = scmp.eq.s32.totalorder %s30, 1
    %p300 = scmp.ne.s32.totalorder %s295, %s297
    %p301 = scmp.eq.s32.totalorder %s30, 0
    %p302 = por %p300, %p301
    %p303 = scmp.ne.s32.totalorder %s295, %s297
    %p304 = scmp.eq.s32.totalorder %s35, 1
    %p305 = por %p303, %p304
    %p306 = scmp.ne.s32.totalorder %s297, %s298
    %p307 = scmp.eq.s32.totalorder %s35, 0
    %p308 = por %p306, %p307
    %p309 = scmp.ne.s32.totalorder %s297, %s298
    %p310 = scmp.eq.s32.totalorder %s36, 1
    %p311 = por %p309, %p310
    %p313 = scmp.ne.s32.totalorder %s298, %s312
    %p314 = scmp.eq.s32.totalorder %s36, 0
    %p315 = por %p313, %p314
    %s317 = sadd.s32 %s316, 1
    %p320 = scmp.eq.s32.totalorder %s30, 1
    %p321 = scmp.ne.s32.totalorder %s316, %s318
    %p322 = scmp.eq.s32.totalorder %s30, 0
    %p323 = por %p321, %p322
    %p324 = scmp.ne.s32.totalorder %s316, %s318
    %p325 = scmp.eq.s32.totalorder %s35, 1
    %p326 = por %p324, %p325
    %p327 = scmp.ne.s32.totalorder %s318, %s319
    %p328 = scmp.eq.s32.totalorder %s35, 0
    %p329 = por %p327, %p328
    %p330 = scmp.ne.s32.totalorder %s318, %s319
    %p331 = scmp.eq.s32.totalorder %s36, 1
    %p332 = por %p330, %p331
    %p334 = scmp.ne.s32.totalorder %s319, %s333
    %p335 = scmp.eq.s32.totalorder %s36, 0
    %p336 = por %p334, %p335
    %s338 = sadd.s32 %s337, 1
    %p341 = scmp.eq.s32.totalorder %s30, 1
    %p342 = scmp.ne.s32.totalorder %s337, %s339
    %p343 = scmp.eq.s32.totalorder %s30, 0
    %p344 = por %p342, %p343
    %p345 = scmp.ne.s32.totalorder %s337, %s339
    %p346 = scmp.eq.s32.totalorder %s35, 1
    %p347 = por %p345, %p346
    %p348 = scmp.ne.s32.totalorder %s339, %s340
    %p349 = scmp.eq.s32.totalorder %s35, 0
    %p350 = por %p348, %p349
    %p351 = scmp.ne.s32.totalorder %s339, %s340
    %p352 = scmp.eq.s32.totalorder %s36, 1
    %p353 = por %p351, %p352
    %p355 = scmp.ne.s32.totalorder %s340, %s354
    %p356 = scmp.eq.s32.totalorder %s36, 0
    %p357 = por %p355, %p356
    %s359 = sadd.s32 %s358, 1
    %p362 = scmp.eq.s32.totalorder %s30, 1
    %p363 = scmp.ne.s32.totalorder %s358, %s360
    %p364 = scmp.eq.s32.totalorder %s30, 0
    %p365 = por %p363, %p364
    %p366 = scmp.ne.s32.totalorder %s358, %s360
    %p367 = scmp.eq.s32.totalorder %s35, 1
    %p368 = por %p366, %p367
    %p369 = scmp.ne.s32.totalorder %s360, %s361
    %p370 = scmp.eq.s32.totalorder %s35, 0
    %p371 = por %p369, %p370
    %p372 = scmp.ne.s32.totalorder %s360, %s361
    %p373 = scmp.eq.s32.totalorder %s36, 1
    %p374 = por %p372, %p373
    %p376 = scmp.ne.s32.totalorder %s361, %s375
    %p377 = scmp.eq.s32.totalorder %s36, 0
    %p378 = por %p376, %p377
    %s380 = sadd.s32 %s379, 1
    %p383 = scmp.eq.s32.totalorder %s30, 1
    %p384 = scmp.ne.s32.totalorder %s379, %s381
    %p385 = scmp.eq.s32.totalorder %s30, 0
    %p386 = por %p384, %p385
    %p387 = scmp.ne.s32.totalorder %s379, %s381
    %p388 = scmp.eq.s32.totalorder %s35, 1
    %p389 = por %p387, %p388
    %p390 = scmp.ne.s32.totalorder %s381, %s382
    %p391 = scmp.eq.s32.totalorder %s35, 0
    %p392 = por %p390, %p391
    %p393 = scmp.ne.s32.totalorder %s381, %s382
    %p394 = scmp.eq.s32.totalorder %s36, 1
    %p395 = por %p393, %p394
    %p397 = scmp.ne.s32.totalorder %s382, %s396
    %p398 = scmp.eq.s32.totalorder %s36, 0
    %p399 = por %p397, %p398
    %s401 = sadd.s32 %s400, 1
    %p404 = scmp.eq.s32.totalorder %s30, 1
    %p405 = scmp.ne.s32.totalorder %s400, %s402
    %p406 = scmp.eq.s32.totalorder %s30, 0
    %p407 = por %p405, %p406
    %p408 = scmp.ne.s32.totalorder %s400, %s402
    %p409 = scmp.eq.s32.totalorder %s35, 1
    %p410 = por %p408, %p409
    %p411 = scmp.ne.s32.totalorder %s402, %s403
    %p412 = scmp.eq.s32.totalorder %s35, 0
    %p413 = por %p411, %p412
    %p414 = scmp.ne.s32.totalorder %s402, %s403
    %p415 = scmp.eq.s32.totalorder %s36, 1
    %p416 = por %p414, %p415
    %p418 = scmp.ne.s32.totalorder %s403, %s417
    %p419 = scmp.eq.s32.totalorder %s36, 0
    %p420 = por %p418, %p419
    %s421 = ssub.s32 %s37, %s49
    %s422 = ssub.s32 %s38, %s45
    %s423 = sor.u32 %s421, %s422
    %p424 = scmp.eq.s32.totalorder %s423, 0
    %s426 = sadd.s32 %s425, 1
    %s427 = scalar_select %p424, %s425, %s426
    %p430 = pneg %p424
    %p431 = scmp.eq.s32.totalorder %s30, 1
    %p432 = por %p430, %p431
    %p433 = scmp.ne.s32.totalorder %s425, %s428
    %p434 = scmp.eq.s32.totalorder %s30, 0
    %p435 = por %p433, %p434
    %p436 = scmp.ne.s32.totalorder %s425, %s428
    %p437 = scmp.eq.s32.totalorder %s35, 1
    %p438 = por %p436, %p437
    %p439 = scmp.ne.s32.totalorder %s428, %s429
    %p440 = scmp.eq.s32.totalorder %s35, 0
    %p441 = por %p439, %p440
    %p442 = scmp.ne.s32.totalorder %s428, %s429
    %p443 = scmp.eq.s32.totalorder %s36, 1
    %p444 = por %p442, %p443
    %p446 = scmp.ne.s32.totalorder %s429, %s445
    %p447 = scmp.eq.s32.totalorder %s36, 0
    %p448 = por %p446, %p447
    %p449 = scmp.le.s32.totalorder 1, %s30
    %p450 = scmp.lt.s32.totalorder %s30, 3
    %p451 = pnand %p449, %p450
    %p452 = pneg %p451
    // Predicated region
    $region9: #{tpu_custom_call.1} parent=5 // pred_check
      _
    $region10: #{tpu_custom_call.1} parent=5 // pred_check_branch
      %454 = sbr.rel (%p451) target = $region12
    $region11: #{tpu_custom_call.1} parent=5 // pred_region
      %s455 = ssub.s32 %s30, 1
      // Predicated region
      $region13: #{tpu_custom_call.1} parent=11 // pred_check
        %p456 = pneg %p119
      $region14: #{tpu_custom_call.1} parent=11 // pred_check_branch
        %458 = sbr.rel (%p456) target = $region16
      $region15: #{tpu_custom_call.1} parent=11 // pred_region
        _
      $region16: #{tpu_custom_call.1} parent=11 // pred_fallthru
        _
      // Predicated region
      $region17: #{tpu_custom_call.1} parent=11 // pred_check
        %p459 = pneg %p140
      $region18: #{tpu_custom_call.1} parent=11 // pred_check_branch
        %461 = sbr.rel (%p459) target = $region20
      $region19: #{tpu_custom_call.1} parent=11 // pred_region
        _
      $region20: #{tpu_custom_call.1} parent=11 // pred_fallthru
        _
      // Predicated region
      $region21: #{tpu_custom_call.1} parent=11 // pred_check
        %p462 = pneg %p161
      $region22: #{tpu_custom_call.1} parent=11 // pred_check_branch
        %464 = sbr.rel (%p462) target = $region24
      $region23: #{tpu_custom_call.1} parent=11 // pred_region
        _
      $region24: #{tpu_custom_call.1} parent=11 // pred_fallthru
        _
      // Predicated region
      $region25: #{tpu_custom_call.1} parent=11 // pred_check
        %p465 = pneg %p182
      $region26: #{tpu_custom_call.1} parent=11 // pred_check_branch
        %467 = sbr.rel (%p465) target = $region28
      $region27: #{tpu_custom_call.1} parent=11 // pred_region
        _
      $region28: #{tpu_custom_call.1} parent=11 // pred_fallthru
        _
      // Predicated region
      $region29: #{tpu_custom_call.1} parent=11 // pred_check
        %p468 = pneg %p203
      $region30: #{tpu_custom_call.1} parent=11 // pred_check_branch
        %470 = sbr.rel (%p468) target = $region32
      $region31: #{tpu_custom_call.1} parent=11 // pred_region
        _
      $region32: #{tpu_custom_call.1} parent=11 // pred_fallthru
        _
      // Predicated region
      $region33: #{tpu_custom_call.1} parent=11 // pred_check
        %p471 = pneg %p224
      $region34: #{tpu_custom_call.1} parent=11 // pred_check_branch
        %473 = sbr.rel (%p471) target = $region36
      $region35: #{tpu_custom_call.1} parent=11 // pred_region
        _
      $region36: #{tpu_custom_call.1} parent=11 // pred_fallthru
        _
      // Predicated region
      $region37: #{tpu_custom_call.1} parent=11 // pred_check
        %p474 = pneg %p245
      $region38: #{tpu_custom_call.1} parent=11 // pred_check_branch
        %476 = sbr.rel (%p474) target = $region40
      $region39: #{tpu_custom_call.1} parent=11 // pred_region
        _
      $region40: #{tpu_custom_call.1} parent=11 // pred_fallthru
        _
      // Predicated region
      $region41: #{tpu_custom_call.1} parent=11 // pred_check
        %p477 = pneg %p266
      $region42: #{tpu_custom_call.1} parent=11 // pred_check_branch
        %479 = sbr.rel (%p477) target = $region44
      $region43: #{tpu_custom_call.1} parent=11 // pred_region
        _
      $region44: #{tpu_custom_call.1} parent=11 // pred_fallthru
        _
      // Predicated region
      $region45: #{tpu_custom_call.1} parent=11 // pred_check
        %p480 = pneg %p287
      $region46: #{tpu_custom_call.1} parent=11 // pred_check_branch
        %482 = sbr.rel (%p480) target = $region48
      $region47: #{tpu_custom_call.1} parent=11 // pred_region
        _
      $region48: #{tpu_custom_call.1} parent=11 // pred_fallthru
        _
      // Predicated region
      $region49: #{tpu_custom_call.1} parent=11 // pred_check
        %p483 = pneg %p308
      $region50: #{tpu_custom_call.1} parent=11 // pred_check_branch
        %485 = sbr.rel (%p483) target = $region52
      $region51: #{tpu_custom_call.1} parent=11 // pred_region
        _
      $region52: #{tpu_custom_call.1} parent=11 // pred_fallthru
        _
      // Predicated region
      $region53: #{tpu_custom_call.1} parent=11 // pred_check
        %p486 = pneg %p329
      $region54: #{tpu_custom_call.1} parent=11 // pred_check_branch
        %488 = sbr.rel (%p486) target = $region56
      $region55: #{tpu_custom_call.1} parent=11 // pred_region
        _
      $region56: #{tpu_custom_call.1} parent=11 // pred_fallthru
        _
      // Predicated region
      $region57: #{tpu_custom_call.1} parent=11 // pred_check
        %p489 = pneg %p350
      $region58: #{tpu_custom_call.1} parent=11 // pred_check_branch
        %491 = sbr.rel (%p489) target = $region60
      $region59: #{tpu_custom_call.1} parent=11 // pred_region
        _
      $region60: #{tpu_custom_call.1} parent=11 // pred_fallthru
        _
      // Predicated region
      $region61: #{tpu_custom_call.1} parent=11 // pred_check
        %p492 = pneg %p371
      $region62: #{tpu_custom_call.1} parent=11 // pred_check_branch
        %494 = sbr.rel (%p492) target = $region64
      $region63: #{tpu_custom_call.1} parent=11 // pred_region
        _
      $region64: #{tpu_custom_call.1} parent=11 // pred_fallthru
        _
      // Predicated region
      $region65: #{tpu_custom_call.1} parent=11 // pred_check
        %p495 = pneg %p392
      $region66: #{tpu_custom_call.1} parent=11 // pred_check_branch
        %497 = sbr.rel (%p495) target = $region68
      $region67: #{tpu_custom_call.1} parent=11 // pred_region
        _
      $region68: #{tpu_custom_call.1} parent=11 // pred_fallthru
        _
      // Predicated region
      $region69: #{tpu_custom_call.1} parent=11 // pred_check
        %p498 = pneg %p413
      $region70: #{tpu_custom_call.1} parent=11 // pred_check_branch
        %500 = sbr.rel (%p498) target = $region72
      $region71: #{tpu_custom_call.1} parent=11 // pred_region
        _
      $region72: #{tpu_custom_call.1} parent=11 // pred_fallthru
        _
    $region12: #{tpu_custom_call.1} parent=5 // pred_fallthru
      _
    %p501 = scmp.lt.s32.totalorder %s30, 2
    // Predicated region
    $region73: #{tpu_custom_call.1} parent=5 // pred_check
      %p502 = pneg %p501
    $region74: #{tpu_custom_call.1} parent=5 // pred_check_branch
      %504 = sbr.rel (%p502) target = $region76
    $region75: #{tpu_custom_call.1} parent=5 // pred_region
      // Predicated region
      $region77: #{tpu_custom_call.1} parent=75 // pred_check
        %p505 = pneg %p64
      $region78: #{tpu_custom_call.1} parent=75 // pred_check_branch
        %507 = sbr.rel (%p505) target = $region80
      $region79: #{tpu_custom_call.1} parent=75 // pred_region
        %p508 = scmp.lt.s32.totalorder %s37, 1
        %s509 = scalar_select %p508, %s37, 1
        %p510 = scmp.lt.s32.totalorder %s38, 0
        %s511 = scalar_select %p510, %s38, 0
        %s512 = smul.addr %s509, 48
        %s513 = sadd.s32 %s511, %s512
        %s514 = smul.addr %s513, 8
        %s515 = scalar_lea.vmem %s1, %s514
      $region80: #{tpu_custom_call.1} parent=75 // pred_fallthru
        _
      // Predicated region
      $region81: #{tpu_custom_call.1} parent=75 // pred_check
        %p516 = pneg %p92
      $region82: #{tpu_custom_call.1} parent=75 // pred_check_branch
        %518 = sbr.rel (%p516) target = $region84
      $region83: #{tpu_custom_call.1} parent=75 // pred_region
        %p519 = scmp.lt.s32.totalorder %s37, 1
        %s520 = scalar_select %p519, %s37, 1
        %p521 = scmp.lt.s32.totalorder %s38, 0
        %s522 = scalar_select %p521, %s38, 0
        %s523 = smul.addr %s520, 48
        %s524 = sadd.s32 %s522, %s523
        %s525 = smul.addr %s524, 8
        %s526 = scalar_lea.vmem %s2, %s525
      $region84: #{tpu_custom_call.1} parent=75 // pred_fallthru
        _
    $region76: #{tpu_custom_call.1} parent=5 // pred_fallthru
      _
    %p527 = scmp.le.s32.totalorder 1, %s30
    %p528 = scmp.lt.s32.totalorder %s30, 3
    %p529 = pnand %p527, %p528
    %p530 = pneg %p529
    // Predicated region
    $region85: #{tpu_custom_call.1} parent=5 // pred_check
      _
    $region86: #{tpu_custom_call.1} parent=5 // pred_check_branch
      %532 = sbr.rel (%p529) target = $region88
    $region87: #{tpu_custom_call.1} parent=5 // pred_region
      %s533 = ssub.s32 %s30, 1
      %p534 = scmp.lt.s32.totalorder %s39, 1
      %s535 = scalar_select %p534, %s39, 1
      %p536 = scmp.lt.s32.totalorder %s40, 0
      %s537 = scalar_select %p536, %s40, 0
      %s538 = smul.addr %s535, 48
      %s539 = sadd.s32 %s537, %s538
      %s540 = smul.addr %s539, 8
      %s541 = scalar_lea.vmem %s1, %s540
      %p542 = pneg %p70
      %p543 = pneg %p67
      %p544 = scmp.lt.s32.totalorder %s39, 1
      %s545 = scalar_select %p544, %s39, 1
      %p546 = scmp.lt.s32.totalorder %s40, 0
      %s547 = scalar_select %p546, %s40, 0
      %s548 = smul.addr %s545, 48
      %s549 = sadd.s32 %s547, %s548
      %s550 = smul.addr %s549, 8
      %s551 = scalar_lea.vmem %s2, %s550
      %p552 = pneg %p98
      %p553 = pneg %p95
      %p554 = pneg %p119
      %p555 = pneg %p116
      %p556 = pneg %p140
      %p557 = pneg %p137
      %p558 = pneg %p161
      %p559 = pneg %p158
      %p560 = pneg %p182
      %p561 = pneg %p179
      %p562 = pneg %p203
      %p563 = pneg %p200
      %p564 = pneg %p224
      %p565 = pneg %p221
      %p566 = pneg %p245
      %p567 = pneg %p242
      %p568 = pneg %p266
      %p569 = pneg %p263
      %p570 = pneg %p287
      %p571 = pneg %p284
      %p572 = pneg %p308
      %p573 = pneg %p305
      %p574 = pneg %p329
      %p575 = pneg %p326
      %p576 = pneg %p350
      %p577 = pneg %p347
      %p578 = pneg %p371
      %p579 = pneg %p368
      %p580 = pneg %p392
      %p581 = pneg %p389
      %p582 = pneg %p413
      %p583 = pneg %p410
      %p584 = pneg %p441
      %p585 = pneg %p438
      %p586 = scmp.lt.s32.totalorder %s39, 1
      %s587 = scalar_select %p586, %s39, 1
      %p588 = scmp.lt.s32.totalorder %s40, 0
      %s589 = scalar_select %p588, %s40, 0
      %s590 = smul.addr %s587, 16
      %s591 = sadd.s32 %s589, %s590
      %s592 = smul.addr %s591, 8
      %s593 = scalar_lea.vmem %s18, %s592
      %p594 = scmp.lt.s32.totalorder %s39, 1
      %s595 = scalar_select %p594, %s39, 1
      %p596 = scmp.lt.s32.totalorder %s40, 0
      %s597 = scalar_select %p596, %s40, 0
      %s598 = smul.addr %s595, 48
      %s599 = sadd.s32 %s597, %s598
      %s600 = smul.addr %s599, 8
      %s601 = scalar_lea.vmem %s1, %s600
      %p602 = scmp.lt.s32.totalorder %s39, 1
      %s603 = scalar_select %p602, %s39, 1
      %p604 = scmp.lt.s32.totalorder %s40, 0
      %s605 = scalar_select %p604, %s40, 0
      %s606 = smul.addr %s603, 48
      %s607 = sadd.s32 %s605, %s606
      %s608 = smul.addr %s607, 8
      %s609 = scalar_lea.vmem %s2, %s608
      %p610 = scmp.lt.s32.totalorder %s39, 1
      %s611 = scalar_select %p610, %s39, 1
      %p612 = scmp.lt.s32.totalorder %s40, 0
      %s613 = scalar_select %p612, %s40, 0
      %s614 = smul.addr %s611, 16
      %s615 = sadd.s32 %s613, %s614
      %s616 = smul.addr %s615, 8
      %s617 = scalar_lea.vmem %s18, %s616
      %s619 = sld [smem:[#allocation3 + %s39]]
      %v620 = vld [vmem:[%s17] sm:$0xf]
      %v621 = vld [vmem:[%s17 + $0x4] sm:$0xf]
      %v622 = vld [vmem:[%s17 + $0x8] sm:$0xf]
      %v623 = vld [vmem:[%s17 + $0xc] sm:$0xf]
      %v624 = vld [vmem:[%s17 + $0x10] sm:$0xf]
      %v625 = vld [vmem:[%s17 + $0x14] sm:$0xf]
      %v626 = vld [vmem:[%s17 + $0x18] sm:$0xf]
      %v627 = vld [vmem:[%s17 + $0x1c] sm:$0xf]
      %v628 = vld [vmem:[%s17 + $0x20] sm:$0xf]
      %v629 = vld [vmem:[%s17 + $0x24] sm:$0xf]
      %v630 = vld [vmem:[%s17 + $0x28] sm:$0xf]
      %v631 = vld [vmem:[%s17 + $0x2c] sm:$0xf]
      %v632 = vld [vmem:[%s17 + $0x30] sm:$0xf]
      %v633 = vld [vmem:[%s17 + $0x34] sm:$0xf]
      %v634 = vld [vmem:[%s17 + $0x38] sm:$0xf]
      %v635 = vld [vmem:[%s17 + $0x3c] sm:$0xf]
      %v636 = vld [vmem:[%s3] sm:$0xf]
      %v637 = vld [vmem:[%s3 + $0x4] sm:$0xf]
      %v638 = vld [vmem:[%s3 + $0x8] sm:$0xf]
      %v639 = vld [vmem:[%s3 + $0xc] sm:$0xf]
      %v640 = vld [vmem:[%s3 + $0x10] sm:$0xf]
      %v641 = vld [vmem:[%s3 + $0x14] sm:$0xf]
      %v642 = vld [vmem:[%s3 + $0x18] sm:$0xf]
      %v643 = vld [vmem:[%s3 + $0x1c] sm:$0xf]
      %v644 = vld [vmem:[%s3 + $0x20] sm:$0xf]
      %v645 = vld [vmem:[%s3 + $0x24] sm:$0xf]
      %v646 = vld [vmem:[%s3 + $0x28] sm:$0xf]
      %v647 = vld [vmem:[%s3 + $0x2c] sm:$0xf]
      %v648 = vld [vmem:[%s3 + $0x30] sm:$0xf]
      %v649 = vld [vmem:[%s3 + $0x34] sm:$0xf]
      %v650 = vld [vmem:[%s3 + $0x38] sm:$0xf]
      %v651 = vld [vmem:[%s3 + $0x3c] sm:$0xf]
      %v652 = vld [vmem:[%s3 + $0x40] sm:$0xf]
      %v653 = vld [vmem:[%s3 + $0x44] sm:$0xf]
      %v654 = vld [vmem:[%s3 + $0x48] sm:$0xf]
      %v655 = vld [vmem:[%s3 + $0x4c] sm:$0xf]
      %v656 = vld [vmem:[%s3 + $0x50] sm:$0xf]
      %v657 = vld [vmem:[%s3 + $0x54] sm:$0xf]
      %v658 = vld [vmem:[%s3 + $0x58] sm:$0xf]
      %v659 = vld [vmem:[%s3 + $0x5c] sm:$0xf]
      %v660 = vld [vmem:[%s3 + $0x60] sm:$0xf]
      %v661 = vld [vmem:[%s3 + $0x64] sm:$0xf]
      %v662 = vld [vmem:[%s3 + $0x68] sm:$0xf]
      %v663 = vld [vmem:[%s3 + $0x6c] sm:$0xf]
      %v664 = vld [vmem:[%s3 + $0x70] sm:$0xf]
      %v665 = vld [vmem:[%s3 + $0x74] sm:$0xf]
      %v666 = vld [vmem:[%s3 + $0x78] sm:$0xf]
      %v667 = vld [vmem:[%s3 + $0x7c] sm:$0xf]
      %v668 = vld [vmem:[%s4] sm:$0xff]
      %v669 = vld [vmem:[%s4 + $0x8] sm:$0xff]
      %v670 = vld [vmem:[%s4 + $0x10] sm:$0xff]
      %v671 = vld [vmem:[%s4 + $0x18] sm:$0xff]
      %v672 = vld [vmem:[%s4 + $0x20] sm:$0xff]
      %v673 = vld [vmem:[%s4 + $0x28] sm:$0xff]
      %v674 = vld [vmem:[%s4 + $0x30] sm:$0xff]
      %v675 = vld [vmem:[%s4 + $0x38] sm:$0xff]
      %v676 = vld [vmem:[%s4 + $0x40] sm:$0xff]
      %v677 = vld [vmem:[%s4 + $0x48] sm:$0xff]
      %v678 = vld [vmem:[%s4 + $0x50] sm:$0xff]
      %v679 = vld [vmem:[%s4 + $0x58] sm:$0xff]
      %v680 = vld [vmem:[%s4 + $0x60] sm:$0xff]
      %v681 = vld [vmem:[%s4 + $0x68] sm:$0xff]
      %v682 = vld [vmem:[%s4 + $0x70] sm:$0xff]
      %v683 = vld [vmem:[%s4 + $0x78] sm:$0xff]
      %v684 = vld [vmem:[%s4 + $0x80] sm:$0xff]
      %v685 = vld [vmem:[%s4 + $0x88] sm:$0xff]
      %v686 = vld [vmem:[%s4 + $0x90] sm:$0xff]
      %v687 = vld [vmem:[%s4 + $0x98] sm:$0xff]
      %v688 = vld [vmem:[%s4 + $0xa0] sm:$0xff]
      %v689 = vld [vmem:[%s4 + $0xa8] sm:$0xff]
      %v690 = vld [vmem:[%s4 + $0xb0] sm:$0xff]
      %v691 = vld [vmem:[%s4 + $0xb8] sm:$0xff]
      %v692 = vld [vmem:[%s4 + $0xc0] sm:$0xff]
      %v693 = vld [vmem:[%s4 + $0xc8] sm:$0xff]
      %v694 = vld [vmem:[%s4 + $0xd0] sm:$0xff]
      %v695 = vld [vmem:[%s4 + $0xd8] sm:$0xff]
      %v696 = vld [vmem:[%s4 + $0xe0] sm:$0xff]
      %v697 = vld [vmem:[%s4 + $0xe8] sm:$0xff]
      %v698 = vld [vmem:[%s4 + $0xf0] sm:$0xff]
      %v699 = vld [vmem:[%s4 + $0xf8] sm:$0xff]
      %v700 = vld [vmem:[%s601] sm:$0xff]
      %v701 = vld [vmem:[%s601 + $0x8] sm:$0xff]
      %v702 = vld [vmem:[%s601 + $0x10] sm:$0xff]
      %v703 = vld [vmem:[%s601 + $0x18] sm:$0xff]
      %v704 = vld [vmem:[%s601 + $0x20] sm:$0xff]
      %v705 = vld [vmem:[%s601 + $0x28] sm:$0xff]
      %v706 = vld [vmem:[%s601 + $0x30] sm:$0xff]
      %v707 = vld [vmem:[%s601 + $0x38] sm:$0xff]
      %v708 = vld [vmem:[%s601 + $0x40] sm:$0xff]
      %v709 = vld [vmem:[%s601 + $0x48] sm:$0xff]
      %v710 = vld [vmem:[%s601 + $0x50] sm:$0xff]
      %v711 = vld [vmem:[%s601 + $0x58] sm:$0xff]
      %v712 = vld [vmem:[%s601 + $0x60] sm:$0xff]
      %v713 = vld [vmem:[%s601 + $0x68] sm:$0xff]
      %v714 = vld [vmem:[%s601 + $0x70] sm:$0xff]
      %v715 = vld [vmem:[%s601 + $0x78] sm:$0xff]
      %v716 = vpack.c.bf16 %v701, %v700
      %v717 = vpack.c.bf16 %v703, %v702
      %v718 = vpack.c.bf16 %v705, %v704
      %v719 = vpack.c.bf16 %v707, %v706
      %v720 = vpack.c.bf16 %v709, %v708
      %v721 = vpack.c.bf16 %v711, %v710
      %v722 = vpack.c.bf16 %v713, %v712
      %v723 = vpack.c.bf16 %v715, %v714
      %725 = vset.pattern.permute.xlu0 0
      %726 = vperm.xlu0 %725, %v668
      %v727 = vpop.permute.xlu0 %726
      %730 = vset.pattern.permute.xlu0 0
      %731 = vperm.xlu0 %730, %v669
      %v732 = vpop.permute.xlu0 %731
      %735 = vset.pattern.permute.xlu0 0
      %736 = vperm.xlu0 %735, %v670
      %v737 = vpop.permute.xlu0 %736
      %740 = vset.pattern.permute.xlu0 0
      %741 = vperm.xlu0 %740, %v671
      %v742 = vpop.permute.xlu0 %741
      %745 = vset.pattern.permute.xlu0 0
      %746 = vperm.xlu0 %745, %v672
      %v747 = vpop.permute.xlu0 %746
      %750 = vset.pattern.permute.xlu0 0
      %751 = vperm.xlu0 %750, %v673
      %v752 = vpop.permute.xlu0 %751
      %755 = vset.pattern.permute.xlu0 0
      %756 = vperm.xlu0 %755, %v674
      %v757 = vpop.permute.xlu0 %756
      %760 = vset.pattern.permute.xlu0 0
      %761 = vperm.xlu0 %760, %v675
      %v762 = vpop.permute.xlu0 %761
      %765 = vset.pattern.permute.xlu0 0
      %766 = vperm.xlu0 %765, %v676
      %v767 = vpop.permute.xlu0 %766
      %770 = vset.pattern.permute.xlu0 0
      %771 = vperm.xlu0 %770, %v677
      %v772 = vpop.permute.xlu0 %771
      %775 = vset.pattern.permute.xlu0 0
      %776 = vperm.xlu0 %775, %v678
      %v777 = vpop.permute.xlu0 %776
      %780 = vset.pattern.permute.xlu0 0
      %781 = vperm.xlu0 %780, %v679
      %v782 = vpop.permute.xlu0 %781
      %785 = vset.pattern.permute.xlu0 0
      %786 = vperm.xlu0 %785, %v680
      %v787 = vpop.permute.xlu0 %786
      %790 = vset.pattern.permute.xlu0 0
      %791 = vperm.xlu0 %790, %v681
      %v792 = vpop.permute.xlu0 %791
      %795 = vset.pattern.permute.xlu0 0
      %796 = vperm.xlu0 %795, %v682
      %v797 = vpop.permute.xlu0 %796
      %800 = vset.pattern.permute.xlu0 0
      %801 = vperm.xlu0 %800, %v683
      %v802 = vpop.permute.xlu0 %801
      %805 = vset.pattern.permute.xlu0 0
      %806 = vperm.xlu0 %805, %v684
      %v807 = vpop.permute.xlu0 %806
      %810 = vset.pattern.permute.xlu0 0
      %811 = vperm.xlu0 %810, %v685
      %v812 = vpop.permute.xlu0 %811
      %815 = vset.pattern.permute.xlu0 0
      %816 = vperm.xlu0 %815, %v686
      %v817 = vpop.permute.xlu0 %816
      %820 = vset.pattern.permute.xlu0 0
      %821 = vperm.xlu0 %820, %v687
      %v822 = vpop.permute.xlu0 %821
      %825 = vset.pattern.permute.xlu0 0
      %826 = vperm.xlu0 %825, %v688
      %v827 = vpop.permute.xlu0 %826
      %830 = vset.pattern.permute.xlu0 0
      %831 = vperm.xlu0 %830, %v689
      %v832 = vpop.permute.xlu0 %831
      %835 = vset.pattern.permute.xlu0 0
      %836 = vperm.xlu0 %835, %v690
      %v837 = vpop.permute.xlu0 %836
      %840 = vset.pattern.permute.xlu0 0
      %841 = vperm.xlu0 %840, %v691
      %v842 = vpop.permute.xlu0 %841
      %845 = vset.pattern.permute.xlu0 0
      %846 = vperm.xlu0 %845, %v692
      %v847 = vpop.permute.xlu0 %846
      %850 = vset.pattern.permute.xlu0 0
      %851 = vperm.xlu0 %850, %v693
      %v852 = vpop.permute.xlu0 %851
      %855 = vset.pattern.permute.xlu0 0
      %856 = vperm.xlu0 %855, %v694
      %v857 = vpop.permute.xlu0 %856
      %860 = vset.pattern.permute.xlu0 0
      %861 = vperm.xlu0 %860, %v695
      %v862 = vpop.permute.xlu0 %861
      %865 = vset.pattern.permute.xlu0 0
      %866 = vperm.xlu0 %865, %v696
      %v867 = vpop.permute.xlu0 %866
      %870 = vset.pattern.permute.xlu0 0
      %871 = vperm.xlu0 %870, %v697
      %v872 = vpop.permute.xlu0 %871
      %875 = vset.pattern.permute.xlu0 0
      %876 = vperm.xlu0 %875, %v698
      %v877 = vpop.permute.xlu0 %876
      %880 = vset.pattern.permute.xlu0 0
      %881 = vperm.xlu0 %880, %v699
      %v882 = vpop.permute.xlu0 %881
      %v916 = vunpack.c.l.b16 %v636
      %v917 = vunpack.c.l.b16 %v637
      %v918 = vunpack.c.l.b16 %v638
      %v919 = vunpack.c.l.b16 %v639
      %v920 = vunpack.c.l.b16 %v640
      %v921 = vunpack.c.l.b16 %v641
      %v922 = vunpack.c.l.b16 %v642
      %v923 = vunpack.c.l.b16 %v643
      %v924 = vunpack.c.l.b16 %v644
      %v925 = vunpack.c.l.b16 %v645
      %v926 = vunpack.c.l.b16 %v646
      %v927 = vunpack.c.l.b16 %v647
      %v928 = vunpack.c.l.b16 %v648
      %v929 = vunpack.c.l.b16 %v649
      %v930 = vunpack.c.l.b16 %v650
      %v931 = vunpack.c.l.b16 %v651
      %v932 = vunpack.c.l.b16 %v652
      %v933 = vunpack.c.l.b16 %v653
      %v934 = vunpack.c.l.b16 %v654
      %v935 = vunpack.c.l.b16 %v655
      %v936 = vunpack.c.l.b16 %v656
      %v937 = vunpack.c.l.b16 %v657
      %v938 = vunpack.c.l.b16 %v658
      %v939 = vunpack.c.l.b16 %v659
      %v940 = vunpack.c.l.b16 %v660
      %v941 = vunpack.c.l.b16 %v661
      %v942 = vunpack.c.l.b16 %v662
      %v943 = vunpack.c.l.b16 %v663
      %v944 = vunpack.c.l.b16 %v664
      %v945 = vunpack.c.l.b16 %v665
      %v946 = vunpack.c.l.b16 %v666
      %v947 = vunpack.c.l.b16 %v667
      %v948 = vpack.c.b16 %v917, %v916
      %v949 = vpack.c.b16 %v919, %v918
      %v950 = vpack.c.b16 %v921, %v920
      %v951 = vpack.c.b16 %v923, %v922
      %v952 = vpack.c.b16 %v925, %v924
      %v953 = vpack.c.b16 %v927, %v926
      %v954 = vpack.c.b16 %v929, %v928
      %v955 = vpack.c.b16 %v931, %v930
      %v956 = vpack.c.b16 %v933, %v932
      %v957 = vpack.c.b16 %v935, %v934
      %v958 = vpack.c.b16 %v937, %v936
      %v959 = vpack.c.b16 %v939, %v938
      %v960 = vpack.c.b16 %v941, %v940
      %v961 = vpack.c.b16 %v943, %v942
      %v962 = vpack.c.b16 %v945, %v944
      %v963 = vpack.c.b16 %v947, %v946
      %980 = vmatprep.subr.bf16.mxu0 0
      %981 = vmatpush1.bf16.msra.mxu0 %v716
      %982 = vmatprep.subr.bf16.mxu0 0
      %983 = vmatpush1.bf16.msra.mxu0 %v717
      %984 = vmatprep.subr.bf16.mxu0 0
      %985 = vmatpush1.bf16.msra.mxu0 %v718
      %986 = vmatprep.subr.bf16.mxu0 0
      %987 = vmatpush1.bf16.msra.mxu0 %v719
      %988 = vmatprep.subr.bf16.mxu0 0
      %989 = vmatpush1.bf16.msra.mxu0 %v720
      %990 = vmatprep.subr.bf16.mxu0 0
      %991 = vmatpush1.bf16.msra.mxu0 %v721
      %992 = vmatprep.subr.bf16.mxu0 0
      %993 = vmatpush1.bf16.msra.mxu0 %v722
      %994 = vmatprep.subr.bf16.mxu0 0
      %995 = vmatpush1.bf16.msra.mxu0 %v723
      %996 = vmatprep.subr.bf16.mxu0 0
      %997 = vmatpush1.bf16.msra.mxu0 0
      %998 = vmatprep.subr.bf16.mxu0 0
      %999 = vmatpush1.bf16.msra.mxu0 0
      %1000 = vmatprep.subr.bf16.mxu0 0
      %1001 = vmatpush1.bf16.msra.mxu0 0
      %1002 = vmatprep.subr.bf16.mxu0 0
      %1003 = vmatpush1.bf16.msra.mxu0 0
      %1004 = vmatprep.subr.bf16.mxu0 0
      %1005 = vmatpush1.bf16.msra.mxu0 0
      %1006 = vmatprep.subr.bf16.mxu0 0
      %1007 = vmatpush1.bf16.msra.mxu0 0
      %1008 = vmatprep.subr.bf16.mxu0 0
      %1009 = vmatpush1.bf16.msra.mxu0 0
      %1010 = vmatprep.subr.bf16.mxu0 0
      %1011 = vmatpush1.bf16.msra.mxu0 0
      %1012 = vmatprep.mubr.bf16.mxu0 0
      %1013 = vmatmul.mubr.bf16.gmra.mrb[0].mxu0 %v948
      %v1014 = vpop.f32.mrb[0].mxu0
      %v1015 = vadd.f32 %v727, %v1014
      %v1016 = vpop.f32.mrb[0].mxu0
      %v1017 = vpop.f32.mrb[0].mxu0
      %v1018 = vadd.f32 %v732, %v1017
      %v1019 = vpop.f32.mrb[0].mxu0
      %1020 = vmatprep.mubr.bf16.mxu0 0
      %1021 = vmatmul.mubr.bf16.gmra.mrb[0].mxu0 %v949
      %v1022 = vpop.f32.mrb[0].mxu0
      %v1023 = vadd.f32 %v737, %v1022
      %v1024 = vpop.f32.mrb[0].mxu0
      %v1025 = vpop.f32.mrb[0].mxu0
      %v1026 = vadd.f32 %v742, %v1025
      %v1027 = vpop.f32.mrb[0].mxu0
      %1028 = vmatprep.mubr.bf16.mxu0 0
      %1029 = vmatmul.mubr.bf16.gmra.mrb[0].mxu0 %v950
      %v1030 = vpop.f32.mrb[0].mxu0
      %v1031 = vadd.f32 %v747, %v1030
      %v1032 = vpop.f32.mrb[0].mxu0
      %v1033 = vpop.f32.mrb[0].mxu0
      %v1034 = vadd.f32 %v752, %v1033
      %v1035 = vpop.f32.mrb[0].mxu0
      %1036 = vmatprep.mubr.bf16.mxu0 0
      %1037 = vmatmul.mubr.bf16.gmra.mrb[0].mxu0 %v951
      %v1038 = vpop.f32.mrb[0].mxu0
      %v1039 = vadd.f32 %v757, %v1038
      %v1040 = vpop.f32.mrb[0].mxu0
      %v1041 = vpop.f32.mrb[0].mxu0
      %v1042 = vadd.f32 %v762, %v1041
      %v1043 = vpop.f32.mrb[0].mxu0
      %1044 = vmatprep.mubr.bf16.mxu0 0
      %1045 = vmatmul.mubr.bf16.gmra.mrb[0].mxu0 %v952
      %v1046 = vpop.f32.mrb[0].mxu0
      %v1047 = vadd.f32 %v767, %v1046
      %v1048 = vpop.f32.mrb[0].mxu0
      %v1049 = vpop.f32.mrb[0].mxu0
      %v1050 = vadd.f32 %v772, %v1049
      %v1051 = vpop.f32.mrb[0].mxu0
      %1052 = vmatprep.mubr.bf16.mxu0 0
      %1053 = vmatmul.mubr.bf16.gmra.mrb[0].mxu0 %v953
      %v1054 = vpop.f32.mrb[0].mxu0
      %v1055 = vadd.f32 %v777, %v1054
      %v1056 = vpop.f32.mrb[0].mxu0
      %v1057 = vpop.f32.mrb[0].mxu0
      %v1058 = vadd.f32 %v782, %v1057
      %v1059 = vpop.f32.mrb[0].mxu0
      %1060 = vmatprep.mubr.bf16.mxu0 0
      %1061 = vmatmul.mubr.bf16.gmra.mrb[0].mxu0 %v954
      %v1062 = vpop.f32.mrb[0].mxu0
      %v1063 = vadd.f32 %v787, %v1062
      %v1064 = vpop.f32.mrb[0].mxu0
      %v1065 = vpop.f32.mrb[0].mxu0
      %v1066 = vadd.f32 %v792, %v1065
      %v1067 = vpop.f32.mrb[0].mxu0
      %1068 = vmatprep.mubr.bf16.mxu0 0
      %1069 = vmatmul.mubr.bf16.gmra.mrb[0].mxu0 %v955
      %v1070 = vpop.f32.mrb[0].mxu0
      %v1071 = vadd.f32 %v797, %v1070
      %v1072 = vpop.f32.mrb[0].mxu0
      %v1073 = vpop.f32.mrb[0].mxu0
      %v1074 = vadd.f32 %v802, %v1073
      %v1075 = vpop.f32.mrb[0].mxu0
      %1076 = vmatprep.mubr.bf16.mxu0 0
      %1077 = vmatmul.mubr.bf16.gmra.mrb[0].mxu0 %v956
      %v1078 = vpop.f32.mrb[0].mxu0
      %v1079 = vadd.f32 %v807, %v1078
      %v1080 = vpop.f32.mrb[0].mxu0
      %v1081 = vpop.f32.mrb[0].mxu0
      %v1082 = vadd.f32 %v812, %v1081
      %v1083 = vpop.f32.mrb[0].mxu0
      %1084 = vmatprep.mubr.bf16.mxu0 0
      %1085 = vmatmul.mubr.bf16.gmra.mrb[0].mxu0 %v957
      %v1086 = vpop.f32.mrb[0].mxu0
      %v1087 = vadd.f32 %v817, %v1086
      %v1088 = vpop.f32.mrb[0].mxu0
      %v1089 = vpop.f32.mrb[0].mxu0
      %v1090 = vadd.f32 %v822, %v1089
      %v1091 = vpop.f32.mrb[0].mxu0
      %1092 = vmatprep.mubr.bf16.mxu0 0
      %1093 = vmatmul.mubr.bf16.gmra.mrb[0].mxu0 %v958
      %v1094 = vpop.f32.mrb[0].mxu0
      %v1095 = vadd.f32 %v827, %v1094
      %v1096 = vpop.f32.mrb[0].mxu0
      %v1097 = vpop.f32.mrb[0].mxu0
      %v1098 = vadd.f32 %v832, %v1097
      %v1099 = vpop.f32.mrb[0].mxu0
      %1100 = vmatprep.mubr.bf16.mxu0 0
      %1101 = vmatmul.mubr.bf16.gmra.mrb[0].mxu0 %v959
      %v1102 = vpop.f32.mrb[0].mxu0
      %v1103 = vadd.f32 %v837, %v1102
      %v1104 = vpop.f32.mrb[0].mxu0
      %v1105 = vpop.f32.mrb[0].mxu0
      %v1106 = vadd.f32 %v842, %v1105
      %v1107 = vpop.f32.mrb[0].mxu0
      %1108 = vmatprep.mubr.bf16.mxu0 0
      %1109 = vmatmul.mubr.bf16.gmra.mrb[0].mxu0 %v960
      %v1110 = vpop.f32.mrb[0].mxu0
      %v1111 = vadd.f32 %v847, %v1110
      %v1112 = vpop.f32.mrb[0].mxu0
      %v1113 = vpop.f32.mrb[0].mxu0
      %v1114 = vadd.f32 %v852, %v1113
      %v1115 = vpop.f32.mrb[0].mxu0
      %1116 = vmatprep.mubr.bf16.mxu0 0
      %1117 = vmatmul.mubr.bf16.gmra.mrb[0].mxu0 %v961
      %v1118 = vpop.f32.mrb[0].mxu0
      %v1119 = vadd.f32 %v857, %v1118
      %v1120 = vpop.f32.mrb[0].mxu0
      %v1121 = vpop.f32.mrb[0].mxu0
      %v1122 = vadd.f32 %v862, %v1121
      %v1123 = vpop.f32.mrb[0].mxu0
      %1124 = vmatprep.mubr.bf16.mxu0 0
      %1125 = vmatmul.mubr.bf16.gmra.mrb[0].mxu0 %v962
      %v1126 = vpop.f32.mrb[0].mxu0
      %v1127 = vadd.f32 %v867, %v1126
      %v1128 = vpop.f32.mrb[0].mxu0
      %v1129 = vpop.f32.mrb[0].mxu0
      %v1130 = vadd.f32 %v872, %v1129
      %v1131 = vpop.f32.mrb[0].mxu0
      %1132 = vmatprep.mubr.bf16.mxu0 0
      %1133 = vmatmul.mubr.bf16.gmra.mrb[0].mxu0 %v963
      %v1134 = vpop.f32.mrb[0].mxu0
      %v1135 = vadd.f32 %v877, %v1134
      %v1136 = vpop.f32.mrb[0].mxu0
      %v1137 = vpop.f32.mrb[0].mxu0
      %v1138 = vadd.f32 %v882, %v1137
      %v1139 = vpop.f32.mrb[0].mxu0
      %1140 = vdwg.mxu0
      %v1141 = vmul.f32 %v1079, %v1015
      %v1142 = vmul.f32 %v1082, %v1018
      %v1143 = vmul.f32 %v1087, %v1023
      %v1144 = vmul.f32 %v1090, %v1026
      %v1145 = vmul.f32 %v1095, %v1031
      %v1146 = vmul.f32 %v1098, %v1034
      %v1147 = vmul.f32 %v1103, %v1039
      %v1148 = vmul.f32 %v1106, %v1042
      %v1149 = vmul.f32 %v1111, %v1047
      %v1150 = vmul.f32 %v1114, %v1050
      %v1151 = vmul.f32 %v1119, %v1055
      %v1152 = vmul.f32 %v1122, %v1058
      %v1153 = vmul.f32 %v1127, %v1063
      %v1154 = vmul.f32 %v1130, %v1066
      %v1155 = vmul.f32 %v1135, %v1071
      %v1156 = vmul.f32 %v1138, %v1074
      %v1157 = vpack.c.bf16 %v1142, %v1141
      %v1158 = vpack.c.bf16 %v1144, %v1143
      %v1159 = vpack.c.bf16 %v1146, %v1145
      %v1160 = vpack.c.bf16 %v1148, %v1147
      %v1161 = vpack.c.bf16 %v1150, %v1149
      %v1162 = vpack.c.bf16 %v1152, %v1151
      %v1163 = vpack.c.bf16 %v1154, %v1153
      %v1164 = vpack.c.bf16 %v1156, %v1155
      %v1181 = vunpack.c.l.b16 %v620
      %v1182 = vunpack.c.l.b16 %v621
      %v1183 = vunpack.c.l.b16 %v622
      %v1184 = vunpack.c.l.b16 %v623
      %v1185 = vunpack.c.l.b16 %v624
      %v1186 = vunpack.c.l.b16 %v625
      %v1187 = vunpack.c.l.b16 %v626
      %v1188 = vunpack.c.l.b16 %v627
      %v1189 = vunpack.c.l.b16 %v628
      %v1190 = vunpack.c.l.b16 %v629
      %v1191 = vunpack.c.l.b16 %v630
      %v1192 = vunpack.c.l.b16 %v631
      %v1193 = vunpack.c.l.b16 %v632
      %v1194 = vunpack.c.l.b16 %v633
      %v1195 = vunpack.c.l.b16 %v634
      %v1196 = vunpack.c.l.b16 %v635
      %v1197 = vpack.c.b16 %v1182, %v1181
      %v1198 = vpack.c.b16 %v1184, %v1183
      %v1199 = vpack.c.b16 %v1186, %v1185
      %v1200 = vpack.c.b16 %v1188, %v1187
      %v1201 = vpack.c.b16 %v1190, %v1189
      %v1202 = vpack.c.b16 %v1192, %v1191
      %v1203 = vpack.c.b16 %v1194, %v1193
      %v1204 = vpack.c.b16 %v1196, %v1195
      %1213 = vmatprep.subr.bf16.mxu0 0
      %1214 = vmatpush1.bf16.msra.mxu0 %v1157
      %1215 = vmatprep.subr.bf16.mxu0 0
      %1216 = vmatpush1.bf16.msra.mxu0 %v1158
      %1217 = vmatprep.subr.bf16.mxu0 0
      %1218 = vmatpush1.bf16.msra.mxu0 %v1159
      %1219 = vmatprep.subr.bf16.mxu0 0
      %1220 = vmatpush1.bf16.msra.mxu0 %v1160
      %1221 = vmatprep.subr.bf16.mxu0 0
      %1222 = vmatpush1.bf16.msra.mxu0 %v1161
      %1223 = vmatprep.subr.bf16.mxu0 0
      %1224 = vmatpush1.bf16.msra.mxu0 %v1162
      %1225 = vmatprep.subr.bf16.mxu0 0
      %1226 = vmatpush1.bf16.msra.mxu0 %v1163
      %1227 = vmatprep.subr.bf16.mxu0 0
      %1228 = vmatpush1.bf16.msra.mxu0 %v1164
      %1229 = vmatprep.subr.bf16.mxu0 0
      %1230 = vmatpush1.bf16.msra.mxu0 0
      %1231 = vmatprep.subr.bf16.mxu0 0
      %1232 = vmatpush1.bf16.msra.mxu0 0
      %1233 = vmatprep.subr.bf16.mxu0 0
      %1234 = vmatpush1.bf16.msra.mxu0 0
      %1235 = vmatprep.subr.bf16.mxu0 0
      %1236 = vmatpush1.bf16.msra.mxu0 0
      %1237 = vmatprep.subr.bf16.mxu0 0
      %1238 = vmatpush1.bf16.msra.mxu0 0
      %1239 = vmatprep.subr.bf16.mxu0 0
      %1240 = vmatpush1.bf16.msra.mxu0 0
      %1241 = vmatprep.subr.bf16.mxu0 0
      %1242 = vmatpush1.bf16.msra.mxu0 0
      %1243 = vmatprep.subr.bf16.mxu0 0
      %1244 = vmatpush1.bf16.msra.mxu0 0
      %1245 = vmatprep.mubr.bf16.mxu0 0
      %1246 = vmatmul.mubr.bf16.gmra.mrb[0].mxu0 %v1197
      %v1247 = vpop.f32.mrb[0].mxu0
      %v1248 = vadd.f32 0.0, %v1247
      %v1249 = vpop.f32.mrb[0].mxu0
      %v1250 = vpop.f32.mrb[0].mxu0
      %v1251 = vadd.f32 0.0, %v1250
      %v1252 = vpop.f32.mrb[0].mxu0
      %1253 = vmatprep.mubr.bf16.mxu0 0
      %1254 = vmatmul.mubr.bf16.gmra.mrb[0].mxu0 %v1198
      %v1255 = vpop.f32.mrb[0].mxu0
      %v1256 = vadd.f32 0.0, %v1255
      %v1257 = vpop.f32.mrb[0].mxu0
      %v1258 = vpop.f32.mrb[0].mxu0
      %v1259 = vadd.f32 0.0, %v1258
      %v1260 = vpop.f32.mrb[0].mxu0
      %1261 = vmatprep.mubr.bf16.mxu0 0
      %1262 = vmatmul.mubr.bf16.gmra.mrb[0].mxu0 %v1199
      %v1263 = vpop.f32.mrb[0].mxu0
      %v1264 = vadd.f32 0.0, %v1263
      %v1265 = vpop.f32.mrb[0].mxu0
      %v1266 = vpop.f32.mrb[0].mxu0
      %v1267 = vadd.f32 0.0, %v1266
      %v1268 = vpop.f32.mrb[0].mxu0
      %1269 = vmatprep.mubr.bf16.mxu0 0
      %1270 = vmatmul.mubr.bf16.gmra.mrb[0].mxu0 %v1200
      %v1271 = vpop.f32.mrb[0].mxu0
      %v1272 = vadd.f32 0.0, %v1271
      %v1273 = vpop.f32.mrb[0].mxu0
      %v1274 = vpop.f32.mrb[0].mxu0
      %v1275 = vadd.f32 0.0, %v1274
      %v1276 = vpop.f32.mrb[0].mxu0
      %1277 = vmatprep.mubr.bf16.mxu0 0
      %1278 = vmatmul.mubr.bf16.gmra.mrb[0].mxu0 %v1201
      %v1279 = vpop.f32.mrb[0].mxu0
      %v1280 = vadd.f32 0.0, %v1279
      %v1281 = vpop.f32.mrb[0].mxu0
      %v1282 = vpop.f32.mrb[0].mxu0
      %v1283 = vadd.f32 0.0, %v1282
      %v1284 = vpop.f32.mrb[0].mxu0
      %1285 = vmatprep.mubr.bf16.mxu0 0
      %1286 = vmatmul.mubr.bf16.gmra.mrb[0].mxu0 %v1202
      %v1287 = vpop.f32.mrb[0].mxu0
      %v1288 = vadd.f32 0.0, %v1287
      %v1289 = vpop.f32.mrb[0].mxu0
      %v1290 = vpop.f32.mrb[0].mxu0
      %v1291 = vadd.f32 0.0, %v1290
      %v1292 = vpop.f32.mrb[0].mxu0
      %1293 = vmatprep.mubr.bf16.mxu0 0
      %1294 = vmatmul.mubr.bf16.gmra.mrb[0].mxu0 %v1203
      %v1295 = vpop.f32.mrb[0].mxu0
      %v1296 = vadd.f32 0.0, %v1295
      %v1297 = vpop.f32.mrb[0].mxu0
      %v1298 = vpop.f32.mrb[0].mxu0
      %v1299 = vadd.f32 0.0, %v1298
      %v1300 = vpop.f32.mrb[0].mxu0
      %1301 = vmatprep.mubr.bf16.mxu0 0
      %1302 = vmatmul.mubr.bf16.gmra.mrb[0].mxu0 %v1204
      %v1303 = vpop.f32.mrb[0].mxu0
      %v1304 = vadd.f32 0.0, %v1303
      %v1305 = vpop.f32.mrb[0].mxu0
      %v1306 = vpop.f32.mrb[0].mxu0
      %v1307 = vadd.f32 0.0, %v1306
      %v1308 = vpop.f32.mrb[0].mxu0
      %1309 = vdwg.mxu0
      %s1310 = scalar_lea.vmem %s601, 128
      %v1311 = vld [vmem:[%s1310] sm:$0xff]
      %v1312 = vld [vmem:[%s1310 + $0x8] sm:$0xff]
      %v1313 = vld [vmem:[%s1310 + $0x10] sm:$0xff]
      %v1314 = vld [vmem:[%s1310 + $0x18] sm:$0xff]
      %v1315 = vld [vmem:[%s1310 + $0x20] sm:$0xff]
      %v1316 = vld [vmem:[%s1310 + $0x28] sm:$0xff]
      %v1317 = vld [vmem:[%s1310 + $0x30] sm:$0xff]
      %v1318 = vld [vmem:[%s1310 + $0x38] sm:$0xff]
      %v1319 = vld [vmem:[%s1310 + $0x40] sm:$0xff]
      %v1320 = vld [vmem:[%s1310 + $0x48] sm:$0xff]
      %v1321 = vld [vmem:[%s1310 + $0x50] sm:$0xff]
      %v1322 = vld [vmem:[%s1310 + $0x58] sm:$0xff]
      %v1323 = vld [vmem:[%s1310 + $0x60] sm:$0xff]
      %v1324 = vld [vmem:[%s1310 + $0x68] sm:$0xff]
      %v1325 = vld [vmem:[%s1310 + $0x70] sm:$0xff]
      %v1326 = vld [vmem:[%s1310 + $0x78] sm:$0xff]
      %v1327 = vpack.c.bf16 %v1312, %v1311
      %v1328 = vpack.c.bf16 %v1314, %v1313
      %v1329 = vpack.c.bf16 %v1316, %v1315
      %v1330 = vpack.c.bf16 %v1318, %v1317
      %v1331 = vpack.c.bf16 %v1320, %v1319
      %v1332 = vpack.c.bf16 %v1322, %v1321
      %v1333 = vpack.c.bf16 %v1324, %v1323
      %v1334 = vpack.c.bf16 %v1326, %v1325
      %1335 = vmatprep.subr.bf16.mxu0 0
      %1336 = vmatpush1.bf16.msra.mxu0 %v1327
      %1337 = vmatprep.subr.bf16.mxu0 0
      %1338 = vmatpush1.bf16.msra.mxu0 %v1328
      %1339 = vmatprep.subr.bf16.mxu0 0
      %1340 = vmatpush1.bf16.msra.mxu0 %v1329
      %1341 = vmatprep.subr.bf16.mxu0 0
      %1342 = vmatpush1.bf16.msra.mxu0 %v1330
      %1343 = vmatprep.subr.bf16.mxu0 0
      %1344 = vmatpush1.bf16.msra.mxu0 %v1331
      %1345 = vmatprep.subr.bf16.mxu0 0
      %1346 = vmatpush1.bf16.msra.mxu0 %v1332
      %1347 = vmatprep.subr.bf16.mxu0 0
      %1348 = vmatpush1.bf16.msra.mxu0 %v1333
      %1349 = vmatprep.subr.bf16.mxu0 0
      %1350 = vmatpush1.bf16.msra.mxu0 %v1334
      %1351 = vmatprep.subr.bf16.mxu0 0
      %1352 = vmatpush1.bf16.msra.mxu0 0
      %1353 = vmatprep.subr.bf16.mxu0 0
      %1354 = vmatpush1.bf16.msra.mxu0 0
      %1355 = vmatprep.subr.bf16.mxu0 0
      %1356 = vmatpush1.bf16.msra.mxu0 0
      %1357 = vmatprep.subr.bf16.mxu0 0
      %1358 = vmatpush1.bf16.msra.mxu0 0
      %1359 = vmatprep.subr.bf16.mxu0 0
      %1360 = vmatpush1.bf16.msra.mxu0 0
      %1361 = vmatprep.subr.bf16.mxu0 0
      %1362 = vmatpush1.bf16.msra.mxu0 0
      %1363 = vmatprep.subr.bf16.mxu0 0
      %1364 = vmatpush1.bf16.msra.mxu0 0
      %1365 = vmatprep.subr.bf16.mxu0 0
      %1366 = vmatpush1.bf16.msra.mxu0 0
      %1367 = vmatprep.mubr.bf16.mxu0 0
      %1368 = vmatmul.mubr.bf16.gmra.mrb[0].mxu0 %v948
      %v1369 = vpop.f32.mrb[0].mxu0
      %v1370 = vadd.f32 %v727, %v1369
      %v1371 = vpop.f32.mrb[0].mxu0
      %v1372 = vpop.f32.mrb[0].mxu0
      %v1373 = vadd.f32 %v732, %v1372
      %v1374 = vpop.f32.mrb[0].mxu0
      %1375 = vmatprep.mubr.bf16.mxu0 0
      %1376 = vmatmul.mubr.bf16.gmra.mrb[0].mxu0 %v949
      %v1377 = vpop.f32.mrb[0].mxu0
      %v1378 = vadd.f32 %v737, %v1377
      %v1379 = vpop.f32.mrb[0].mxu0
      %v1380 = vpop.f32.mrb[0].mxu0
      %v1381 = vadd.f32 %v742, %v1380
      %v1382 = vpop.f32.mrb[0].mxu0
      %1383 = vmatprep.mubr.bf16.mxu0 0
      %1384 = vmatmul.mubr.bf16.gmra.mrb[0].mxu0 %v950
      %v1385 = vpop.f32.mrb[0].mxu0
      %v1386 = vadd.f32 %v747, %v1385
      %v1387 = vpop.f32.mrb[0].mxu0
      %v1388 = vpop.f32.mrb[0].mxu0
      %v1389 = vadd.f32 %v752, %v1388
      %v1390 = vpop.f32.mrb[0].mxu0
      %1391 = vmatprep.mubr.bf16.mxu0 0
      %1392 = vmatmul.mubr.bf16.gmra.mrb[0].mxu0 %v951
      %v1393 = vpop.f32.mrb[0].mxu0
      %v1394 = vadd.f32 %v757, %v1393
      %v1395 = vpop.f32.mrb[0].mxu0
      %v1396 = vpop.f32.mrb[0].mxu0
      %v1397 = vadd.f32 %v762, %v1396
      %v1398 = vpop.f32.mrb[0].mxu0
      %1399 = vmatprep.mubr.bf16.mxu0 0
      %1400 = vmatmul.mubr.bf16.gmra.mrb[0].mxu0 %v952
      %v1401 = vpop.f32.mrb[0].mxu0
      %v1402 = vadd.f32 %v767, %v1401
      %v1403 = vpop.f32.mrb[0].mxu0
      %v1404 = vpop.f32.mrb[0].mxu0
      %v1405 = vadd.f32 %v772, %v1404
      %v1406 = vpop.f32.mrb[0].mxu0
      %1407 = vmatprep.mubr.bf16.mxu0 0
      %1408 = vmatmul.mubr.bf16.gmra.mrb[0].mxu0 %v953
      %v1409 = vpop.f32.mrb[0].mxu0
      %v1410 = vadd.f32 %v777, %v1409
      %v1411 = vpop.f32.mrb[0].mxu0
      %v1412 = vpop.f32.mrb[0].mxu0
      %v1413 = vadd.f32 %v782, %v1412
      %v1414 = vpop.f32.mrb[0].mxu0
      %1415 = vmatprep.mubr.bf16.mxu0 0
      %1416 = vmatmul.mubr.bf16.gmra.mrb[0].mxu0 %v954
      %v1417 = vpop.f32.mrb[0].mxu0
      %v1418 = vadd.f32 %v787, %v1417
      %v1419 = vpop.f32.mrb[0].mxu0
      %v1420 = vpop.f32.mrb[0].mxu0
      %v1421 = vadd.f32 %v792, %v1420
      %v1422 = vpop.f32.mrb[0].mxu0
      %1423 = vmatprep.mubr.bf16.mxu0 0
      %1424 = vmatmul.mubr.bf16.gmra.mrb[0].mxu0 %v955
      %v1425 = vpop.f32.mrb[0].mxu0
      %v1426 = vadd.f32 %v797, %v1425
      %v1427 = vpop.f32.mrb[0].mxu0
      %v1428 = vpop.f32.mrb[0].mxu0
      %v1429 = vadd.f32 %v802, %v1428
      %v1430 = vpop.f32.mrb[0].mxu0
      %1431 = vdwg.mxu0
      %v1432 = vmul.f32 %v1079, %v1370
      %v1433 = vmul.f32 %v1082, %v1373
      %v1434 = vmul.f32 %v1087, %v1378
      %v1435 = vmul.f32 %v1090, %v1381
      %v1436 = vmul.f32 %v1095, %v1386
      %v1437 = vmul.f32 %v1098, %v1389
      %v1438 = vmul.f32 %v1103, %v1394
      %v1439 = vmul.f32 %v1106, %v1397
      %v1440 = vmul.f32 %v1111, %v1402
      %v1441 = vmul.f32 %v1114, %v1405
      %v1442 = vmul.f32 %v1119, %v1410
      %v1443 = vmul.f32 %v1122, %v1413
      %v1444 = vmul.f32 %v1127, %v1418
      %v1445 = vmul.f32 %v1130, %v1421
      %v1446 = vmul.f32 %v1135, %v1426
      %v1447 = vmul.f32 %v1138, %v1429
      %v1448 = vpack.c.bf16 %v1433, %v1432
      %v1449 = vpack.c.bf16 %v1435, %v1434
      %v1450 = vpack.c.bf16 %v1437, %v1436
      %v1451 = vpack.c.bf16 %v1439, %v1438
      %v1452 = vpack.c.bf16 %v1441, %v1440
      %v1453 = vpack.c.bf16 %v1443, %v1442
      %v1454 = vpack.c.bf16 %v1445, %v1444
      %v1455 = vpack.c.bf16 %v1447, %v1446
      %1456 = vmatprep.subr.bf16.mxu0 0
      %1457 = vmatpush1.bf16.msra.mxu0 %v1448
      %1458 = vmatprep.subr.bf16.mxu0 0
      %1459 = vmatpush1.bf16.msra.mxu0 %v1449
      %1460 = vmatprep.subr.bf16.mxu0 0
      %1461 = vmatpush1.bf16.msra.mxu0 %v1450
      %1462 = vmatprep.subr.bf16.mxu0 0
      %1463 = vmatpush1.bf16.msra.mxu0 %v1451
      %1464 = vmatprep.subr.bf16.mxu0 0
      %1465 = vmatpush1.bf16.msra.mxu0 %v1452
      %1466 = vmatprep.subr.bf16.mxu0 0
      %1467 = vmatpush1.bf16.msra.mxu0 %v1453
      %1468 = vmatprep.subr.bf16.mxu0 0
      %1469 = vmatpush1.bf16.msra.mxu0 %v1454
      %1470 = vmatprep.subr.bf16.mxu0 0
      %1471 = vmatpush1.bf16.msra.mxu0 %v1455
      %1472 = vmatprep.subr.bf16.mxu0 0
      %1473 = vmatpush1.bf16.msra.mxu0 0
      %1474 = vmatprep.subr.bf16.mxu0 0
      %1475 = vmatpush1.bf16.msra.mxu0 0
      %1476 = vmatprep.subr.bf16.mxu0 0
      %1477 = vmatpush1.bf16.msra.mxu0 0
      %1478 = vmatprep.subr.bf16.mxu0 0
      %1479 = vmatpush1.bf16.msra.mxu0 0
      %1480 = vmatprep.subr.bf16.mxu0 0
      %1481 = vmatpush1.bf16.msra.mxu0 0
      %1482 = vmatprep.subr.bf16.mxu0 0
      %1483 = vmatpush1.bf16.msra.mxu0 0
      %1484 = vmatprep.subr.bf16.mxu0 0
      %1485 = vmatpush1.bf16.msra.mxu0 0
      %1486 = vmatprep.subr.bf16.mxu0 0
      %1487 = vmatpush1.bf16.msra.mxu0 0
      %1488 = vmatprep.mubr.bf16.mxu0 0
      %1489 = vmatmul.mubr.bf16.gmra.mrb[0].mxu0 %v1197
      %v1490 = vpop.f32.mrb[0].mxu0
      %v1491 = vadd.f32 0.0, %v1490
      %v1492 = vpop.f32.mrb[0].mxu0
      %v1493 = vpop.f32.mrb[0].mxu0
      %v1494 = vadd.f32 0.0, %v1493
      %v1495 = vpop.f32.mrb[0].mxu0
      %1496 = vmatprep.mubr.bf16.mxu0 0
      %1497 = vmatmul.mubr.bf16.gmra.mrb[0].mxu0 %v1198
      %v1498 = vpop.f32.mrb[0].mxu0
      %v1499 = vadd.f32 0.0, %v1498
      %v1500 = vpop.f32.mrb[0].mxu0
      %v1501 = vpop.f32.mrb[0].mxu0
      %v1502 = vadd.f32 0.0, %v1501
      %v1503 = vpop.f32.mrb[0].mxu0
      %1504 = vmatprep.mubr.bf16.mxu0 0
      %1505 = vmatmul.mubr.bf16.gmra.mrb[0].mxu0 %v1199
      %v1506 = vpop.f32.mrb[0].mxu0
      %v1507 = vadd.f32 0.0, %v1506
      %v1508 = vpop.f32.mrb[0].mxu0
      %v1509 = vpop.f32.mrb[0].mxu0
      %v1510 = vadd.f32 0.0, %v1509
      %v1511 = vpop.f32.mrb[0].mxu0
      %1512 = vmatprep.mubr.bf16.mxu0 0
      %1513 = vmatmul.mubr.bf16.gmra.mrb[0].mxu0 %v1200
      %v1514 = vpop.f32.mrb[0].mxu0
      %v1515 = vadd.f32 0.0, %v1514
      %v1516 = vpop.f32.mrb[0].mxu0
      %v1517 = vpop.f32.mrb[0].mxu0
      %v1518 = vadd.f32 0.0, %v1517
      %v1519 = vpop.f32.mrb[0].mxu0
      %1520 = vmatprep.mubr.bf16.mxu0 0
      %1521 = vmatmul.mubr.bf16.gmra.mrb[0].mxu0 %v1201
      %v1522 = vpop.f32.mrb[0].mxu0
      %v1523 = vadd.f32 0.0, %v1522
      %v1524 = vpop.f32.mrb[0].mxu0
      %v1525 = vpop.f32.mrb[0].mxu0
      %v1526 = vadd.f32 0.0, %v1525
      %v1527 = vpop.f32.mrb[0].mxu0
      %1528 = vmatprep.mubr.bf16.mxu0 0
      %1529 = vmatmul.mubr.bf16.gmra.mrb[0].mxu0 %v1202
      %v1530 = vpop.f32.mrb[0].mxu0
      %v1531 = vadd.f32 0.0, %v1530
      %v1532 = vpop.f32.mrb[0].mxu0
      %v1533 = vpop.f32.mrb[0].mxu0
      %v1534 = vadd.f32 0.0, %v1533
      %v1535 = vpop.f32.mrb[0].mxu0
      %1536 = vmatprep.mubr.bf16.mxu0 0
      %1537 = vmatmul.mubr.bf16.gmra.mrb[0].mxu0 %v1203
      %v1538 = vpop.f32.mrb[0].mxu0
      %v1539 = vadd.f32 0.0, %v1538
      %v1540 = vpop.f32.mrb[0].mxu0
      %v1541 = vpop.f32.mrb[0].mxu0
      %v1542 = vadd.f32 0.0, %v1541
      %v1543 = vpop.f32.mrb[0].mxu0
      %1544 = vmatprep.mubr.bf16.mxu0 0
      %1545 = vmatmul.mubr.bf16.gmra.mrb[0].mxu0 %v1204
      %v1546 = vpop.f32.mrb[0].mxu0
      %v1547 = vadd.f32 0.0, %v1546
      %v1548 = vpop.f32.mrb[0].mxu0
      %v1549 = vpop.f32.mrb[0].mxu0
      %v1550 = vadd.f32 0.0, %v1549
      %v1551 = vpop.f32.mrb[0].mxu0
      %1552 = vdwg.mxu0
      %p1553 = scmp.gt.s32.totalorder %s619, 1
      %s1554 = scalar_select %p1553, 1, 0
      %v1555 = vstv %s1554
      %vm1556 = vcmp.eq.s32.totalorder %v1555, 1
      %v1557 = vsel %vm1556, %v1491, -1e+30
      %v1558 = vsel %vm1556, %v1494, -1e+30
      %v1559 = vsel %vm1556, %v1499, -1e+30
      %v1560 = vsel %vm1556, %v1502, -1e+30
      %v1561 = vsel %vm1556, %v1507, -1e+30
      %v1562 = vsel %vm1556, %v1510, -1e+30
      %v1563 = vsel %vm1556, %v1515, -1e+30
      %v1564 = vsel %vm1556, %v1518, -1e+30
      %v1565 = vsel %vm1556, %v1523, -1e+30
      %v1566 = vsel %vm1556, %v1526, -1e+30
      %v1567 = vsel %vm1556, %v1531, -1e+30
      %v1568 = vsel %vm1556, %v1534, -1e+30
      %v1569 = vsel %vm1556, %v1539, -1e+30
      %v1570 = vsel %vm1556, %v1542, -1e+30
      %v1571 = vsel %vm1556, %v1547, -1e+30
      %v1572 = vsel %vm1556, %v1550, -1e+30
      %s1573 = scalar_lea.vmem %s601, 256
      %v1574 = vld [vmem:[%s1573] sm:$0xff]
      %v1575 = vld [vmem:[%s1573 + $0x8] sm:$0xff]
      %v1576 = vld [vmem:[%s1573 + $0x10] sm:$0xff]
      %v1577 = vld [vmem:[%s1573 + $0x18] sm:$0xff]
      %v1578 = vld [vmem:[%s1573 + $0x20] sm:$0xff]
      %v1579 = vld [vmem:[%s1573 + $0x28] sm:$0xff]
      %v1580 = vld [vmem:[%s1573 + $0x30] sm:$0xff]
      %v1581 = vld [vmem:[%s1573 + $0x38] sm:$0xff]
      %v1582 = vld [vmem:[%s1573 + $0x40] sm:$0xff]
      %v1583 = vld [vmem:[%s1573 + $0x48] sm:$0xff]
      %v1584 = vld [vmem:[%s1573 + $0x50] sm:$0xff]
      %v1585 = vld [vmem:[%s1573 + $0x58] sm:$0xff]
      %v1586 = vld [vmem:[%s1573 + $0x60] sm:$0xff]
      %v1587 = vld [vmem:[%s1573 + $0x68] sm:$0xff]
      %v1588 = vld [vmem:[%s1573 + $0x70] sm:$0xff]
      %v1589 = vld [vmem:[%s1573 + $0x78] sm:$0xff]
      %v1590 = vpack.c.bf16 %v1575, %v1574
      %v1591 = vpack.c.bf16 %v1577, %v1576
      %v1592 = vpack.c.bf16 %v1579, %v1578
      %v1593 = vpack.c.bf16 %v1581, %v1580
      %v1594 = vpack.c.bf16 %v1583, %v1582
      %v1595 = vpack.c.bf16 %v1585, %v1584
      %v1596 = vpack.c.bf16 %v1587, %v1586
      %v1597 = vpack.c.bf16 %v1589, %v1588
      %1598 = vmatprep.subr.bf16.mxu0 0
      %1599 = vmatpush1.bf16.msra.mxu0 %v1590
      %1600 = vmatprep.subr.bf16.mxu0 0
      %1601 = vmatpush1.bf16.msra.mxu0 %v1591
      %1602 = vmatprep.subr.bf16.mxu0 0
      %1603 = vmatpush1.bf16.msra.mxu0 %v1592
      %1604 = vmatprep.subr.bf16.mxu0 0
      %1605 = vmatpush1.bf16.msra.mxu0 %v1593
      %1606 = vmatprep.subr.bf16.mxu0 0
      %1607 = vmatpush1.bf16.msra.mxu0 %v1594
      %1608 = vmatprep.subr.bf16.mxu0 0
      %1609 = vmatpush1.bf16.msra.mxu0 %v1595
      %1610 = vmatprep.subr.bf16.mxu0 0
      %1611 = vmatpush1.bf16.msra.mxu0 %v1596
      %1612 = vmatprep.subr.bf16.mxu0 0
      %1613 = vmatpush1.bf16.msra.mxu0 %v1597
      %1614 = vmatprep.subr.bf16.mxu0 0
      %1615 = vmatpush1.bf16.msra.mxu0 0
      %1616 = vmatprep.subr.bf16.mxu0 0
      %1617 = vmatpush1.bf16.msra.mxu0 0
      %1618 = vmatprep.subr.bf16.mxu0 0
      %1619 = vmatpush1.bf16.msra.mxu0 0
      %1620 = vmatprep.subr.bf16.mxu0 0
      %1621 = vmatpush1.bf16.msra.mxu0 0
      %1622 = vmatprep.subr.bf16.mxu0 0
      %1623 = vmatpush1.bf16.msra.mxu0 0
      %1624 = vmatprep.subr.bf16.mxu0 0
      %1625 = vmatpush1.bf16.msra.mxu0 0
      %1626 = vmatprep.subr.bf16.mxu0 0
      %1627 = vmatpush1.bf16.msra.mxu0 0
      %1628 = vmatprep.subr.bf16.mxu0 0
      %1629 = vmatpush1.bf16.msra.mxu0 0
      %1630 = vmatprep.mubr.bf16.mxu0 0
      %1631 = vmatmul.mubr.bf16.gmra.mrb[0].mxu0 %v948
      %v1632 = vpop.f32.mrb[0].mxu0
      %v1633 = vadd.f32 %v727, %v1632
      %v1634 = vpop.f32.mrb[0].mxu0
      %v1635 = vpop.f32.mrb[0].mxu0
      %v1636 = vadd.f32 %v732, %v1635
      %v1637 = vpop.f32.mrb[0].mxu0
      %1638 = vmatprep.mubr.bf16.mxu0 0
      %1639 = vmatmul.mubr.bf16.gmra.mrb[0].mxu0 %v949
      %v1640 = vpop.f32.mrb[0].mxu0
      %v1641 = vadd.f32 %v737, %v1640
      %v1642 = vpop.f32.mrb[0].mxu0
      %v1643 = vpop.f32.mrb[0].mxu0
      %v1644 = vadd.f32 %v742, %v1643
      %v1645 = vpop.f32.mrb[0].mxu0
      %1646 = vmatprep.mubr.bf16.mxu0 0
      %1647 = vmatmul.mubr.bf16.gmra.mrb[0].mxu0 %v950
      %v1648 = vpop.f32.mrb[0].mxu0
      %v1649 = vadd.f32 %v747, %v1648
      %v1650 = vpop.f32.mrb[0].mxu0
      %v1651 = vpop.f32.mrb[0].mxu0
      %v1652 = vadd.f32 %v752, %v1651
      %v1653 = vpop.f32.mrb[0].mxu0
      %1654 = vmatprep.mubr.bf16.mxu0 0
      %1655 = vmatmul.mubr.bf16.gmra.mrb[0].mxu0 %v951
      %v1656 = vpop.f32.mrb[0].mxu0
      %v1657 = vadd.f32 %v757, %v1656
      %v1658 = vpop.f32.mrb[0].mxu0
      %v1659 = vpop.f32.mrb[0].mxu0
      %v1660 = vadd.f32 %v762, %v1659
      %v1661 = vpop.f32.mrb[0].mxu0
      %1662 = vmatprep.mubr.bf16.mxu0 0
      %1663 = vmatmul.mubr.bf16.gmra.mrb[0].mxu0 %v952
      %v1664 = vpop.f32.mrb[0].mxu0
      %v1665 = vadd.f32 %v767, %v1664
      %v1666 = vpop.f32.mrb[0].mxu0
      %v1667 = vpop.f32.mrb[0].mxu0
      %v1668 = vadd.f32 %v772, %v1667
      %v1669 = vpop.f32.mrb[0].mxu0
      %1670 = vmatprep.mubr.bf16.mxu0 0
      %1671 = vmatmul.mubr.bf16.gmra.mrb[0].mxu0 %v953
      %v1672 = vpop.f32.mrb[0].mxu0
      %v1673 = vadd.f32 %v777, %v1672
      %v1674 = vpop.f32.mrb[0].mxu0
      %v1675 = vpop.f32.mrb[0].mxu0
      %v1676 = vadd.f32 %v782, %v1675
      %v1677 = vpop.f32.mrb[0].mxu0
      %1678 = vmatprep.mubr.bf16.mxu0 0
      %1679 = vmatmul.mubr.bf16.gmra.mrb[0].mxu0 %v954
      %v1680 = vpop.f32.mrb[0].mxu0
      %v1681 = vadd.f32 %v787, %v1680
      %v1682 = vpop.f32.mrb[0].mxu0
      %v1683 = vpop.f32.mrb[0].mxu0
      %v1684 = vadd.f32 %v792, %v1683
      %v1685 = vpop.f32.mrb[0].mxu0
      %1686 = vmatprep.mubr.bf16.mxu0 0
      %1687 = vmatmul.mubr.bf16.gmra.mrb[0].mxu0 %v955
      %v1688 = vpop.f32.mrb[0].mxu0
      %v1689 = vadd.f32 %v797, %v1688
      %v1690 = vpop.f32.mrb[0].mxu0
      %v1691 = vpop.f32.mrb[0].mxu0
      %v1692 = vadd.f32 %v802, %v1691
      %v1693 = vpop.f32.mrb[0].mxu0
      %1694 = vdwg.mxu0
      %v1695 = vmul.f32 %v1079, %v1633
      %v1696 = vmul.f32 %v1082, %v1636
      %v1697 = vmul.f32 %v1087, %v1641
      %v1698 = vmul.f32 %v1090, %v1644
      %v1699 = vmul.f32 %v1095, %v1649
      %v1700 = vmul.f32 %v1098, %v1652
      %v1701 = vmul.f32 %v1103, %v1657
      %v1702 = vmul.f32 %v1106, %v1660
      %v1703 = vmul.f32 %v1111, %v1665
      %v1704 = vmul.f32 %v1114, %v1668
      %v1705 = vmul.f32 %v1119, %v1673
      %v1706 = vmul.f32 %v1122, %v1676
      %v1707 = vmul.f32 %v1127, %v1681
      %v1708 = vmul.f32 %v1130, %v1684
      %v1709 = vmul.f32 %v1135, %v1689
      %v1710 = vmul.f32 %v1138, %v1692
      %v1711 = vpack.c.bf16 %v1696, %v1695
      %v1712 = vpack.c.bf16 %v1698, %v1697
      %v1713 = vpack.c.bf16 %v1700, %v1699
      %v1714 = vpack.c.bf16 %v1702, %v1701
      %v1715 = vpack.c.bf16 %v1704, %v1703
      %v1716 = vpack.c.bf16 %v1706, %v1705
      %v1717 = vpack.c.bf16 %v1708, %v1707
      %v1718 = vpack.c.bf16 %v1710, %v1709
      %1719 = vmatprep.subr.bf16.mxu0 0
      %1720 = vmatpush1.bf16.msra.mxu0 %v1711
      %1721 = vmatprep.subr.bf16.mxu0 0
      %1722 = vmatpush1.bf16.msra.mxu0 %v1712
      %1723 = vmatprep.subr.bf16.mxu0 0
      %1724 = vmatpush1.bf16.msra.mxu0 %v1713
      %1725 = vmatprep.subr.bf16.mxu0 0
      %1726 = vmatpush1.bf16.msra.mxu0 %v1714
      %1727 = vmatprep.subr.bf16.mxu0 0
      %1728 = vmatpush1.bf16.msra.mxu0 %v1715
      %1729 = vmatprep.subr.bf16.mxu0 0
      %1730 = vmatpush1.bf16.msra.mxu0 %v1716
      %1731 = vmatprep.subr.bf16.mxu0 0
      %1732 = vmatpush1.bf16.msra.mxu0 %v1717
      %1733 = vmatprep.subr.bf16.mxu0 0
      %1734 = vmatpush1.bf16.msra.mxu0 %v1718
      %1735 = vmatprep.subr.bf16.mxu0 0
      %1736 = vmatpush1.bf16.msra.mxu0 0
      %1737 = vmatprep.subr.bf16.mxu0 0
      %1738 = vmatpush1.bf16.msra.mxu0 0
      %1739 = vmatprep.subr.bf16.mxu0 0
      %1740 = vmatpush1.bf16.msra.mxu0 0
      %1741 = vmatprep.subr.bf16.mxu0 0
      %1742 = vmatpush1.bf16.msra.mxu0 0
      %1743 = vmatprep.subr.bf16.mxu0 0
      %1744 = vmatpush1.bf16.msra.mxu0 0
      %1745 = vmatprep.subr.bf16.mxu0 0
      %1746 = vmatpush1.bf16.msra.mxu0 0
      %1747 = vmatprep.subr.bf16.mxu0 0
      %1748 = vmatpush1.bf16.msra.mxu0 0
      %1749 = vmatprep.subr.bf16.mxu0 0
      %1750 = vmatpush1.bf16.msra.mxu0 0
      %1751 = vmatprep.mubr.bf16.mxu0 0
      %1752 = vmatmul.mubr.bf16.gmra.mrb[0].mxu0 %v1197
      %v1753 = vpop.f32.mrb[0].mxu0
      %v1754 = vadd.f32 0.0, %v1753
      %v1755 = vpop.f32.mrb[0].mxu0
      %v1756 = vpop.f32.mrb[0].mxu0
      %v1757 = vadd.f32 0.0, %v1756
      %v1758 = vpop.f32.mrb[0].mxu0
      %1759 = vmatprep.mubr.bf16.mxu0 0
      %1760 = vmatmul.mubr.bf16.gmra.mrb[0].mxu0 %v1198
      %v1761 = vpop.f32.mrb[0].mxu0
      %v1762 = vadd.f32 0.0, %v1761
      %v1763 = vpop.f32.mrb[0].mxu0
      %v1764 = vpop.f32.mrb[0].mxu0
      %v1765 = vadd.f32 0.0, %v1764
      %v1766 = vpop.f32.mrb[0].mxu0
      %1767 = vmatprep.mubr.bf16.mxu0 0
      %1768 = vmatmul.mubr.bf16.gmra.mrb[0].mxu0 %v1199
      %v1769 = vpop.f32.mrb[0].mxu0
      %v1770 = vadd.f32 0.0, %v1769
      %v1771 = vpop.f32.mrb[0].mxu0
      %v1772 = vpop.f32.mrb[0].mxu0
      %v1773 = vadd.f32 0.0, %v1772
      %v1774 = vpop.f32.mrb[0].mxu0
      %1775 = vmatprep.mubr.bf16.mxu0 0
      %1776 = vmatmul.mubr.bf16.gmra.mrb[0].mxu0 %v1200
      %v1777 = vpop.f32.mrb[0].mxu0
      %v1778 = vadd.f32 0.0, %v1777
      %v1779 = vpop.f32.mrb[0].mxu0
      %v1780 = vpop.f32.mrb[0].mxu0
      %v1781 = vadd.f32 0.0, %v1780
      %v1782 = vpop.f32.mrb[0].mxu0
      %1783 = vmatprep.mubr.bf16.mxu0 0
      %1784 = vmatmul.mubr.bf16.gmra.mrb[0].mxu0 %v1201
      %v1785 = vpop.f32.mrb[0].mxu0
      %v1786 = vadd.f32 0.0, %v1785
      %v1787 = vpop.f32.mrb[0].mxu0
      %v1788 = vpop.f32.mrb[0].mxu0
      %v1789 = vadd.f32 0.0, %v1788
      %v1790 = vpop.f32.mrb[0].mxu0
      %1791 = vmatprep.mubr.bf16.mxu0 0
      %1792 = vmatmul.mubr.bf16.gmra.mrb[0].mxu0 %v1202
      %v1793 = vpop.f32.mrb[0].mxu0
      %v1794 = vadd.f32 0.0, %v1793
      %v1795 = vpop.f32.mrb[0].mxu0
      %v1796 = vpop.f32.mrb[0].mxu0
      %v1797 = vadd.f32 0.0, %v1796
      %v1798 = vpop.f32.mrb[0].mxu0
      %1799 = vmatprep.mubr.bf16.mxu0 0
      %1800 = vmatmul.mubr.bf16.gmra.mrb[0].mxu0 %v1203
      %v1801 = vpop.f32.mrb[0].mxu0
      %v1802 = vadd.f32 0.0, %v1801
      %v1803 = vpop.f32.mrb[0].mxu0
      %v1804 = vpop.f32.mrb[0].mxu0
      %v1805 = vadd.f32 0.0, %v1804
      %v1806 = vpop.f32.mrb[0].mxu0
      %1807 = vmatprep.mubr.bf16.mxu0 0
      %1808 = vmatmul.mubr.bf16.gmra.mrb[0].mxu0 %v1204
      %v1809 = vpop.f32.mrb[0].mxu0
      %v1810 = vadd.f32 0.0, %v1809
      %v1811 = vpop.f32.mrb[0].mxu0
      %v1812 = vpop.f32.mrb[0].mxu0
      %v1813 = vadd.f32 0.0, %v1812
      %v1814 = vpop.f32.mrb[0].mxu0
      %1815 = vdwg.mxu0
      %p1816 = scmp.gt.s32.totalorder %s619, 2
      %s1817 = scalar_select %p1816, 1, 0
      %v1818 = vstv %s1817
      %vm1819 = vcmp.eq.s32.totalorder %v1818, 1
      %v1820 = vsel %vm1819, %v1754, -1e+30
      %v1821 = vsel %vm1819, %v1757, -1e+30
      %v1822 = vsel %vm1819, %v1762, -1e+30
      %v1823 = vsel %vm1819, %v1765, -1e+30
      %v1824 = vsel %vm1819, %v1770, -1e+30
      %v1825 = vsel %vm1819, %v1773, -1e+30
      %v1826 = vsel %vm1819, %v1778, -1e+30
      %v1827 = vsel %vm1819, %v1781, -1e+30
      %v1828 = vsel %vm1819, %v1786, -1e+30
      %v1829 = vsel %vm1819, %v1789, -1e+30
      %v1830 = vsel %vm1819, %v1794, -1e+30
      %v1831 = vsel %vm1819, %v1797, -1e+30
      %v1832 = vsel %vm1819, %v1802, -1e+30
      %v1833 = vsel %vm1819, %v1805, -1e+30
      %v1834 = vsel %vm1819, %v1810, -1e+30
      %v1835 = vsel %vm1819, %v1813, -1e+30
      %v1836 = vmax.f32 %v1248, %v1557
      %v1837 = vmax.f32 %v1251, %v1558
      %v1838 = vmax.f32 %v1256, %v1559
      %v1839 = vmax.f32 %v1259, %v1560
      %v1840 = vmax.f32 %v1264, %v1561
      %v1841 = vmax.f32 %v1267, %v1562
      %v1842 = vmax.f32 %v1272, %v1563
      %v1843 = vmax.f32 %v1275, %v1564
      %v1844 = vmax.f32 %v1280, %v1565
      %v1845 = vmax.f32 %v1283, %v1566
      %v1846 = vmax.f32 %v1288, %v1567
      %v1847 = vmax.f32 %v1291, %v1568
      %v1848 = vmax.f32 %v1296, %v1569
      %v1849 = vmax.f32 %v1299, %v1570
      %v1850 = vmax.f32 %v1304, %v1571
      %v1851 = vmax.f32 %v1307, %v1572
      %v1852 = vmax.f32 %v1836, %v1820
      %v1853 = vmax.f32 %v1837, %v1821
      %v1854 = vmax.f32 %v1838, %v1822
      %v1855 = vmax.f32 %v1839, %v1823
      %v1856 = vmax.f32 %v1840, %v1824
      %v1857 = vmax.f32 %v1841, %v1825
      %v1858 = vmax.f32 %v1842, %v1826
      %v1859 = vmax.f32 %v1843, %v1827
      %v1860 = vmax.f32 %v1844, %v1828
      %v1861 = vmax.f32 %v1845, %v1829
      %v1862 = vmax.f32 %v1846, %v1830
      %v1863 = vmax.f32 %v1847, %v1831
      %v1864 = vmax.f32 %v1848, %v1832
      %v1865 = vmax.f32 %v1849, %v1833
      %v1866 = vmax.f32 %v1850, %v1834
      %v1867 = vmax.f32 %v1851, %v1835
      %v1868 = vsub.f32 %v1248, %v1852
      %v1869 = vsub.f32 %v1251, %v1853
      %v1870 = vsub.f32 %v1256, %v1854
      %v1871 = vsub.f32 %v1259, %v1855
      %v1872 = vsub.f32 %v1264, %v1856
      %v1873 = vsub.f32 %v1267, %v1857
      %v1874 = vsub.f32 %v1272, %v1858
      %v1875 = vsub.f32 %v1275, %v1859
      %v1876 = vsub.f32 %v1280, %v1860
      %v1877 = vsub.f32 %v1283, %v1861
      %v1878 = vsub.f32 %v1288, %v1862
      %v1879 = vsub.f32 %v1291, %v1863
      %v1880 = vsub.f32 %v1296, %v1864
      %v1881 = vsub.f32 %v1299, %v1865
      %v1882 = vsub.f32 %v1304, %v1866
      %v1883 = vsub.f32 %v1307, %v1867
      %v1884 = vmul.f32 %v1868, 1.442695
      %v1885 = vpow.pop %v1884
      %v1886 = vmul.f32 %v1869, 1.442695
      %v1887 = vpow.pop %v1886
      %v1888 = vmul.f32 %v1870, 1.442695
      %v1889 = vpow.pop %v1888
      %v1890 = vmul.f32 %v1871, 1.442695
      %v1891 = vpow.pop %v1890
      %v1892 = vmul.f32 %v1872, 1.442695
      %v1893 = vpow.pop %v1892
      %v1894 = vmul.f32 %v1873, 1.442695
      %v1895 = vpow.pop %v1894
      %v1896 = vmul.f32 %v1874, 1.442695
      %v1897 = vpow.pop %v1896
      %v1898 = vmul.f32 %v1875, 1.442695
      %v1899 = vpow.pop %v1898
      %v1900 = vmul.f32 %v1876, 1.442695
      %v1901 = vpow.pop %v1900
      %v1902 = vmul.f32 %v1877, 1.442695
      %v1903 = vpow.pop %v1902
      %v1904 = vmul.f32 %v1878, 1.442695
      %v1905 = vpow.pop %v1904
      %v1906 = vmul.f32 %v1879, 1.442695
      %v1907 = vpow.pop %v1906
      %v1908 = vmul.f32 %v1880, 1.442695
      %v1909 = vpow.pop %v1908
      %v1910 = vmul.f32 %v1881, 1.442695
      %v1911 = vpow.pop %v1910
      %v1912 = vmul.f32 %v1882, 1.442695
      %v1913 = vpow.pop %v1912
      %v1914 = vmul.f32 %v1883, 1.442695
      %v1915 = vpow.pop %v1914
      %v1916 = vsub.f32 %v1557, %v1852
      %v1917 = vsub.f32 %v1558, %v1853
      %v1918 = vsub.f32 %v1559, %v1854
      %v1919 = vsub.f32 %v1560, %v1855
      %v1920 = vsub.f32 %v1561, %v1856
      %v1921 = vsub.f32 %v1562, %v1857
      %v1922 = vsub.f32 %v1563, %v1858
      %v1923 = vsub.f32 %v1564, %v1859
      %v1924 = vsub.f32 %v1565, %v1860
      %v1925 = vsub.f32 %v1566, %v1861
      %v1926 = vsub.f32 %v1567, %v1862
      %v1927 = vsub.f32 %v1568, %v1863
      %v1928 = vsub.f32 %v1569, %v1864
      %v1929 = vsub.f32 %v1570, %v1865
      %v1930 = vsub.f32 %v1571, %v1866
      %v1931 = vsub.f32 %v1572, %v1867
      %v1932 = vmul.f32 %v1916, 1.442695
      %v1933 = vpow.pop %v1932
      %v1934 = vmul.f32 %v1917, 1.442695
      %v1935 = vpow.pop %v1934
      %v1936 = vmul.f32 %v1918, 1.442695
      %v1937 = vpow.pop %v1936
      %v1938 = vmul.f32 %v1919, 1.442695
      %v1939 = vpow.pop %v1938
      %v1940 = vmul.f32 %v1920, 1.442695
      %v1941 = vpow.pop %v1940
      %v1942 = vmul.f32 %v1921, 1.442695
      %v1943 = vpow.pop %v1942
      %v1944 = vmul.f32 %v1922, 1.442695
      %v1945 = vpow.pop %v1944
      %v1946 = vmul.f32 %v1923, 1.442695
      %v1947 = vpow.pop %v1946
      %v1948 = vmul.f32 %v1924, 1.442695
      %v1949 = vpow.pop %v1948
      %v1950 = vmul.f32 %v1925, 1.442695
      %v1951 = vpow.pop %v1950
      %v1952 = vmul.f32 %v1926, 1.442695
      %v1953 = vpow.pop %v1952
      %v1954 = vmul.f32 %v1927, 1.442695
      %v1955 = vpow.pop %v1954
      %v1956 = vmul.f32 %v1928, 1.442695
      %v1957 = vpow.pop %v1956
      %v1958 = vmul.f32 %v1929, 1.442695
      %v1959 = vpow.pop %v1958
      %v1960 = vmul.f32 %v1930, 1.442695
      %v1961 = vpow.pop %v1960
      %v1962 = vmul.f32 %v1931, 1.442695
      %v1963 = vpow.pop %v1962
      %v1964 = vsub.f32 %v1820, %v1852
      %v1965 = vsub.f32 %v1821, %v1853
      %v1966 = vsub.f32 %v1822, %v1854
      %v1967 = vsub.f32 %v1823, %v1855
      %v1968 = vsub.f32 %v1824, %v1856
      %v1969 = vsub.f32 %v1825, %v1857
      %v1970 = vsub.f32 %v1826, %v1858
      %v1971 = vsub.f32 %v1827, %v1859
      %v1972 = vsub.f32 %v1828, %v1860
      %v1973 = vsub.f32 %v1829, %v1861
      %v1974 = vsub.f32 %v1830, %v1862
      %v1975 = vsub.f32 %v1831, %v1863
      %v1976 = vsub.f32 %v1832, %v1864
      %v1977 = vsub.f32 %v1833, %v1865
      %v1978 = vsub.f32 %v1834, %v1866
      %v1979 = vsub.f32 %v1835, %v1867
      %v1980 = vmul.f32 %v1964, 1.442695
      %v1981 = vpow.pop %v1980
      %v1982 = vmul.f32 %v1965, 1.442695
      %v1983 = vpow.pop %v1982
      %v1984 = vmul.f32 %v1966, 1.442695
      %v1985 = vpow.pop %v1984
      %v1986 = vmul.f32 %v1967, 1.442695
      %v1987 = vpow.pop %v1986
      %v1988 = vmul.f32 %v1968, 1.442695
      %v1989 = vpow.pop %v1988
      %v1990 = vmul.f32 %v1969, 1.442695
      %v1991 = vpow.pop %v1990
      %v1992 = vmul.f32 %v1970, 1.442695
      %v1993 = vpow.pop %v1992
      %v1994 = vmul.f32 %v1971, 1.442695
      %v1995 = vpow.pop %v1994
      %v1996 = vmul.f32 %v1972, 1.442695
      %v1997 = vpow.pop %v1996
      %v1998 = vmul.f32 %v1973, 1.442695
      %v1999 = vpow.pop %v1998
      %v2000 = vmul.f32 %v1974, 1.442695
      %v2001 = vpow.pop %v2000
      %v2002 = vmul.f32 %v1975, 1.442695
      %v2003 = vpow.pop %v2002
      %v2004 = vmul.f32 %v1976, 1.442695
      %v2005 = vpow.pop %v2004
      %v2006 = vmul.f32 %v1977, 1.442695
      %v2007 = vpow.pop %v2006
      %v2008 = vmul.f32 %v1978, 1.442695
      %v2009 = vpow.pop %v2008
      %v2010 = vmul.f32 %v1979, 1.442695
      %v2011 = vpow.pop %v2010
      %v2012 = vadd.f32 %v1885, %v1933
      %v2013 = vadd.f32 %v1887, %v1935
      %v2014 = vadd.f32 %v1889, %v1937
      %v2015 = vadd.f32 %v1891, %v1939
      %v2016 = vadd.f32 %v1893, %v1941
      %v2017 = vadd.f32 %v1895, %v1943
      %v2018 = vadd.f32 %v1897, %v1945
      %v2019 = vadd.f32 %v1899, %v1947
      %v2020 = vadd.f32 %v1901, %v1949
      %v2021 = vadd.f32 %v1903, %v1951
      %v2022 = vadd.f32 %v1905, %v1953
      %v2023 = vadd.f32 %v1907, %v1955
      %v2024 = vadd.f32 %v1909, %v1957
      %v2025 = vadd.f32 %v1911, %v1959
      %v2026 = vadd.f32 %v1913, %v1961
      %v2027 = vadd.f32 %v1915, %v1963
      %v2028 = vadd.f32 %v2012, %v1981
      %v2029 = vadd.f32 %v2013, %v1983
      %v2030 = vadd.f32 %v2014, %v1985
      %v2031 = vadd.f32 %v2015, %v1987
      %v2032 = vadd.f32 %v2016, %v1989
      %v2033 = vadd.f32 %v2017, %v1991
      %v2034 = vadd.f32 %v2018, %v1993
      %v2035 = vadd.f32 %v2019, %v1995
      %v2036 = vadd.f32 %v2020, %v1997
      %v2037 = vadd.f32 %v2021, %v1999
      %v2038 = vadd.f32 %v2022, %v2001
      %v2039 = vadd.f32 %v2023, %v2003
      %v2040 = vadd.f32 %v2024, %v2005
      %v2041 = vadd.f32 %v2025, %v2007
      %v2042 = vadd.f32 %v2026, %v2009
      %v2043 = vadd.f32 %v2027, %v2011
      %v2044 = vrcp.pop %v2028
      %v2045 = vrcp.pop %v2029
      %v2046 = vrcp.pop %v2030
      %v2047 = vrcp.pop %v2031
      %v2048 = vrcp.pop %v2032
      %v2049 = vrcp.pop %v2033
      %v2050 = vrcp.pop %v2034
      %v2051 = vrcp.pop %v2035
      %v2052 = vrcp.pop %v2036
      %v2053 = vrcp.pop %v2037
      %v2054 = vrcp.pop %v2038
      %v2055 = vrcp.pop %v2039
      %v2056 = vrcp.pop %v2040
      %v2057 = vrcp.pop %v2041
      %v2058 = vrcp.pop %v2042
      %v2059 = vrcp.pop %v2043
      %v2060 = vld [vmem:[%s5] sm:$0xf]
      %v2061 = vld [vmem:[%s5 + $0x4] sm:$0xf]
      %v2062 = vld [vmem:[%s5 + $0x8] sm:$0xf]
      %v2063 = vld [vmem:[%s5 + $0xc] sm:$0xf]
      %v2064 = vld [vmem:[%s5 + $0x10] sm:$0xf]
      %v2065 = vld [vmem:[%s5 + $0x14] sm:$0xf]
      %v2066 = vld [vmem:[%s5 + $0x18] sm:$0xf]
      %v2067 = vld [vmem:[%s5 + $0x1c] sm:$0xf]
      %v2068 = vld [vmem:[%s5 + $0x20] sm:$0xf]
      %v2069 = vld [vmem:[%s5 + $0x24] sm:$0xf]
      %v2070 = vld [vmem:[%s5 + $0x28] sm:$0xf]
      %v2071 = vld [vmem:[%s5 + $0x2c] sm:$0xf]
      %v2072 = vld [vmem:[%s5 + $0x30] sm:$0xf]
      %v2073 = vld [vmem:[%s5 + $0x34] sm:$0xf]
      %v2074 = vld [vmem:[%s5 + $0x38] sm:$0xf]
      %v2075 = vld [vmem:[%s5 + $0x3c] sm:$0xf]
      %v2076 = vld [vmem:[%s6] sm:$0xff]
      %v2077 = vld [vmem:[%s6 + $0x8] sm:$0xff]
      %v2078 = vld [vmem:[%s6 + $0x10] sm:$0xff]
      %v2079 = vld [vmem:[%s6 + $0x18] sm:$0xff]
      %v2080 = vld [vmem:[%s6 + $0x20] sm:$0xff]
      %v2081 = vld [vmem:[%s6 + $0x28] sm:$0xff]
      %v2082 = vld [vmem:[%s6 + $0x30] sm:$0xff]
      %v2083 = vld [vmem:[%s6 + $0x38] sm:$0xff]
      %v2084 = vld [vmem:[%s6 + $0x40] sm:$0xff]
      %v2085 = vld [vmem:[%s6 + $0x48] sm:$0xff]
      %v2086 = vld [vmem:[%s6 + $0x50] sm:$0xff]
      %v2087 = vld [vmem:[%s6 + $0x58] sm:$0xff]
      %v2088 = vld [vmem:[%s6 + $0x60] sm:$0xff]
      %v2089 = vld [vmem:[%s6 + $0x68] sm:$0xff]
      %v2090 = vld [vmem:[%s6 + $0x70] sm:$0xff]
      %v2091 = vld [vmem:[%s6 + $0x78] sm:$0xff]
      %v2092 = vld [vmem:[%s609] sm:$0xff]
      %v2093 = vld [vmem:[%s609 + $0x8] sm:$0xff]
      %v2094 = vld [vmem:[%s609 + $0x10] sm:$0xff]
      %v2095 = vld [vmem:[%s609 + $0x18] sm:$0xff]
      %v2096 = vld [vmem:[%s609 + $0x20] sm:$0xff]
      %v2097 = vld [vmem:[%s609 + $0x28] sm:$0xff]
      %v2098 = vld [vmem:[%s609 + $0x30] sm:$0xff]
      %v2099 = vld [vmem:[%s609 + $0x38] sm:$0xff]
      %v2100 = vld [vmem:[%s609 + $0x40] sm:$0xff]
      %v2101 = vld [vmem:[%s609 + $0x48] sm:$0xff]
      %v2102 = vld [vmem:[%s609 + $0x50] sm:$0xff]
      %v2103 = vld [vmem:[%s609 + $0x58] sm:$0xff]
      %v2104 = vld [vmem:[%s609 + $0x60] sm:$0xff]
      %v2105 = vld [vmem:[%s609 + $0x68] sm:$0xff]
      %v2106 = vld [vmem:[%s609 + $0x70] sm:$0xff]
      %v2107 = vld [vmem:[%s609 + $0x78] sm:$0xff]
      %v2108 = vpack.c.bf16 %v2093, %v2092
      %v2109 = vpack.c.bf16 %v2095, %v2094
      %v2110 = vpack.c.bf16 %v2097, %v2096
      %v2111 = vpack.c.bf16 %v2099, %v2098
      %v2112 = vpack.c.bf16 %v2101, %v2100
      %v2113 = vpack.c.bf16 %v2103, %v2102
      %v2114 = vpack.c.bf16 %v2105, %v2104
      %v2115 = vpack.c.bf16 %v2107, %v2106
      %2117 = vset.pattern.permute.xlu0 0
      %2118 = vperm.xlu0 %2117, %v2076
      %v2119 = vpop.permute.xlu0 %2118
      %2122 = vset.pattern.permute.xlu0 0
      %2123 = vperm.xlu0 %2122, %v2077
      %v2124 = vpop.permute.xlu0 %2123
      %2127 = vset.pattern.permute.xlu0 0
      %2128 = vperm.xlu0 %2127, %v2078
      %v2129 = vpop.permute.xlu0 %2128
      %2132 = vset.pattern.permute.xlu0 0
      %2133 = vperm.xlu0 %2132, %v2079
      %v2134 = vpop.permute.xlu0 %2133
      %2137 = vset.pattern.permute.xlu0 0
      %2138 = vperm.xlu0 %2137, %v2080
      %v2139 = vpop.permute.xlu0 %2138
      %2142 = vset.pattern.permute.xlu0 0
      %2143 = vperm.xlu0 %2142, %v2081
      %v2144 = vpop.permute.xlu0 %2143
      %2147 = vset.pattern.permute.xlu0 0
      %2148 = vperm.xlu0 %2147, %v2082
      %v2149 = vpop.permute.xlu0 %2148
      %2152 = vset.pattern.permute.xlu0 0
      %2153 = vperm.xlu0 %2152, %v2083
      %v2154 = vpop.permute.xlu0 %2153
      %2157 = vset.pattern.permute.xlu0 0
      %2158 = vperm.xlu0 %2157, %v2084
      %v2159 = vpop.permute.xlu0 %2158
      %2162 = vset.pattern.permute.xlu0 0
      %2163 = vperm.xlu0 %2162, %v2085
      %v2164 = vpop.permute.xlu0 %2163
      %2167 = vset.pattern.permute.xlu0 0
      %2168 = vperm.xlu0 %2167, %v2086
      %v2169 = vpop.permute.xlu0 %2168
      %2172 = vset.pattern.permute.xlu0 0
      %2173 = vperm.xlu0 %2172, %v2087
      %v2174 = vpop.permute.xlu0 %2173
      %2177 = vset.pattern.permute.xlu0 0
      %2178 = vperm.xlu0 %2177, %v2088
      %v2179 = vpop.permute.xlu0 %2178
      %2182 = vset.pattern.permute.xlu0 0
      %2183 = vperm.xlu0 %2182, %v2089
      %v2184 = vpop.permute.xlu0 %2183
      %2187 = vset.pattern.permute.xlu0 0
      %2188 = vperm.xlu0 %2187, %v2090
      %v2189 = vpop.permute.xlu0 %2188
      %2192 = vset.pattern.permute.xlu0 0
      %2193 = vperm.xlu0 %2192, %v2091
      %v2194 = vpop.permute.xlu0 %2193
      %v2212 = vunpack.c.l.b16 %v2060
      %v2213 = vunpack.c.l.b16 %v2061
      %v2214 = vunpack.c.l.b16 %v2062
      %v2215 = vunpack.c.l.b16 %v2063
      %v2216 = vunpack.c.l.b16 %v2064
      %v2217 = vunpack.c.l.b16 %v2065
      %v2218 = vunpack.c.l.b16 %v2066
      %v2219 = vunpack.c.l.b16 %v2067
      %v2220 = vunpack.c.l.b16 %v2068
      %v2221 = vunpack.c.l.b16 %v2069
      %v2222 = vunpack.c.l.b16 %v2070
      %v2223 = vunpack.c.l.b16 %v2071
      %v2224 = vunpack.c.l.b16 %v2072
      %v2225 = vunpack.c.l.b16 %v2073
      %v2226 = vunpack.c.l.b16 %v2074
      %v2227 = vunpack.c.l.b16 %v2075
      %v2228 = vpack.c.b16 %v2213, %v2212
      %v2229 = vpack.c.b16 %v2215, %v2214
      %v2230 = vpack.c.b16 %v2217, %v2216
      %v2231 = vpack.c.b16 %v2219, %v2218
      %v2232 = vpack.c.b16 %v2221, %v2220
      %v2233 = vpack.c.b16 %v2223, %v2222
      %v2234 = vpack.c.b16 %v2225, %v2224
      %v2235 = vpack.c.b16 %v2227, %v2226
      %2244 = vmatprep.subr.bf16.mxu0 0
      %2245 = vmatpush1.bf16.msra.mxu0 %v2108
      %2246 = vmatprep.subr.bf16.mxu0 0
      %2247 = vmatpush1.bf16.msra.mxu0 %v2109
      %2248 = vmatprep.subr.bf16.mxu0 0
      %2249 = vmatpush1.bf16.msra.mxu0 %v2110
      %2250 = vmatprep.subr.bf16.mxu0 0
      %2251 = vmatpush1.bf16.msra.mxu0 %v2111
      %2252 = vmatprep.subr.bf16.mxu0 0
      %2253 = vmatpush1.bf16.msra.mxu0 %v2112
      %2254 = vmatprep.subr.bf16.mxu0 0
      %2255 = vmatpush1.bf16.msra.mxu0 %v2113
      %2256 = vmatprep.subr.bf16.mxu0 0
      %2257 = vmatpush1.bf16.msra.mxu0 %v2114
      %2258 = vmatprep.subr.bf16.mxu0 0
      %2259 = vmatpush1.bf16.msra.mxu0 %v2115
      %2260 = vmatprep.subr.bf16.mxu0 0
      %2261 = vmatpush1.bf16.msra.mxu0 0
      %2262 = vmatprep.subr.bf16.mxu0 0
      %2263 = vmatpush1.bf16.msra.mxu0 0
      %2264 = vmatprep.subr.bf16.mxu0 0
      %2265 = vmatpush1.bf16.msra.mxu0 0
      %2266 = vmatprep.subr.bf16.mxu0 0
      %2267 = vmatpush1.bf16.msra.mxu0 0
      %2268 = vmatprep.subr.bf16.mxu0 0
      %2269 = vmatpush1.bf16.msra.mxu0 0
      %2270 = vmatprep.subr.bf16.mxu0 0
      %2271 = vmatpush1.bf16.msra.mxu0 0
      %2272 = vmatprep.subr.bf16.mxu0 0
      %2273 = vmatpush1.bf16.msra.mxu0 0
      %2274 = vmatprep.subr.bf16.mxu0 0
      %2275 = vmatpush1.bf16.msra.mxu0 0
      %2276 = vmatprep.mubr.bf16.mxu0 0
      %2277 = vmatmul.mubr.bf16.gmra.mrb[0].mxu0 %v2228
      %v2278 = vpop.f32.mrb[0].mxu0
      %v2279 = vadd.f32 %v2119, %v2278
      %v2280 = vpop.f32.mrb[0].mxu0
      %v2281 = vpop.f32.mrb[0].mxu0
      %v2282 = vadd.f32 %v2124, %v2281
      %v2283 = vpop.f32.mrb[0].mxu0
      %2284 = vmatprep.mubr.bf16.mxu0 0
      %2285 = vmatmul.mubr.bf16.gmra.mrb[0].mxu0 %v2229
      %v2286 = vpop.f32.mrb[0].mxu0
      %v2287 = vadd.f32 %v2129, %v2286
      %v2288 = vpop.f32.mrb[0].mxu0
      %v2289 = vpop.f32.mrb[0].mxu0
      %v2290 = vadd.f32 %v2134, %v2289
      %v2291 = vpop.f32.mrb[0].mxu0
      %2292 = vmatprep.mubr.bf16.mxu0 0
      %2293 = vmatmul.mubr.bf16.gmra.mrb[0].mxu0 %v2230
      %v2294 = vpop.f32.mrb[0].mxu0
      %v2295 = vadd.f32 %v2139, %v2294
      %v2296 = vpop.f32.mrb[0].mxu0
      %v2297 = vpop.f32.mrb[0].mxu0
      %v2298 = vadd.f32 %v2144, %v2297
      %v2299 = vpop.f32.mrb[0].mxu0
      %2300 = vmatprep.mubr.bf16.mxu0 0
      %2301 = vmatmul.mubr.bf16.gmra.mrb[0].mxu0 %v2231
      %v2302 = vpop.f32.mrb[0].mxu0
      %v2303 = vadd.f32 %v2149, %v2302
      %v2304 = vpop.f32.mrb[0].mxu0
      %v2305 = vpop.f32.mrb[0].mxu0
      %v2306 = vadd.f32 %v2154, %v2305
      %v2307 = vpop.f32.mrb[0].mxu0
      %2308 = vmatprep.mubr.bf16.mxu0 0
      %2309 = vmatmul.mubr.bf16.gmra.mrb[0].mxu0 %v2232
      %v2310 = vpop.f32.mrb[0].mxu0
      %v2311 = vadd.f32 %v2159, %v2310
      %v2312 = vpop.f32.mrb[0].mxu0
      %v2313 = vpop.f32.mrb[0].mxu0
      %v2314 = vadd.f32 %v2164, %v2313
      %v2315 = vpop.f32.mrb[0].mxu0
      %2316 = vmatprep.mubr.bf16.mxu0 0
      %2317 = vmatmul.mubr.bf16.gmra.mrb[0].mxu0 %v2233
      %v2318 = vpop.f32.mrb[0].mxu0
      %v2319 = vadd.f32 %v2169, %v2318
      %v2320 = vpop.f32.mrb[0].mxu0
      %v2321 = vpop.f32.mrb[0].mxu0
      %v2322 = vadd.f32 %v2174, %v2321
      %v2323 = vpop.f32.mrb[0].mxu0
      %2324 = vmatprep.mubr.bf16.mxu0 0
      %2325 = vmatmul.mubr.bf16.gmra.mrb[0].mxu0 %v2234
      %v2326 = vpop.f32.mrb[0].mxu0
      %v2327 = vadd.f32 %v2179, %v2326
      %v2328 = vpop.f32.mrb[0].mxu0
      %v2329 = vpop.f32.mrb[0].mxu0
      %v2330 = vadd.f32 %v2184, %v2329
      %v2331 = vpop.f32.mrb[0].mxu0
      %2332 = vmatprep.mubr.bf16.mxu0 0
      %2333 = vmatmul.mubr.bf16.gmra.mrb[0].mxu0 %v2235
      %v2334 = vpop.f32.mrb[0].mxu0
      %v2335 = vadd.f32 %v2189, %v2334
      %v2336 = vpop.f32.mrb[0].mxu0
      %v2337 = vpop.f32.mrb[0].mxu0
      %v2338 = vadd.f32 %v2194, %v2337
      %v2339 = vpop.f32.mrb[0].mxu0
      %2340 = vdwg.mxu0
      %v2341 = vmul.f32 %v1885, %v2279
      %v2342 = vmul.f32 %v1887, %v2282
      %v2343 = vmul.f32 %v1889, %v2287
      %v2344 = vmul.f32 %v1891, %v2290
      %v2345 = vmul.f32 %v1893, %v2295
      %v2346 = vmul.f32 %v1895, %v2298
      %v2347 = vmul.f32 %v1897, %v2303
      %v2348 = vmul.f32 %v1899, %v2306
      %v2349 = vmul.f32 %v1901, %v2311
      %v2350 = vmul.f32 %v1903, %v2314
      %v2351 = vmul.f32 %v1905, %v2319
      %v2352 = vmul.f32 %v1907, %v2322
      %v2353 = vmul.f32 %v1909, %v2327
      %v2354 = vmul.f32 %v1911, %v2330
      %v2355 = vmul.f32 %v1913, %v2335
      %v2356 = vmul.f32 %v1915, %v2338
      %s2357 = scalar_lea.vmem %s609, 128
      %v2358 = vld [vmem:[%s2357] sm:$0xff]
      %v2359 = vld [vmem:[%s2357 + $0x8] sm:$0xff]
      %v2360 = vld [vmem:[%s2357 + $0x10] sm:$0xff]
      %v2361 = vld [vmem:[%s2357 + $0x18] sm:$0xff]
      %v2362 = vld [vmem:[%s2357 + $0x20] sm:$0xff]
      %v2363 = vld [vmem:[%s2357 + $0x28] sm:$0xff]
      %v2364 = vld [vmem:[%s2357 + $0x30] sm:$0xff]
      %v2365 = vld [vmem:[%s2357 + $0x38] sm:$0xff]
      %v2366 = vld [vmem:[%s2357 + $0x40] sm:$0xff]
      %v2367 = vld [vmem:[%s2357 + $0x48] sm:$0xff]
      %v2368 = vld [vmem:[%s2357 + $0x50] sm:$0xff]
      %v2369 = vld [vmem:[%s2357 + $0x58] sm:$0xff]
      %v2370 = vld [vmem:[%s2357 + $0x60] sm:$0xff]
      %v2371 = vld [vmem:[%s2357 + $0x68] sm:$0xff]
      %v2372 = vld [vmem:[%s2357 + $0x70] sm:$0xff]
      %v2373 = vld [vmem:[%s2357 + $0x78] sm:$0xff]
      %v2374 = vpack.c.bf16 %v2359, %v2358
      %v2375 = vpack.c.bf16 %v2361, %v2360
      %v2376 = vpack.c.bf16 %v2363, %v2362
      %v2377 = vpack.c.bf16 %v2365, %v2364
      %v2378 = vpack.c.bf16 %v2367, %v2366
      %v2379 = vpack.c.bf16 %v2369, %v2368
      %v2380 = vpack.c.bf16 %v2371, %v2370
      %v2381 = vpack.c.bf16 %v2373, %v2372
      %2382 = vmatprep.subr.bf16.mxu0 0
      %2383 = vmatpush1.bf16.msra.mxu0 %v2374
      %2384 = vmatprep.subr.bf16.mxu0 0
      %2385 = vmatpush1.bf16.msra.mxu0 %v2375
      %2386 = vmatprep.subr.bf16.mxu0 0
      %2387 = vmatpush1.bf16.msra.mxu0 %v2376
      %2388 = vmatprep.subr.bf16.mxu0 0
      %2389 = vmatpush1.bf16.msra.mxu0 %v2377
      %2390 = vmatprep.subr.bf16.mxu0 0
      %2391 = vmatpush1.bf16.msra.mxu0 %v2378
      %2392 = vmatprep.subr.bf16.mxu0 0
      %2393 = vmatpush1.bf16.msra.mxu0 %v2379
      %2394 = vmatprep.subr.bf16.mxu0 0
      %2395 = vmatpush1.bf16.msra.mxu0 %v2380
      %2396 = vmatprep.subr.bf16.mxu0 0
      %2397 = vmatpush1.bf16.msra.mxu0 %v2381
      %2398 = vmatprep.subr.bf16.mxu0 0
      %2399 = vmatpush1.bf16.msra.mxu0 0
      %2400 = vmatprep.subr.bf16.mxu0 0
      %2401 = vmatpush1.bf16.msra.mxu0 0
      %2402 = vmatprep.subr.bf16.mxu0 0
      %2403 = vmatpush1.bf16.msra.mxu0 0
      %2404 = vmatprep.subr.bf16.mxu0 0
      %2405 = vmatpush1.bf16.msra.mxu0 0
      %2406 = vmatprep.subr.bf16.mxu0 0
      %2407 = vmatpush1.bf16.msra.mxu0 0
      %2408 = vmatprep.subr.bf16.mxu0 0
      %2409 = vmatpush1.bf16.msra.mxu0 0
      %2410 = vmatprep.subr.bf16.mxu0 0
      %2411 = vmatpush1.bf16.msra.mxu0 0
      %2412 = vmatprep.subr.bf16.mxu0 0
      %2413 = vmatpush1.bf16.msra.mxu0 0
      %2414 = vmatprep.mubr.bf16.mxu0 0
      %2415 = vmatmul.mubr.bf16.gmra.mrb[0].mxu0 %v2228
      %v2416 = vpop.f32.mrb[0].mxu0
      %v2417 = vadd.f32 %v2119, %v2416
      %v2418 = vpop.f32.mrb[0].mxu0
      %v2419 = vpop.f32.mrb[0].mxu0
      %v2420 = vadd.f32 %v2124, %v2419
      %v2421 = vpop.f32.mrb[0].mxu0
      %2422 = vmatprep.mubr.bf16.mxu0 0
      %2423 = vmatmul.mubr.bf16.gmra.mrb[0].mxu0 %v2229
      %v2424 = vpop.f32.mrb[0].mxu0
      %v2425 = vadd.f32 %v2129, %v2424
      %v2426 = vpop.f32.mrb[0].mxu0
      %v2427 = vpop.f32.mrb[0].mxu0
      %v2428 = vadd.f32 %v2134, %v2427
      %v2429 = vpop.f32.mrb[0].mxu0
      %2430 = vmatprep.mubr.bf16.mxu0 0
      %2431 = vmatmul.mubr.bf16.gmra.mrb[0].mxu0 %v2230
      %v2432 = vpop.f32.mrb[0].mxu0
      %v2433 = vadd.f32 %v2139, %v2432
      %v2434 = vpop.f32.mrb[0].mxu0
      %v2435 = vpop.f32.mrb[0].mxu0
      %v2436 = vadd.f32 %v2144, %v2435
      %v2437 = vpop.f32.mrb[0].mxu0
      %2438 = vmatprep.mubr.bf16.mxu0 0
      %2439 = vmatmul.mubr.bf16.gmra.mrb[0].mxu0 %v2231
      %v2440 = vpop.f32.mrb[0].mxu0
      %v2441 = vadd.f32 %v2149, %v2440
      %v2442 = vpop.f32.mrb[0].mxu0
      %v2443 = vpop.f32.mrb[0].mxu0
      %v2444 = vadd.f32 %v2154, %v2443
      %v2445 = vpop.f32.mrb[0].mxu0
      %2446 = vmatprep.mubr.bf16.mxu0 0
      %2447 = vmatmul.mubr.bf16.gmra.mrb[0].mxu0 %v2232
      %v2448 = vpop.f32.mrb[0].mxu0
      %v2449 = vadd.f32 %v2159, %v2448
      %v2450 = vpop.f32.mrb[0].mxu0
      %v2451 = vpop.f32.mrb[0].mxu0
      %v2452 = vadd.f32 %v2164, %v2451
      %v2453 = vpop.f32.mrb[0].mxu0
      %2454 = vmatprep.mubr.bf16.mxu0 0
      %2455 = vmatmul.mubr.bf16.gmra.mrb[0].mxu0 %v2233
      %v2456 = vpop.f32.mrb[0].mxu0
      %v2457 = vadd.f32 %v2169, %v2456
      %v2458 = vpop.f32.mrb[0].mxu0
      %v2459 = vpop.f32.mrb[0].mxu0
      %v2460 = vadd.f32 %v2174, %v2459
      %v2461 = vpop.f32.mrb[0].mxu0
      %2462 = vmatprep.mubr.bf16.mxu0 0
      %2463 = vmatmul.mubr.bf16.gmra.mrb[0].mxu0 %v2234
      %v2464 = vpop.f32.mrb[0].mxu0
      %v2465 = vadd.f32 %v2179, %v2464
      %v2466 = vpop.f32.mrb[0].mxu0
      %v2467 = vpop.f32.mrb[0].mxu0
      %v2468 = vadd.f32 %v2184, %v2467
      %v2469 = vpop.f32.mrb[0].mxu0
      %2470 = vmatprep.mubr.bf16.mxu0 0
      %2471 = vmatmul.mubr.bf16.gmra.mrb[0].mxu0 %v2235
      %v2472 = vpop.f32.mrb[0].mxu0
      %v2473 = vadd.f32 %v2189, %v2472
      %v2474 = vpop.f32.mrb[0].mxu0
      %v2475 = vpop.f32.mrb[0].mxu0
      %v2476 = vadd.f32 %v2194, %v2475
      %v2477 = vpop.f32.mrb[0].mxu0
      %2478 = vdwg.mxu0
      %v2479 = vmul.f32 %v1933, %v2417
      %v2480 = vmul.f32 %v1935, %v2420
      %v2481 = vmul.f32 %v1937, %v2425
      %v2482 = vmul.f32 %v1939, %v2428
      %v2483 = vmul.f32 %v1941, %v2433
      %v2484 = vmul.f32 %v1943, %v2436
      %v2485 = vmul.f32 %v1945, %v2441
      %v2486 = vmul.f32 %v1947, %v2444
      %v2487 = vmul.f32 %v1949, %v2449
      %v2488 = vmul.f32 %v1951, %v2452
      %v2489 = vmul.f32 %v1953, %v2457
      %v2490 = vmul.f32 %v1955, %v2460
      %v2491 = vmul.f32 %v1957, %v2465
      %v2492 = vmul.f32 %v1959, %v2468
      %v2493 = vmul.f32 %v1961, %v2473
      %v2494 = vmul.f32 %v1963, %v2476
      %v2495 = vadd.f32 %v2341, %v2479
      %v2496 = vadd.f32 %v2342, %v2480
      %v2497 = vadd.f32 %v2343, %v2481
      %v2498 = vadd.f32 %v2344, %v2482
      %v2499 = vadd.f32 %v2345, %v2483
      %v2500 = vadd.f32 %v2346, %v2484
      %v2501 = vadd.f32 %v2347, %v2485
      %v2502 = vadd.f32 %v2348, %v2486
      %v2503 = vadd.f32 %v2349, %v2487
      %v2504 = vadd.f32 %v2350, %v2488
      %v2505 = vadd.f32 %v2351, %v2489
      %v2506 = vadd.f32 %v2352, %v2490
      %v2507 = vadd.f32 %v2353, %v2491
      %v2508 = vadd.f32 %v2354, %v2492
      %v2509 = vadd.f32 %v2355, %v2493
      %v2510 = vadd.f32 %v2356, %v2494
      %s2511 = scalar_lea.vmem %s609, 256
      %v2512 = vld [vmem:[%s2511] sm:$0xff]
      %v2513 = vld [vmem:[%s2511 + $0x8] sm:$0xff]
      %v2514 = vld [vmem:[%s2511 + $0x10] sm:$0xff]
      %v2515 = vld [vmem:[%s2511 + $0x18] sm:$0xff]
      %v2516 = vld [vmem:[%s2511 + $0x20] sm:$0xff]
      %v2517 = vld [vmem:[%s2511 + $0x28] sm:$0xff]
      %v2518 = vld [vmem:[%s2511 + $0x30] sm:$0xff]
      %v2519 = vld [vmem:[%s2511 + $0x38] sm:$0xff]
      %v2520 = vld [vmem:[%s2511 + $0x40] sm:$0xff]
      %v2521 = vld [vmem:[%s2511 + $0x48] sm:$0xff]
      %v2522 = vld [vmem:[%s2511 + $0x50] sm:$0xff]
      %v2523 = vld [vmem:[%s2511 + $0x58] sm:$0xff]
      %v2524 = vld [vmem:[%s2511 + $0x60] sm:$0xff]
      %v2525 = vld [vmem:[%s2511 + $0x68] sm:$0xff]
      %v2526 = vld [vmem:[%s2511 + $0x70] sm:$0xff]
      %v2527 = vld [vmem:[%s2511 + $0x78] sm:$0xff]
      %v2528 = vpack.c.bf16 %v2513, %v2512
      %v2529 = vpack.c.bf16 %v2515, %v2514
      %v2530 = vpack.c.bf16 %v2517, %v2516
      %v2531 = vpack.c.bf16 %v2519, %v2518
      %v2532 = vpack.c.bf16 %v2521, %v2520
      %v2533 = vpack.c.bf16 %v2523, %v2522
      %v2534 = vpack.c.bf16 %v2525, %v2524
      %v2535 = vpack.c.bf16 %v2527, %v2526
      %2536 = vmatprep.subr.bf16.mxu0 0
      %2537 = vmatpush1.bf16.msra.mxu0 %v2528
      %2538 = vmatprep.subr.bf16.mxu0 0
      %2539 = vmatpush1.bf16.msra.mxu0 %v2529
      %2540 = vmatprep.subr.bf16.mxu0 0
      %2541 = vmatpush1.bf16.msra.mxu0 %v2530
      %2542 = vmatprep.subr.bf16.mxu0 0
      %2543 = vmatpush1.bf16.msra.mxu0 %v2531
      %2544 = vmatprep.subr.bf16.mxu0 0
      %2545 = vmatpush1.bf16.msra.mxu0 %v2532
      %2546 = vmatprep.subr.bf16.mxu0 0
      %2547 = vmatpush1.bf16.msra.mxu0 %v2533
      %2548 = vmatprep.subr.bf16.mxu0 0
      %2549 = vmatpush1.bf16.msra.mxu0 %v2534
      %2550 = vmatprep.subr.bf16.mxu0 0
      %2551 = vmatpush1.bf16.msra.mxu0 %v2535
      %2552 = vmatprep.subr.bf16.mxu0 0
      %2553 = vmatpush1.bf16.msra.mxu0 0
      %2554 = vmatprep.subr.bf16.mxu0 0
      %2555 = vmatpush1.bf16.msra.mxu0 0
      %2556 = vmatprep.subr.bf16.mxu0 0
      %2557 = vmatpush1.bf16.msra.mxu0 0
      %2558 = vmatprep.subr.bf16.mxu0 0
      %2559 = vmatpush1.bf16.msra.mxu0 0
      %2560 = vmatprep.subr.bf16.mxu0 0
      %2561 = vmatpush1.bf16.msra.mxu0 0
      %2562 = vmatprep.subr.bf16.mxu0 0
      %2563 = vmatpush1.bf16.msra.mxu0 0
      %2564 = vmatprep.subr.bf16.mxu0 0
      %2565 = vmatpush1.bf16.msra.mxu0 0
      %2566 = vmatprep.subr.bf16.mxu0 0
      %2567 = vmatpush1.bf16.msra.mxu0 0
      %2568 = vmatprep.mubr.bf16.mxu0 0
      %2569 = vmatmul.mubr.bf16.gmra.mrb[0].mxu0 %v2228
      %v2570 = vpop.f32.mrb[0].mxu0
      %v2571 = vadd.f32 %v2119, %v2570
      %v2572 = vpop.f32.mrb[0].mxu0
      %v2573 = vpop.f32.mrb[0].mxu0
      %v2574 = vadd.f32 %v2124, %v2573
      %v2575 = vpop.f32.mrb[0].mxu0
      %2576 = vmatprep.mubr.bf16.mxu0 0
      %2577 = vmatmul.mubr.bf16.gmra.mrb[0].mxu0 %v2229
      %v2578 = vpop.f32.mrb[0].mxu0
      %v2579 = vadd.f32 %v2129, %v2578
      %v2580 = vpop.f32.mrb[0].mxu0
      %v2581 = vpop.f32.mrb[0].mxu0
      %v2582 = vadd.f32 %v2134, %v2581
      %v2583 = vpop.f32.mrb[0].mxu0
      %2584 = vmatprep.mubr.bf16.mxu0 0
      %2585 = vmatmul.mubr.bf16.gmra.mrb[0].mxu0 %v2230
      %v2586 = vpop.f32.mrb[0].mxu0
      %v2587 = vadd.f32 %v2139, %v2586
      %v2588 = vpop.f32.mrb[0].mxu0
      %v2589 = vpop.f32.mrb[0].mxu0
      %v2590 = vadd.f32 %v2144, %v2589
      %v2591 = vpop.f32.mrb[0].mxu0
      %2592 = vmatprep.mubr.bf16.mxu0 0
      %2593 = vmatmul.mubr.bf16.gmra.mrb[0].mxu0 %v2231
      %v2594 = vpop.f32.mrb[0].mxu0
      %v2595 = vadd.f32 %v2149, %v2594
      %v2596 = vpop.f32.mrb[0].mxu0
      %v2597 = vpop.f32.mrb[0].mxu0
      %v2598 = vadd.f32 %v2154, %v2597
      %v2599 = vpop.f32.mrb[0].mxu0
      %2600 = vmatprep.mubr.bf16.mxu0 0
      %2601 = vmatmul.mubr.bf16.gmra.mrb[0].mxu0 %v2232
      %v2602 = vpop.f32.mrb[0].mxu0
      %v2603 = vadd.f32 %v2159, %v2602
      %v2604 = vpop.f32.mrb[0].mxu0
      %v2605 = vpop.f32.mrb[0].mxu0
      %v2606 = vadd.f32 %v2164, %v2605
      %v2607 = vpop.f32.mrb[0].mxu0
      %2608 = vmatprep.mubr.bf16.mxu0 0
      %2609 = vmatmul.mubr.bf16.gmra.mrb[0].mxu0 %v2233
      %v2610 = vpop.f32.mrb[0].mxu0
      %v2611 = vadd.f32 %v2169, %v2610
      %v2612 = vpop.f32.mrb[0].mxu0
      %v2613 = vpop.f32.mrb[0].mxu0
      %v2614 = vadd.f32 %v2174, %v2613
      %v2615 = vpop.f32.mrb[0].mxu0
      %2616 = vmatprep.mubr.bf16.mxu0 0
      %2617 = vmatmul.mubr.bf16.gmra.mrb[0].mxu0 %v2234
      %v2618 = vpop.f32.mrb[0].mxu0
      %v2619 = vadd.f32 %v2179, %v2618
      %v2620 = vpop.f32.mrb[0].mxu0
      %v2621 = vpop.f32.mrb[0].mxu0
      %v2622 = vadd.f32 %v2184, %v2621
      %v2623 = vpop.f32.mrb[0].mxu0
      %2624 = vmatprep.mubr.bf16.mxu0 0
      %2625 = vmatmul.mubr.bf16.gmra.mrb[0].mxu0 %v2235
      %v2626 = vpop.f32.mrb[0].mxu0
      %v2627 = vadd.f32 %v2189, %v2626
      %v2628 = vpop.f32.mrb[0].mxu0
      %v2629 = vpop.f32.mrb[0].mxu0
      %v2630 = vadd.f32 %v2194, %v2629
      %v2631 = vpop.f32.mrb[0].mxu0
      %2632 = vdwg.mxu0
      %v2633 = vmul.f32 %v1981, %v2571
      %v2634 = vmul.f32 %v1983, %v2574
      %v2635 = vmul.f32 %v1985, %v2579
      %v2636 = vmul.f32 %v1987, %v2582
      %v2637 = vmul.f32 %v1989, %v2587
      %v2638 = vmul.f32 %v1991, %v2590
      %v2639 = vmul.f32 %v1993, %v2595
      %v2640 = vmul.f32 %v1995, %v2598
      %v2641 = vmul.f32 %v1997, %v2603
      %v2642 = vmul.f32 %v1999, %v2606
      %v2643 = vmul.f32 %v2001, %v2611
      %v2644 = vmul.f32 %v2003, %v2614
      %v2645 = vmul.f32 %v2005, %v2619
      %v2646 = vmul.f32 %v2007, %v2622
      %v2647 = vmul.f32 %v2009, %v2627
      %v2648 = vmul.f32 %v2011, %v2630
      %v2649 = vadd.f32 %v2495, %v2633
      %v2650 = vadd.f32 %v2496, %v2634
      %v2651 = vadd.f32 %v2497, %v2635
      %v2652 = vadd.f32 %v2498, %v2636
      %v2653 = vadd.f32 %v2499, %v2637
      %v2654 = vadd.f32 %v2500, %v2638
      %v2655 = vadd.f32 %v2501, %v2639
      %v2656 = vadd.f32 %v2502, %v2640
      %v2657 = vadd.f32 %v2503, %v2641
      %v2658 = vadd.f32 %v2504, %v2642
      %v2659 = vadd.f32 %v2505, %v2643
      %v2660 = vadd.f32 %v2506, %v2644
      %v2661 = vadd.f32 %v2507, %v2645
      %v2662 = vadd.f32 %v2508, %v2646
      %v2663 = vadd.f32 %v2509, %v2647
      %v2664 = vadd.f32 %v2510, %v2648
      %v2665 = vmul.f32 %v2649, %v2044
      %v2666 = vmul.f32 %v2650, %v2045
      %v2667 = vmul.f32 %v2651, %v2046
      %v2668 = vmul.f32 %v2652, %v2047
      %v2669 = vmul.f32 %v2653, %v2048
      %v2670 = vmul.f32 %v2654, %v2049
      %v2671 = vmul.f32 %v2655, %v2050
      %v2672 = vmul.f32 %v2656, %v2051
      %v2673 = vmul.f32 %v2657, %v2052
      %v2674 = vmul.f32 %v2658, %v2053
      %v2675 = vmul.f32 %v2659, %v2054
      %v2676 = vmul.f32 %v2660, %v2055
      %v2677 = vmul.f32 %v2661, %v2056
      %v2678 = vmul.f32 %v2662, %v2057
      %v2679 = vmul.f32 %v2663, %v2058
      %v2680 = vmul.f32 %v2664, %v2059
      %v2681 = vld [vmem:[%s7] sm:$0xf]
      %v2682 = vld [vmem:[%s7 + $0x4] sm:$0xf]
      %v2683 = vld [vmem:[%s7 + $0x8] sm:$0xf]
      %v2684 = vld [vmem:[%s7 + $0xc] sm:$0xf]
      %v2685 = vld [vmem:[%s7 + $0x10] sm:$0xf]
      %v2686 = vld [vmem:[%s7 + $0x14] sm:$0xf]
      %v2687 = vld [vmem:[%s7 + $0x18] sm:$0xf]
      %v2688 = vld [vmem:[%s7 + $0x1c] sm:$0xf]
      %v2689 = vld [vmem:[%s7 + $0x20] sm:$0xf]
      %v2690 = vld [vmem:[%s7 + $0x24] sm:$0xf]
      %v2691 = vld [vmem:[%s7 + $0x28] sm:$0xf]
      %v2692 = vld [vmem:[%s7 + $0x2c] sm:$0xf]
      %v2693 = vld [vmem:[%s7 + $0x30] sm:$0xf]
      %v2694 = vld [vmem:[%s7 + $0x34] sm:$0xf]
      %v2695 = vld [vmem:[%s7 + $0x38] sm:$0xf]
      %v2696 = vld [vmem:[%s7 + $0x3c] sm:$0xf]
      %v2697 = vpack.c.bf16 %v2666, %v2665
      %v2698 = vpack.c.bf16 %v2668, %v2667
      %v2699 = vpack.c.bf16 %v2670, %v2669
      %v2700 = vpack.c.bf16 %v2672, %v2671
      %v2701 = vpack.c.bf16 %v2674, %v2673
      %v2702 = vpack.c.bf16 %v2676, %v2675
      %v2703 = vpack.c.bf16 %v2678, %v2677
      %v2704 = vpack.c.bf16 %v2680, %v2679
      %v2705 = vld [vmem:[%s8] sm:$0xff]
      %v2706 = vld [vmem:[%s8 + $0x8] sm:$0xff]
      %v2707 = vld [vmem:[%s8 + $0x10] sm:$0xff]
      %v2708 = vld [vmem:[%s8 + $0x18] sm:$0xff]
      %v2709 = vld [vmem:[%s8 + $0x20] sm:$0xff]
      %v2710 = vld [vmem:[%s8 + $0x28] sm:$0xff]
      %v2711 = vld [vmem:[%s8 + $0x30] sm:$0xff]
      %v2712 = vld [vmem:[%s8 + $0x38] sm:$0xff]
      %v2713 = vld [vmem:[%s8 + $0x40] sm:$0xff]
      %v2714 = vld [vmem:[%s8 + $0x48] sm:$0xff]
      %v2715 = vld [vmem:[%s8 + $0x50] sm:$0xff]
      %v2716 = vld [vmem:[%s8 + $0x58] sm:$0xff]
      %v2717 = vld [vmem:[%s8 + $0x60] sm:$0xff]
      %v2718 = vld [vmem:[%s8 + $0x68] sm:$0xff]
      %v2719 = vld [vmem:[%s8 + $0x70] sm:$0xff]
      %v2720 = vld [vmem:[%s8 + $0x78] sm:$0xff]
      %2722 = vset.pattern.permute.xlu0 0
      %2723 = vperm.xlu0 %2722, %v2705
      %v2724 = vpop.permute.xlu0 %2723
      %2727 = vset.pattern.permute.xlu0 0
      %2728 = vperm.xlu0 %2727, %v2706
      %v2729 = vpop.permute.xlu0 %2728
      %2732 = vset.pattern.permute.xlu0 0
      %2733 = vperm.xlu0 %2732, %v2707
      %v2734 = vpop.permute.xlu0 %2733
      %2737 = vset.pattern.permute.xlu0 0
      %2738 = vperm.xlu0 %2737, %v2708
      %v2739 = vpop.permute.xlu0 %2738
      %2742 = vset.pattern.permute.xlu0 0
      %2743 = vperm.xlu0 %2742, %v2709
      %v2744 = vpop.permute.xlu0 %2743
      %2747 = vset.pattern.permute.xlu0 0
      %2748 = vperm.xlu0 %2747, %v2710
      %v2749 = vpop.permute.xlu0 %2748
      %2752 = vset.pattern.permute.xlu0 0
      %2753 = vperm.xlu0 %2752, %v2711
      %v2754 = vpop.permute.xlu0 %2753
      %2757 = vset.pattern.permute.xlu0 0
      %2758 = vperm.xlu0 %2757, %v2712
      %v2759 = vpop.permute.xlu0 %2758
      %2762 = vset.pattern.permute.xlu0 0
      %2763 = vperm.xlu0 %2762, %v2713
      %v2764 = vpop.permute.xlu0 %2763
      %2767 = vset.pattern.permute.xlu0 0
      %2768 = vperm.xlu0 %2767, %v2714
      %v2769 = vpop.permute.xlu0 %2768
      %2772 = vset.pattern.permute.xlu0 0
      %2773 = vperm.xlu0 %2772, %v2715
      %v2774 = vpop.permute.xlu0 %2773
      %2777 = vset.pattern.permute.xlu0 0
      %2778 = vperm.xlu0 %2777, %v2716
      %v2779 = vpop.permute.xlu0 %2778
      %2782 = vset.pattern.permute.xlu0 0
      %2783 = vperm.xlu0 %2782, %v2717
      %v2784 = vpop.permute.xlu0 %2783
      %2787 = vset.pattern.permute.xlu0 0
      %2788 = vperm.xlu0 %2787, %v2718
      %v2789 = vpop.permute.xlu0 %2788
      %2792 = vset.pattern.permute.xlu0 0
      %2793 = vperm.xlu0 %2792, %v2719
      %v2794 = vpop.permute.xlu0 %2793
      %2797 = vset.pattern.permute.xlu0 0
      %2798 = vperm.xlu0 %2797, %v2720
      %v2799 = vpop.permute.xlu0 %2798
      %v2817 = vunpack.c.l.b16 %v2681
      %v2818 = vunpack.c.l.b16 %v2682
      %v2819 = vunpack.c.l.b16 %v2683
      %v2820 = vunpack.c.l.b16 %v2684
      %v2821 = vunpack.c.l.b16 %v2685
      %v2822 = vunpack.c.l.b16 %v2686
      %v2823 = vunpack.c.l.b16 %v2687
      %v2824 = vunpack.c.l.b16 %v2688
      %v2825 = vunpack.c.l.b16 %v2689
      %v2826 = vunpack.c.l.b16 %v2690
      %v2827 = vunpack.c.l.b16 %v2691
      %v2828 = vunpack.c.l.b16 %v2692
      %v2829 = vunpack.c.l.b16 %v2693
      %v2830 = vunpack.c.l.b16 %v2694
      %v2831 = vunpack.c.l.b16 %v2695
      %v2832 = vunpack.c.l.b16 %v2696
      %v2833 = vpack.c.b16 %v2818, %v2817
      %v2834 = vpack.c.b16 %v2820, %v2819
      %v2835 = vpack.c.b16 %v2822, %v2821
      %v2836 = vpack.c.b16 %v2824, %v2823
      %v2837 = vpack.c.b16 %v2826, %v2825
      %v2838 = vpack.c.b16 %v2828, %v2827
      %v2839 = vpack.c.b16 %v2830, %v2829
      %v2840 = vpack.c.b16 %v2832, %v2831
      %2849 = vmatprep.subr.bf16.mxu0 0
      %2850 = vmatpush1.bf16.msra.mxu0 %v2697
      %2851 = vmatprep.subr.bf16.mxu0 0
      %2852 = vmatpush1.bf16.msra.mxu0 %v2698
      %2853 = vmatprep.subr.bf16.mxu0 0
      %2854 = vmatpush1.bf16.msra.mxu0 %v2699
      %2855 = vmatprep.subr.bf16.mxu0 0
      %2856 = vmatpush1.bf16.msra.mxu0 %v2700
      %2857 = vmatprep.subr.bf16.mxu0 0
      %2858 = vmatpush1.bf16.msra.mxu0 %v2701
      %2859 = vmatprep.subr.bf16.mxu0 0
      %2860 = vmatpush1.bf16.msra.mxu0 %v2702
      %2861 = vmatprep.subr.bf16.mxu0 0
      %2862 = vmatpush1.bf16.msra.mxu0 %v2703
      %2863 = vmatprep.subr.bf16.mxu0 0
      %2864 = vmatpush1.bf16.msra.mxu0 %v2704
      %2865 = vmatprep.subr.bf16.mxu0 0
      %2866 = vmatpush1.bf16.msra.mxu0 0
      %2867 = vmatprep.subr.bf16.mxu0 0
      %2868 = vmatpush1.bf16.msra.mxu0 0
      %2869 = vmatprep.subr.bf16.mxu0 0
      %2870 = vmatpush1.bf16.msra.mxu0 0
      %2871 = vmatprep.subr.bf16.mxu0 0
      %2872 = vmatpush1.bf16.msra.mxu0 0
      %2873 = vmatprep.subr.bf16.mxu0 0
      %2874 = vmatpush1.bf16.msra.mxu0 0
      %2875 = vmatprep.subr.bf16.mxu0 0
      %2876 = vmatpush1.bf16.msra.mxu0 0
      %2877 = vmatprep.subr.bf16.mxu0 0
      %2878 = vmatpush1.bf16.msra.mxu0 0
      %2879 = vmatprep.subr.bf16.mxu0 0
      %2880 = vmatpush1.bf16.msra.mxu0 0
      %2881 = vmatprep.mubr.bf16.mxu0 0
      %2882 = vmatmul.mubr.bf16.gmra.mrb[0].mxu0 %v2833
      %v2883 = vpop.f32.mrb[0].mxu0
      %v2884 = vadd.f32 %v2724, %v2883
      %v2885 = vpop.f32.mrb[0].mxu0
      %v2886 = vpop.f32.mrb[0].mxu0
      %v2887 = vadd.f32 %v2729, %v2886
      %v2888 = vpop.f32.mrb[0].mxu0
      %2889 = vmatprep.mubr.bf16.mxu0 0
      %2890 = vmatmul.mubr.bf16.gmra.mrb[0].mxu0 %v2834
      %v2891 = vpop.f32.mrb[0].mxu0
      %v2892 = vadd.f32 %v2734, %v2891
      %v2893 = vpop.f32.mrb[0].mxu0
      %v2894 = vpop.f32.mrb[0].mxu0
      %v2895 = vadd.f32 %v2739, %v2894
      %v2896 = vpop.f32.mrb[0].mxu0
      %2897 = vmatprep.mubr.bf16.mxu0 0
      %2898 = vmatmul.mubr.bf16.gmra.mrb[0].mxu0 %v2835
      %v2899 = vpop.f32.mrb[0].mxu0
      %v2900 = vadd.f32 %v2744, %v2899
      %v2901 = vpop.f32.mrb[0].mxu0
      %v2902 = vpop.f32.mrb[0].mxu0
      %v2903 = vadd.f32 %v2749, %v2902
      %v2904 = vpop.f32.mrb[0].mxu0
      %2905 = vmatprep.mubr.bf16.mxu0 0
      %2906 = vmatmul.mubr.bf16.gmra.mrb[0].mxu0 %v2836
      %v2907 = vpop.f32.mrb[0].mxu0
      %v2908 = vadd.f32 %v2754, %v2907
      %v2909 = vpop.f32.mrb[0].mxu0
      %v2910 = vpop.f32.mrb[0].mxu0
      %v2911 = vadd.f32 %v2759, %v2910
      %v2912 = vpop.f32.mrb[0].mxu0
      %2913 = vmatprep.mubr.bf16.mxu0 0
      %2914 = vmatmul.mubr.bf16.gmra.mrb[0].mxu0 %v2837
      %v2915 = vpop.f32.mrb[0].mxu0
      %v2916 = vadd.f32 %v2764, %v2915
      %v2917 = vpop.f32.mrb[0].mxu0
      %v2918 = vpop.f32.mrb[0].mxu0
      %v2919 = vadd.f32 %v2769, %v2918
      %v2920 = vpop.f32.mrb[0].mxu0
      %2921 = vmatprep.mubr.bf16.mxu0 0
      %2922 = vmatmul.mubr.bf16.gmra.mrb[0].mxu0 %v2838
      %v2923 = vpop.f32.mrb[0].mxu0
      %v2924 = vadd.f32 %v2774, %v2923
      %v2925 = vpop.f32.mrb[0].mxu0
      %v2926 = vpop.f32.mrb[0].mxu0
      %v2927 = vadd.f32 %v2779, %v2926
      %v2928 = vpop.f32.mrb[0].mxu0
      %2929 = vmatprep.mubr.bf16.mxu0 0
      %2930 = vmatmul.mubr.bf16.gmra.mrb[0].mxu0 %v2839
      %v2931 = vpop.f32.mrb[0].mxu0
      %v2932 = vadd.f32 %v2784, %v2931
      %v2933 = vpop.f32.mrb[0].mxu0
      %v2934 = vpop.f32.mrb[0].mxu0
      %v2935 = vadd.f32 %v2789, %v2934
      %v2936 = vpop.f32.mrb[0].mxu0
      %2937 = vmatprep.mubr.bf16.mxu0 0
      %2938 = vmatmul.mubr.bf16.gmra.mrb[0].mxu0 %v2840
      %v2939 = vpop.f32.mrb[0].mxu0
      %v2940 = vadd.f32 %v2794, %v2939
      %v2941 = vpop.f32.mrb[0].mxu0
      %v2942 = vpop.f32.mrb[0].mxu0
      %v2943 = vadd.f32 %v2799, %v2942
      %v2944 = vpop.f32.mrb[0].mxu0
      %2945 = vdwg.mxu0
      %v2946 = vadd.f32 %v700, %v2884
      %v2947 = vadd.f32 %v701, %v2887
      %v2948 = vadd.f32 %v702, %v2892
      %v2949 = vadd.f32 %v703, %v2895
      %v2950 = vadd.f32 %v704, %v2900
      %v2951 = vadd.f32 %v705, %v2903
      %v2952 = vadd.f32 %v706, %v2908
      %v2953 = vadd.f32 %v707, %v2911
      %v2954 = vadd.f32 %v708, %v2916
      %v2955 = vadd.f32 %v709, %v2919
      %v2956 = vadd.f32 %v710, %v2924
      %v2957 = vadd.f32 %v711, %v2927
      %v2958 = vadd.f32 %v712, %v2932
      %v2959 = vadd.f32 %v713, %v2935
      %v2960 = vadd.f32 %v714, %v2940
      %v2961 = vadd.f32 %v715, %v2943
      %v2962 = vld [vmem:[%s13] sm:$0xff]
      %v2963 = vld [vmem:[%s13 + $0x8] sm:$0xff]
      %v2964 = vld [vmem:[%s13 + $0x10] sm:$0xff]
      %v2965 = vld [vmem:[%s13 + $0x18] sm:$0xff]
      %v2966 = vld [vmem:[%s13 + $0x20] sm:$0xff]
      %v2967 = vld [vmem:[%s13 + $0x28] sm:$0xff]
      %v2968 = vld [vmem:[%s13 + $0x30] sm:$0xff]
      %v2969 = vld [vmem:[%s13 + $0x38] sm:$0xff]
      %v2970 = vld [vmem:[%s13 + $0x40] sm:$0xff]
      %v2971 = vld [vmem:[%s13 + $0x48] sm:$0xff]
      %v2972 = vld [vmem:[%s13 + $0x50] sm:$0xff]
      %v2973 = vld [vmem:[%s13 + $0x58] sm:$0xff]
      %v2974 = vld [vmem:[%s13 + $0x60] sm:$0xff]
      %v2975 = vld [vmem:[%s13 + $0x68] sm:$0xff]
      %v2976 = vld [vmem:[%s13 + $0x70] sm:$0xff]
      %v2977 = vld [vmem:[%s13 + $0x78] sm:$0xff]
      %v2978 = vld [vmem:[%s14] sm:$0xff]
      %v2979 = vld [vmem:[%s14 + $0x8] sm:$0xff]
      %v2980 = vld [vmem:[%s14 + $0x10] sm:$0xff]
      %v2981 = vld [vmem:[%s14 + $0x18] sm:$0xff]
      %v2982 = vld [vmem:[%s14 + $0x20] sm:$0xff]
      %v2983 = vld [vmem:[%s14 + $0x28] sm:$0xff]
      %v2984 = vld [vmem:[%s14 + $0x30] sm:$0xff]
      %v2985 = vld [vmem:[%s14 + $0x38] sm:$0xff]
      %v2986 = vld [vmem:[%s14 + $0x40] sm:$0xff]
      %v2987 = vld [vmem:[%s14 + $0x48] sm:$0xff]
      %v2988 = vld [vmem:[%s14 + $0x50] sm:$0xff]
      %v2989 = vld [vmem:[%s14 + $0x58] sm:$0xff]
      %v2990 = vld [vmem:[%s14 + $0x60] sm:$0xff]
      %v2991 = vld [vmem:[%s14 + $0x68] sm:$0xff]
      %v2992 = vld [vmem:[%s14 + $0x70] sm:$0xff]
      %v2993 = vld [vmem:[%s14 + $0x78] sm:$0xff]
      %vm2994 = vcmask 523264
      %v2995 = vsel %vm2994, %v2946, 0.0
      %v2996 = vsel %vm2994, %v2947, 0.0
      %v2997 = vadd.f32 %v2995, %v2996
      %v2998 = vsel %vm2994, %v2948, 0.0
      %v2999 = vadd.f32 %v2997, %v2998
      %v3000 = vsel %vm2994, %v2949, 0.0
      %v3001 = vadd.f32 %v2999, %v3000
      %v3002 = vsel %vm2994, %v2950, 0.0
      %v3003 = vadd.f32 %v3001, %v3002
      %v3004 = vsel %vm2994, %v2951, 0.0
      %v3005 = vadd.f32 %v3003, %v3004
      %v3006 = vsel %vm2994, %v2952, 0.0
      %v3007 = vadd.f32 %v3005, %v3006
      %v3008 = vsel %vm2994, %v2953, 0.0
      %v3009 = vadd.f32 %v3007, %v3008
      %v3010 = vsel %vm2994, %v2954, 0.0
      %v3011 = vadd.f32 %v3009, %v3010
      %v3012 = vsel %vm2994, %v2955, 0.0
      %v3013 = vadd.f32 %v3011, %v3012
      %v3014 = vsel %vm2994, %v2956, 0.0
      %v3015 = vadd.f32 %v3013, %v3014
      %v3016 = vsel %vm2994, %v2957, 0.0
      %v3017 = vadd.f32 %v3015, %v3016
      %v3018 = vsel %vm2994, %v2958, 0.0
      %v3019 = vadd.f32 %v3017, %v3018
      %v3020 = vsel %vm2994, %v2959, 0.0
      %v3021 = vadd.f32 %v3019, %v3020
      %v3022 = vsel %vm2994, %v2960, 0.0
      %v3023 = vadd.f32 %v3021, %v3022
      %v3024 = vsel %vm2994, %v2961, 0.0
      %v3025 = vadd.f32 %v3023, %v3024
      %v3026 = vrot.slane %v3025, 4
      %v3027 = vadd.f32 %v3025, %v3026
      %v3028 = vrot.slane %v3027, 2
      %v3029 = vadd.f32 %v3027, %v3028
      %v3030 = vrot.slane %v3029, 1
      %v3031 = vadd.f32 %v3029, %v3030
      %v3032 = vrcp.pop 128.0
      %v3033 = vmul.f32 %v3031, %v3032
      %v3034 = vsub.f32 %v2946, %v3033
      %v3035 = vsub.f32 %v2947, %v3033
      %v3036 = vsub.f32 %v2948, %v3033
      %v3037 = vsub.f32 %v2949, %v3033
      %v3038 = vsub.f32 %v2950, %v3033
      %v3039 = vsub.f32 %v2951, %v3033
      %v3040 = vsub.f32 %v2952, %v3033
      %v3041 = vsub.f32 %v2953, %v3033
      %v3042 = vsub.f32 %v2954, %v3033
      %v3043 = vsub.f32 %v2955, %v3033
      %v3044 = vsub.f32 %v2956, %v3033
      %v3045 = vsub.f32 %v2957, %v3033
      %v3046 = vsub.f32 %v2958, %v3033
      %v3047 = vsub.f32 %v2959, %v3033
      %v3048 = vsub.f32 %v2960, %v3033
      %v3049 = vsub.f32 %v2961, %v3033
      %v3050 = vmul.f32 %v3034, %v3034
      %v3051 = vmul.f32 %v3035, %v3035
      %v3052 = vmul.f32 %v3036, %v3036
      %v3053 = vmul.f32 %v3037, %v3037
      %v3054 = vmul.f32 %v3038, %v3038
      %v3055 = vmul.f32 %v3039, %v3039
      %v3056 = vmul.f32 %v3040, %v3040
      %v3057 = vmul.f32 %v3041, %v3041
      %v3058 = vmul.f32 %v3042, %v3042
      %v3059 = vmul.f32 %v3043, %v3043
      %v3060 = vmul.f32 %v3044, %v3044
      %v3061 = vmul.f32 %v3045, %v3045
      %v3062 = vmul.f32 %v3046, %v3046
      %v3063 = vmul.f32 %v3047, %v3047
      %v3064 = vmul.f32 %v3048, %v3048
      %v3065 = vmul.f32 %v3049, %v3049
      %v3066 = vsel %vm2994, %v3050, 0.0
      %v3067 = vsel %vm2994, %v3051, 0.0
      %v3068 = vadd.f32 %v3066, %v3067
      %v3069 = vsel %vm2994, %v3052, 0.0
      %v3070 = vadd.f32 %v3068, %v3069
      %v3071 = vsel %vm2994, %v3053, 0.0
      %v3072 = vadd.f32 %v3070, %v3071
      %v3073 = vsel %vm2994, %v3054, 0.0
      %v3074 = vadd.f32 %v3072, %v3073
      %v3075 = vsel %vm2994, %v3055, 0.0
      %v3076 = vadd.f32 %v3074, %v3075
      %v3077 = vsel %vm2994, %v3056, 0.0
      %v3078 = vadd.f32 %v3076, %v3077
      %v3079 = vsel %vm2994, %v3057, 0.0
      %v3080 = vadd.f32 %v3078, %v3079
      %v3081 = vsel %vm2994, %v3058, 0.0
      %v3082 = vadd.f32 %v3080, %v3081
      %v3083 = vsel %vm2994, %v3059, 0.0
      %v3084 = vadd.f32 %v3082, %v3083
      %v3085 = vsel %vm2994, %v3060, 0.0
      %v3086 = vadd.f32 %v3084, %v3085
      %v3087 = vsel %vm2994, %v3061, 0.0
      %v3088 = vadd.f32 %v3086, %v3087
      %v3089 = vsel %vm2994, %v3062, 0.0
      %v3090 = vadd.f32 %v3088, %v3089
      %v3091 = vsel %vm2994, %v3063, 0.0
      %v3092 = vadd.f32 %v3090, %v3091
      %v3093 = vsel %vm2994, %v3064, 0.0
      %v3094 = vadd.f32 %v3092, %v3093
      %v3095 = vsel %vm2994, %v3065, 0.0
      %v3096 = vadd.f32 %v3094, %v3095
      %v3097 = vrot.slane %v3096, 4
      %v3098 = vadd.f32 %v3096, %v3097
      %v3099 = vrot.slane %v3098, 2
      %v3100 = vadd.f32 %v3098, %v3099
      %v3101 = vrot.slane %v3100, 1
      %v3102 = vadd.f32 %v3100, %v3101
      %v3103 = vmul.f32 %v3102, %v3032
      %v3104 = vadd.f32 %v3103, 1e-05
      %v3105 = vrsqrt.pop %v3104
      %v3106 = vmul.f32 %v3034, %v3105
      %v3107 = vmul.f32 %v3035, %v3105
      %v3108 = vmul.f32 %v3036, %v3105
      %v3109 = vmul.f32 %v3037, %v3105
      %v3110 = vmul.f32 %v3038, %v3105
      %v3111 = vmul.f32 %v3039, %v3105
      %v3112 = vmul.f32 %v3040, %v3105
      %v3113 = vmul.f32 %v3041, %v3105
      %v3114 = vmul.f32 %v3042, %v3105
      %v3115 = vmul.f32 %v3043, %v3105
      %v3116 = vmul.f32 %v3044, %v3105
      %v3117 = vmul.f32 %v3045, %v3105
      %v3118 = vmul.f32 %v3046, %v3105
      %v3119 = vmul.f32 %v3047, %v3105
      %v3120 = vmul.f32 %v3048, %v3105
      %v3121 = vmul.f32 %v3049, %v3105
      %3123 = vset.pattern.permute.xlu0 0
      %3124 = vperm.xlu0 %3123, %v2962
      %v3125 = vpop.permute.xlu0 %3124
      %3128 = vset.pattern.permute.xlu0 0
      %3129 = vperm.xlu0 %3128, %v2963
      %v3130 = vpop.permute.xlu0 %3129
      %3133 = vset.pattern.permute.xlu0 0
      %3134 = vperm.xlu0 %3133, %v2964
      %v3135 = vpop.permute.xlu0 %3134
      %3138 = vset.pattern.permute.xlu0 0
      %3139 = vperm.xlu0 %3138, %v2965
      %v3140 = vpop.permute.xlu0 %3139
      %3143 = vset.pattern.permute.xlu0 0
      %3144 = vperm.xlu0 %3143, %v2966
      %v3145 = vpop.permute.xlu0 %3144
      %3148 = vset.pattern.permute.xlu0 0
      %3149 = vperm.xlu0 %3148, %v2967
      %v3150 = vpop.permute.xlu0 %3149
      %3153 = vset.pattern.permute.xlu0 0
      %3154 = vperm.xlu0 %3153, %v2968
      %v3155 = vpop.permute.xlu0 %3154
      %3158 = vset.pattern.permute.xlu0 0
      %3159 = vperm.xlu0 %3158, %v2969
      %v3160 = vpop.permute.xlu0 %3159
      %3163 = vset.pattern.permute.xlu0 0
      %3164 = vperm.xlu0 %3163, %v2970
      %v3165 = vpop.permute.xlu0 %3164
      %3168 = vset.pattern.permute.xlu0 0
      %3169 = vperm.xlu0 %3168, %v2971
      %v3170 = vpop.permute.xlu0 %3169
      %3173 = vset.pattern.permute.xlu0 0
      %3174 = vperm.xlu0 %3173, %v2972
      %v3175 = vpop.permute.xlu0 %3174
      %3178 = vset.pattern.permute.xlu0 0
      %3179 = vperm.xlu0 %3178, %v2973
      %v3180 = vpop.permute.xlu0 %3179
      %3183 = vset.pattern.permute.xlu0 0
      %3184 = vperm.xlu0 %3183, %v2974
      %v3185 = vpop.permute.xlu0 %3184
      %3188 = vset.pattern.permute.xlu0 0
      %3189 = vperm.xlu0 %3188, %v2975
      %v3190 = vpop.permute.xlu0 %3189
      %3193 = vset.pattern.permute.xlu0 0
      %3194 = vperm.xlu0 %3193, %v2976
      %v3195 = vpop.permute.xlu0 %3194
      %3198 = vset.pattern.permute.xlu0 0
      %3199 = vperm.xlu0 %3198, %v2977
      %v3200 = vpop.permute.xlu0 %3199
      %v3202 = vmul.f32 %v3106, %v3125
      %v3203 = vmul.f32 %v3107, %v3130
      %v3204 = vmul.f32 %v3108, %v3135
      %v3205 = vmul.f32 %v3109, %v3140
      %v3206 = vmul.f32 %v3110, %v3145
      %v3207 = vmul.f32 %v3111, %v3150
      %v3208 = vmul.f32 %v3112, %v3155
      %v3209 = vmul.f32 %v3113, %v3160
      %v3210 = vmul.f32 %v3114, %v3165
      %v3211 = vmul.f32 %v3115, %v3170
      %v3212 = vmul.f32 %v3116, %v3175
      %v3213 = vmul.f32 %v3117, %v3180
      %v3214 = vmul.f32 %v3118, %v3185
      %v3215 = vmul.f32 %v3119, %v3190
      %v3216 = vmul.f32 %v3120, %v3195
      %v3217 = vmul.f32 %v3121, %v3200
      %3219 = vset.pattern.permute.xlu0 0
      %3220 = vperm.xlu0 %3219, %v2978
      %v3221 = vpop.permute.xlu0 %3220
      %3224 = vset.pattern.permute.xlu0 0
      %3225 = vperm.xlu0 %3224, %v2979
      %v3226 = vpop.permute.xlu0 %3225
      %3229 = vset.pattern.permute.xlu0 0
      %3230 = vperm.xlu0 %3229, %v2980
      %v3231 = vpop.permute.xlu0 %3230
      %3234 = vset.pattern.permute.xlu0 0
      %3235 = vperm.xlu0 %3234, %v2981
      %v3236 = vpop.permute.xlu0 %3235
      %3239 = vset.pattern.permute.xlu0 0
      %3240 = vperm.xlu0 %3239, %v2982
      %v3241 = vpop.permute.xlu0 %3240
      %3244 = vset.pattern.permute.xlu0 0
      %3245 = vperm.xlu0 %3244, %v2983
      %v3246 = vpop.permute.xlu0 %3245
      %3249 = vset.pattern.permute.xlu0 0
      %3250 = vperm.xlu0 %3249, %v2984
      %v3251 = vpop.permute.xlu0 %3250
      %3254 = vset.pattern.permute.xlu0 0
      %3255 = vperm.xlu0 %3254, %v2985
      %v3256 = vpop.permute.xlu0 %3255
      %3259 = vset.pattern.permute.xlu0 0
      %3260 = vperm.xlu0 %3259, %v2986
      %v3261 = vpop.permute.xlu0 %3260
      %3264 = vset.pattern.permute.xlu0 0
      %3265 = vperm.xlu0 %3264, %v2987
      %v3266 = vpop.permute.xlu0 %3265
      %3269 = vset.pattern.permute.xlu0 0
      %3270 = vperm.xlu0 %3269, %v2988
      %v3271 = vpop.permute.xlu0 %3270
      %3274 = vset.pattern.permute.xlu0 0
      %3275 = vperm.xlu0 %3274, %v2989
      %v3276 = vpop.permute.xlu0 %3275
      %3279 = vset.pattern.permute.xlu0 0
      %3280 = vperm.xlu0 %3279, %v2990
      %v3281 = vpop.permute.xlu0 %3280
      %3284 = vset.pattern.permute.xlu0 0
      %3285 = vperm.xlu0 %3284, %v2991
      %v3286 = vpop.permute.xlu0 %3285
      %3289 = vset.pattern.permute.xlu0 0
      %3290 = vperm.xlu0 %3289, %v2992
      %v3291 = vpop.permute.xlu0 %3290
      %3294 = vset.pattern.permute.xlu0 0
      %3295 = vperm.xlu0 %3294, %v2993
      %v3296 = vpop.permute.xlu0 %3295
      %v3298 = vadd.f32 %v3202, %v3221
      %v3299 = vadd.f32 %v3203, %v3226
      %v3300 = vadd.f32 %v3204, %v3231
      %v3301 = vadd.f32 %v3205, %v3236
      %v3302 = vadd.f32 %v3206, %v3241
      %v3303 = vadd.f32 %v3207, %v3246
      %v3304 = vadd.f32 %v3208, %v3251
      %v3305 = vadd.f32 %v3209, %v3256
      %v3306 = vadd.f32 %v3210, %v3261
      %v3307 = vadd.f32 %v3211, %v3266
      %v3308 = vadd.f32 %v3212, %v3271
      %v3309 = vadd.f32 %v3213, %v3276
      %v3310 = vadd.f32 %v3214, %v3281
      %v3311 = vadd.f32 %v3215, %v3286
      %v3312 = vadd.f32 %v3216, %v3291
      %v3313 = vadd.f32 %v3217, %v3296
      %v3314 = vld [vmem:[%s9] sm:$0xf]
      %v3315 = vld [vmem:[%s9 + $0x4] sm:$0xf]
      %v3316 = vld [vmem:[%s9 + $0x8] sm:$0xf]
      %v3317 = vld [vmem:[%s9 + $0xc] sm:$0xf]
      %v3318 = vld [vmem:[%s9 + $0x10] sm:$0xf]
      %v3319 = vld [vmem:[%s9 + $0x14] sm:$0xf]
      %v3320 = vld [vmem:[%s9 + $0x18] sm:$0xf]
      %v3321 = vld [vmem:[%s9 + $0x1c] sm:$0xf]
      %v3322 = vld [vmem:[%s9 + $0x20] sm:$0xf]
      %v3323 = vld [vmem:[%s9 + $0x24] sm:$0xf]
      %v3324 = vld [vmem:[%s9 + $0x28] sm:$0xf]
      %v3325 = vld [vmem:[%s9 + $0x2c] sm:$0xf]
      %v3326 = vld [vmem:[%s9 + $0x30] sm:$0xf]
      %v3327 = vld [vmem:[%s9 + $0x34] sm:$0xf]
      %v3328 = vld [vmem:[%s9 + $0x38] sm:$0xf]
      %v3329 = vld [vmem:[%s9 + $0x3c] sm:$0xf]
      %v3330 = vpack.c.bf16 %v3299, %v3298
      %v3331 = vpack.c.bf16 %v3301, %v3300
      %v3332 = vpack.c.bf16 %v3303, %v3302
      %v3333 = vpack.c.bf16 %v3305, %v3304
      %v3334 = vpack.c.bf16 %v3307, %v3306
      %v3335 = vpack.c.bf16 %v3309, %v3308
      %v3336 = vpack.c.bf16 %v3311, %v3310
      %v3337 = vpack.c.bf16 %v3313, %v3312
      %v3338 = vld [vmem:[%s10] sm:$0xff]
      %v3339 = vld [vmem:[%s10 + $0x8] sm:$0xff]
      %v3340 = vld [vmem:[%s10 + $0x10] sm:$0xff]
      %v3341 = vld [vmem:[%s10 + $0x18] sm:$0xff]
      %v3342 = vld [vmem:[%s10 + $0x20] sm:$0xff]
      %v3343 = vld [vmem:[%s10 + $0x28] sm:$0xff]
      %v3344 = vld [vmem:[%s10 + $0x30] sm:$0xff]
      %v3345 = vld [vmem:[%s10 + $0x38] sm:$0xff]
      %v3346 = vld [vmem:[%s10 + $0x40] sm:$0xff]
      %v3347 = vld [vmem:[%s10 + $0x48] sm:$0xff]
      %v3348 = vld [vmem:[%s10 + $0x50] sm:$0xff]
      %v3349 = vld [vmem:[%s10 + $0x58] sm:$0xff]
      %v3350 = vld [vmem:[%s10 + $0x60] sm:$0xff]
      %v3351 = vld [vmem:[%s10 + $0x68] sm:$0xff]
      %v3352 = vld [vmem:[%s10 + $0x70] sm:$0xff]
      %v3353 = vld [vmem:[%s10 + $0x78] sm:$0xff]
      %3355 = vset.pattern.permute.xlu0 0
      %3356 = vperm.xlu0 %3355, %v3338
      %v3357 = vpop.permute.xlu0 %3356
      %3360 = vset.pattern.permute.xlu0 0
      %3361 = vperm.xlu0 %3360, %v3339
      %v3362 = vpop.permute.xlu0 %3361
      %3365 = vset.pattern.permute.xlu0 0
      %3366 = vperm.xlu0 %3365, %v3340
      %v3367 = vpop.permute.xlu0 %3366
      %3370 = vset.pattern.permute.xlu0 0
      %3371 = vperm.xlu0 %3370, %v3341
      %v3372 = vpop.permute.xlu0 %3371
      %3375 = vset.pattern.permute.xlu0 0
      %3376 = vperm.xlu0 %3375, %v3342
      %v3377 = vpop.permute.xlu0 %3376
      %3380 = vset.pattern.permute.xlu0 0
      %3381 = vperm.xlu0 %3380, %v3343
      %v3382 = vpop.permute.xlu0 %3381
      %3385 = vset.pattern.permute.xlu0 0
      %3386 = vperm.xlu0 %3385, %v3344
      %v3387 = vpop.permute.xlu0 %3386
      %3390 = vset.pattern.permute.xlu0 0
      %3391 = vperm.xlu0 %3390, %v3345
      %v3392 = vpop.permute.xlu0 %3391
      %3395 = vset.pattern.permute.xlu0 0
      %3396 = vperm.xlu0 %3395, %v3346
      %v3397 = vpop.permute.xlu0 %3396
      %3400 = vset.pattern.permute.xlu0 0
      %3401 = vperm.xlu0 %3400, %v3347
      %v3402 = vpop.permute.xlu0 %3401
      %3405 = vset.pattern.permute.xlu0 0
      %3406 = vperm.xlu0 %3405, %v3348
      %v3407 = vpop.permute.xlu0 %3406
      %3410 = vset.pattern.permute.xlu0 0
      %3411 = vperm.xlu0 %3410, %v3349
      %v3412 = vpop.permute.xlu0 %3411
      %3415 = vset.pattern.permute.xlu0 0
      %3416 = vperm.xlu0 %3415, %v3350
      %v3417 = vpop.permute.xlu0 %3416
      %3420 = vset.pattern.permute.xlu0 0
      %3421 = vperm.xlu0 %3420, %v3351
      %v3422 = vpop.permute.xlu0 %3421
      %3425 = vset.pattern.permute.xlu0 0
      %3426 = vperm.xlu0 %3425, %v3352
      %v3427 = vpop.permute.xlu0 %3426
      %3430 = vset.pattern.permute.xlu0 0
      %3431 = vperm.xlu0 %3430, %v3353
      %v3432 = vpop.permute.xlu0 %3431
      %v3450 = vunpack.c.l.b16 %v3314
      %v3451 = vunpack.c.l.b16 %v3315
      %v3452 = vunpack.c.l.b16 %v3316
      %v3453 = vunpack.c.l.b16 %v3317
      %v3454 = vunpack.c.l.b16 %v3318
      %v3455 = vunpack.c.l.b16 %v3319
      %v3456 = vunpack.c.l.b16 %v3320
      %v3457 = vunpack.c.l.b16 %v3321
      %v3458 = vunpack.c.l.b16 %v3322
      %v3459 = vunpack.c.l.b16 %v3323
      %v3460 = vunpack.c.l.b16 %v3324
      %v3461 = vunpack.c.l.b16 %v3325
      %v3462 = vunpack.c.l.b16 %v3326
      %v3463 = vunpack.c.l.b16 %v3327
      %v3464 = vunpack.c.l.b16 %v3328
      %v3465 = vunpack.c.l.b16 %v3329
      %v3466 = vpack.c.b16 %v3451, %v3450
      %v3467 = vpack.c.b16 %v3453, %v3452
      %v3468 = vpack.c.b16 %v3455, %v3454
      %v3469 = vpack.c.b16 %v3457, %v3456
      %v3470 = vpack.c.b16 %v3459, %v3458
      %v3471 = vpack.c.b16 %v3461, %v3460
      %v3472 = vpack.c.b16 %v3463, %v3462
      %v3473 = vpack.c.b16 %v3465, %v3464
      %3482 = vmatprep.subr.bf16.mxu0 0
      %3483 = vmatpush1.bf16.msra.mxu0 %v3330
      %3484 = vmatprep.subr.bf16.mxu0 0
      %3485 = vmatpush1.bf16.msra.mxu0 %v3331
      %3486 = vmatprep.subr.bf16.mxu0 0
      %3487 = vmatpush1.bf16.msra.mxu0 %v3332
      %3488 = vmatprep.subr.bf16.mxu0 0
      %3489 = vmatpush1.bf16.msra.mxu0 %v3333
      %3490 = vmatprep.subr.bf16.mxu0 0
      %3491 = vmatpush1.bf16.msra.mxu0 %v3334
      %3492 = vmatprep.subr.bf16.mxu0 0
      %3493 = vmatpush1.bf16.msra.mxu0 %v3335
      %3494 = vmatprep.subr.bf16.mxu0 0
      %3495 = vmatpush1.bf16.msra.mxu0 %v3336
      %3496 = vmatprep.subr.bf16.mxu0 0
      %3497 = vmatpush1.bf16.msra.mxu0 %v3337
      %3498 = vmatprep.subr.bf16.mxu0 0
      %3499 = vmatpush1.bf16.msra.mxu0 0
      %3500 = vmatprep.subr.bf16.mxu0 0
      %3501 = vmatpush1.bf16.msra.mxu0 0
      %3502 = vmatprep.subr.bf16.mxu0 0
      %3503 = vmatpush1.bf16.msra.mxu0 0
      %3504 = vmatprep.subr.bf16.mxu0 0
      %3505 = vmatpush1.bf16.msra.mxu0 0
      %3506 = vmatprep.subr.bf16.mxu0 0
      %3507 = vmatpush1.bf16.msra.mxu0 0
      %3508 = vmatprep.subr.bf16.mxu0 0
      %3509 = vmatpush1.bf16.msra.mxu0 0
      %3510 = vmatprep.subr.bf16.mxu0 0
      %3511 = vmatpush1.bf16.msra.mxu0 0
      %3512 = vmatprep.subr.bf16.mxu0 0
      %3513 = vmatpush1.bf16.msra.mxu0 0
      %3514 = vmatprep.mubr.bf16.mxu0 0
      %3515 = vmatmul.mubr.bf16.gmra.mrb[0].mxu0 %v3466
      %v3516 = vpop.f32.mrb[0].mxu0
      %v3517 = vadd.f32 %v3357, %v3516
      %v3518 = vpop.f32.mrb[0].mxu0
      %v3519 = vpop.f32.mrb[0].mxu0
      %v3520 = vadd.f32 %v3362, %v3519
      %v3521 = vpop.f32.mrb[0].mxu0
      %3522 = vmatprep.mubr.bf16.mxu0 0
      %3523 = vmatmul.mubr.bf16.gmra.mrb[0].mxu0 %v3467
      %v3524 = vpop.f32.mrb[0].mxu0
      %v3525 = vadd.f32 %v3367, %v3524
      %v3526 = vpop.f32.mrb[0].mxu0
      %v3527 = vpop.f32.mrb[0].mxu0
      %v3528 = vadd.f32 %v3372, %v3527
      %v3529 = vpop.f32.mrb[0].mxu0
      %3530 = vmatprep.mubr.bf16.mxu0 0
      %3531 = vmatmul.mubr.bf16.gmra.mrb[0].mxu0 %v3468
      %v3532 = vpop.f32.mrb[0].mxu0
      %v3533 = vadd.f32 %v3377, %v3532
      %v3534 = vpop.f32.mrb[0].mxu0
      %v3535 = vpop.f32.mrb[0].mxu0
      %v3536 = vadd.f32 %v3382, %v3535
      %v3537 = vpop.f32.mrb[0].mxu0
      %3538 = vmatprep.mubr.bf16.mxu0 0
      %3539 = vmatmul.mubr.bf16.gmra.mrb[0].mxu0 %v3469
      %v3540 = vpop.f32.mrb[0].mxu0
      %v3541 = vadd.f32 %v3387, %v3540
      %v3542 = vpop.f32.mrb[0].mxu0
      %v3543 = vpop.f32.mrb[0].mxu0
      %v3544 = vadd.f32 %v3392, %v3543
      %v3545 = vpop.f32.mrb[0].mxu0
      %3546 = vmatprep.mubr.bf16.mxu0 0
      %3547 = vmatmul.mubr.bf16.gmra.mrb[0].mxu0 %v3470
      %v3548 = vpop.f32.mrb[0].mxu0
      %v3549 = vadd.f32 %v3397, %v3548
      %v3550 = vpop.f32.mrb[0].mxu0
      %v3551 = vpop.f32.mrb[0].mxu0
      %v3552 = vadd.f32 %v3402, %v3551
      %v3553 = vpop.f32.mrb[0].mxu0
      %3554 = vmatprep.mubr.bf16.mxu0 0
      %3555 = vmatmul.mubr.bf16.gmra.mrb[0].mxu0 %v3471
      %v3556 = vpop.f32.mrb[0].mxu0
      %v3557 = vadd.f32 %v3407, %v3556
      %v3558 = vpop.f32.mrb[0].mxu0
      %v3559 = vpop.f32.mrb[0].mxu0
      %v3560 = vadd.f32 %v3412, %v3559
      %v3561 = vpop.f32.mrb[0].mxu0
      %3562 = vmatprep.mubr.bf16.mxu0 0
      %3563 = vmatmul.mubr.bf16.gmra.mrb[0].mxu0 %v3472
      %v3564 = vpop.f32.mrb[0].mxu0
      %v3565 = vadd.f32 %v3417, %v3564
      %v3566 = vpop.f32.mrb[0].mxu0
      %v3567 = vpop.f32.mrb[0].mxu0
      %v3568 = vadd.f32 %v3422, %v3567
      %v3569 = vpop.f32.mrb[0].mxu0
      %3570 = vmatprep.mubr.bf16.mxu0 0
      %3571 = vmatmul.mubr.bf16.gmra.mrb[0].mxu0 %v3473
      %v3572 = vpop.f32.mrb[0].mxu0
      %v3573 = vadd.f32 %v3427, %v3572
      %v3574 = vpop.f32.mrb[0].mxu0
      %v3575 = vpop.f32.mrb[0].mxu0
      %v3576 = vadd.f32 %v3432, %v3575
      %v3577 = vpop.f32.mrb[0].mxu0
      %3578 = vdwg.mxu0
      %v3579 = vmax.f32 %v3517, 0.0
      %v3580 = vmax.f32 %v3520, 0.0
      %v3581 = vmax.f32 %v3525, 0.0
      %v3582 = vmax.f32 %v3528, 0.0
      %v3583 = vmax.f32 %v3533, 0.0
      %v3584 = vmax.f32 %v3536, 0.0
      %v3585 = vmax.f32 %v3541, 0.0
      %v3586 = vmax.f32 %v3544, 0.0
      %v3587 = vmax.f32 %v3549, 0.0
      %v3588 = vmax.f32 %v3552, 0.0
      %v3589 = vmax.f32 %v3557, 0.0
      %v3590 = vmax.f32 %v3560, 0.0
      %v3591 = vmax.f32 %v3565, 0.0
      %v3592 = vmax.f32 %v3568, 0.0
      %v3593 = vmax.f32 %v3573, 0.0
      %v3594 = vmax.f32 %v3576, 0.0
      %v3595 = vld [vmem:[%s11] sm:$0xf]
      %v3596 = vld [vmem:[%s11 + $0x4] sm:$0xf]
      %v3597 = vld [vmem:[%s11 + $0x8] sm:$0xf]
      %v3598 = vld [vmem:[%s11 + $0xc] sm:$0xf]
      %v3599 = vld [vmem:[%s11 + $0x10] sm:$0xf]
      %v3600 = vld [vmem:[%s11 + $0x14] sm:$0xf]
      %v3601 = vld [vmem:[%s11 + $0x18] sm:$0xf]
      %v3602 = vld [vmem:[%s11 + $0x1c] sm:$0xf]
      %v3603 = vld [vmem:[%s11 + $0x20] sm:$0xf]
      %v3604 = vld [vmem:[%s11 + $0x24] sm:$0xf]
      %v3605 = vld [vmem:[%s11 + $0x28] sm:$0xf]
      %v3606 = vld [vmem:[%s11 + $0x2c] sm:$0xf]
      %v3607 = vld [vmem:[%s11 + $0x30] sm:$0xf]
      %v3608 = vld [vmem:[%s11 + $0x34] sm:$0xf]
      %v3609 = vld [vmem:[%s11 + $0x38] sm:$0xf]
      %v3610 = vld [vmem:[%s11 + $0x3c] sm:$0xf]
      %v3611 = vpack.c.bf16 %v3580, %v3579
      %v3612 = vpack.c.bf16 %v3582, %v3581
      %v3613 = vpack.c.bf16 %v3584, %v3583
      %v3614 = vpack.c.bf16 %v3586, %v3585
      %v3615 = vpack.c.bf16 %v3588, %v3587
      %v3616 = vpack.c.bf16 %v3590, %v3589
      %v3617 = vpack.c.bf16 %v3592, %v3591
      %v3618 = vpack.c.bf16 %v3594, %v3593
      %v3619 = vld [vmem:[%s12] sm:$0xff]
      %v3620 = vld [vmem:[%s12 + $0x8] sm:$0xff]
      %v3621 = vld [vmem:[%s12 + $0x10] sm:$0xff]
      %v3622 = vld [vmem:[%s12 + $0x18] sm:$0xff]
      %v3623 = vld [vmem:[%s12 + $0x20] sm:$0xff]
      %v3624 = vld [vmem:[%s12 + $0x28] sm:$0xff]
      %v3625 = vld [vmem:[%s12 + $0x30] sm:$0xff]
      %v3626 = vld [vmem:[%s12 + $0x38] sm:$0xff]
      %v3627 = vld [vmem:[%s12 + $0x40] sm:$0xff]
      %v3628 = vld [vmem:[%s12 + $0x48] sm:$0xff]
      %v3629 = vld [vmem:[%s12 + $0x50] sm:$0xff]
      %v3630 = vld [vmem:[%s12 + $0x58] sm:$0xff]
      %v3631 = vld [vmem:[%s12 + $0x60] sm:$0xff]
      %v3632 = vld [vmem:[%s12 + $0x68] sm:$0xff]
      %v3633 = vld [vmem:[%s12 + $0x70] sm:$0xff]
      %v3634 = vld [vmem:[%s12 + $0x78] sm:$0xff]
      %3636 = vset.pattern.permute.xlu0 0
      %3637 = vperm.xlu0 %3636, %v3619
      %v3638 = vpop.permute.xlu0 %3637
      %3641 = vset.pattern.permute.xlu0 0
      %3642 = vperm.xlu0 %3641, %v3620
      %v3643 = vpop.permute.xlu0 %3642
      %3646 = vset.pattern.permute.xlu0 0
      %3647 = vperm.xlu0 %3646, %v3621
      %v3648 = vpop.permute.xlu0 %3647
      %3651 = vset.pattern.permute.xlu0 0
      %3652 = vperm.xlu0 %3651, %v3622
      %v3653 = vpop.permute.xlu0 %3652
      %3656 = vset.pattern.permute.xlu0 0
      %3657 = vperm.xlu0 %3656, %v3623
      %v3658 = vpop.permute.xlu0 %3657
      %3661 = vset.pattern.permute.xlu0 0
      %3662 = vperm.xlu0 %3661, %v3624
      %v3663 = vpop.permute.xlu0 %3662
      %3666 = vset.pattern.permute.xlu0 0
      %3667 = vperm.xlu0 %3666, %v3625
      %v3668 = vpop.permute.xlu0 %3667
      %3671 = vset.pattern.permute.xlu0 0
      %3672 = vperm.xlu0 %3671, %v3626
      %v3673 = vpop.permute.xlu0 %3672
      %3676 = vset.pattern.permute.xlu0 0
      %3677 = vperm.xlu0 %3676, %v3627
      %v3678 = vpop.permute.xlu0 %3677
      %3681 = vset.pattern.permute.xlu0 0
      %3682 = vperm.xlu0 %3681, %v3628
      %v3683 = vpop.permute.xlu0 %3682
      %3686 = vset.pattern.permute.xlu0 0
      %3687 = vperm.xlu0 %3686, %v3629
      %v3688 = vpop.permute.xlu0 %3687
      %3691 = vset.pattern.permute.xlu0 0
      %3692 = vperm.xlu0 %3691, %v3630
      %v3693 = vpop.permute.xlu0 %3692
      %3696 = vset.pattern.permute.xlu0 0
      %3697 = vperm.xlu0 %3696, %v3631
      %v3698 = vpop.permute.xlu0 %3697
      %3701 = vset.pattern.permute.xlu0 0
      %3702 = vperm.xlu0 %3701, %v3632
      %v3703 = vpop.permute.xlu0 %3702
      %3706 = vset.pattern.permute.xlu0 0
      %3707 = vperm.xlu0 %3706, %v3633
      %v3708 = vpop.permute.xlu0 %3707
      %3711 = vset.pattern.permute.xlu0 0
      %3712 = vperm.xlu0 %3711, %v3634
      %v3713 = vpop.permute.xlu0 %3712
      %v3731 = vunpack.c.l.b16 %v3595
      %v3732 = vunpack.c.l.b16 %v3596
      %v3733 = vunpack.c.l.b16 %v3597
      %v3734 = vunpack.c.l.b16 %v3598
      %v3735 = vunpack.c.l.b16 %v3599
      %v3736 = vunpack.c.l.b16 %v3600
      %v3737 = vunpack.c.l.b16 %v3601
      %v3738 = vunpack.c.l.b16 %v3602
      %v3739 = vunpack.c.l.b16 %v3603
      %v3740 = vunpack.c.l.b16 %v3604
      %v3741 = vunpack.c.l.b16 %v3605
      %v3742 = vunpack.c.l.b16 %v3606
      %v3743 = vunpack.c.l.b16 %v3607
      %v3744 = vunpack.c.l.b16 %v3608
      %v3745 = vunpack.c.l.b16 %v3609
      %v3746 = vunpack.c.l.b16 %v3610
      %v3747 = vpack.c.b16 %v3732, %v3731
      %v3748 = vpack.c.b16 %v3734, %v3733
      %v3749 = vpack.c.b16 %v3736, %v3735
      %v3750 = vpack.c.b16 %v3738, %v3737
      %v3751 = vpack.c.b16 %v3740, %v3739
      %v3752 = vpack.c.b16 %v3742, %v3741
      %v3753 = vpack.c.b16 %v3744, %v3743
      %v3754 = vpack.c.b16 %v3746, %v3745
      %3763 = vmatprep.subr.bf16.mxu0 0
      %3764 = vmatpush1.bf16.msra.mxu0 %v3611
      %3765 = vmatprep.subr.bf16.mxu0 0
      %3766 = vmatpush1.bf16.msra.mxu0 %v3612
      %3767 = vmatprep.subr.bf16.mxu0 0
      %3768 = vmatpush1.bf16.msra.mxu0 %v3613
      %3769 = vmatprep.subr.bf16.mxu0 0
      %3770 = vmatpush1.bf16.msra.mxu0 %v3614
      %3771 = vmatprep.subr.bf16.mxu0 0
      %3772 = vmatpush1.bf16.msra.mxu0 %v3615
      %3773 = vmatprep.subr.bf16.mxu0 0
      %3774 = vmatpush1.bf16.msra.mxu0 %v3616
      %3775 = vmatprep.subr.bf16.mxu0 0
      %3776 = vmatpush1.bf16.msra.mxu0 %v3617
      %3777 = vmatprep.subr.bf16.mxu0 0
      %3778 = vmatpush1.bf16.msra.mxu0 %v3618
      %3779 = vmatprep.subr.bf16.mxu0 0
      %3780 = vmatpush1.bf16.msra.mxu0 0
      %3781 = vmatprep.subr.bf16.mxu0 0
      %3782 = vmatpush1.bf16.msra.mxu0 0
      %3783 = vmatprep.subr.bf16.mxu0 0
      %3784 = vmatpush1.bf16.msra.mxu0 0
      %3785 = vmatprep.subr.bf16.mxu0 0
      %3786 = vmatpush1.bf16.msra.mxu0 0
      %3787 = vmatprep.subr.bf16.mxu0 0
      %3788 = vmatpush1.bf16.msra.mxu0 0
      %3789 = vmatprep.subr.bf16.mxu0 0
      %3790 = vmatpush1.bf16.msra.mxu0 0
      %3791 = vmatprep.subr.bf16.mxu0 0
      %3792 = vmatpush1.bf16.msra.mxu0 0
      %3793 = vmatprep.subr.bf16.mxu0 0
      %3794 = vmatpush1.bf16.msra.mxu0 0
      %3795 = vmatprep.mubr.bf16.mxu0 0
      %3796 = vmatmul.mubr.bf16.gmra.mrb[0].mxu0 %v3747
      %v3797 = vpop.f32.mrb[0].mxu0
      %v3798 = vadd.f32 %v3638, %v3797
      %v3799 = vpop.f32.mrb[0].mxu0
      %v3800 = vpop.f32.mrb[0].mxu0
      %v3801 = vadd.f32 %v3643, %v3800
      %v3802 = vpop.f32.mrb[0].mxu0
      %3803 = vmatprep.mubr.bf16.mxu0 0
      %3804 = vmatmul.mubr.bf16.gmra.mrb[0].mxu0 %v3748
      %v3805 = vpop.f32.mrb[0].mxu0
      %v3806 = vadd.f32 %v3648, %v3805
      %v3807 = vpop.f32.mrb[0].mxu0
      %v3808 = vpop.f32.mrb[0].mxu0
      %v3809 = vadd.f32 %v3653, %v3808
      %v3810 = vpop.f32.mrb[0].mxu0
      %3811 = vmatprep.mubr.bf16.mxu0 0
      %3812 = vmatmul.mubr.bf16.gmra.mrb[0].mxu0 %v3749
      %v3813 = vpop.f32.mrb[0].mxu0
      %v3814 = vadd.f32 %v3658, %v3813
      %v3815 = vpop.f32.mrb[0].mxu0
      %v3816 = vpop.f32.mrb[0].mxu0
      %v3817 = vadd.f32 %v3663, %v3816
      %v3818 = vpop.f32.mrb[0].mxu0
      %3819 = vmatprep.mubr.bf16.mxu0 0
      %3820 = vmatmul.mubr.bf16.gmra.mrb[0].mxu0 %v3750
      %v3821 = vpop.f32.mrb[0].mxu0
      %v3822 = vadd.f32 %v3668, %v3821
      %v3823 = vpop.f32.mrb[0].mxu0
      %v3824 = vpop.f32.mrb[0].mxu0
      %v3825 = vadd.f32 %v3673, %v3824
      %v3826 = vpop.f32.mrb[0].mxu0
      %3827 = vmatprep.mubr.bf16.mxu0 0
      %3828 = vmatmul.mubr.bf16.gmra.mrb[0].mxu0 %v3751
      %v3829 = vpop.f32.mrb[0].mxu0
      %v3830 = vadd.f32 %v3678, %v3829
      %v3831 = vpop.f32.mrb[0].mxu0
      %v3832 = vpop.f32.mrb[0].mxu0
      %v3833 = vadd.f32 %v3683, %v3832
      %v3834 = vpop.f32.mrb[0].mxu0
      %3835 = vmatprep.mubr.bf16.mxu0 0
      %3836 = vmatmul.mubr.bf16.gmra.mrb[0].mxu0 %v3752
      %v3837 = vpop.f32.mrb[0].mxu0
      %v3838 = vadd.f32 %v3688, %v3837
      %v3839 = vpop.f32.mrb[0].mxu0
      %v3840 = vpop.f32.mrb[0].mxu0
      %v3841 = vadd.f32 %v3693, %v3840
      %v3842 = vpop.f32.mrb[0].mxu0
      %3843 = vmatprep.mubr.bf16.mxu0 0
      %3844 = vmatmul.mubr.bf16.gmra.mrb[0].mxu0 %v3753
      %v3845 = vpop.f32.mrb[0].mxu0
      %v3846 = vadd.f32 %v3698, %v3845
      %v3847 = vpop.f32.mrb[0].mxu0
      %v3848 = vpop.f32.mrb[0].mxu0
      %v3849 = vadd.f32 %v3703, %v3848
      %v3850 = vpop.f32.mrb[0].mxu0
      %3851 = vmatprep.mubr.bf16.mxu0 0
      %3852 = vmatmul.mubr.bf16.gmra.mrb[0].mxu0 %v3754
      %v3853 = vpop.f32.mrb[0].mxu0
      %v3854 = vadd.f32 %v3708, %v3853
      %v3855 = vpop.f32.mrb[0].mxu0
      %v3856 = vpop.f32.mrb[0].mxu0
      %v3857 = vadd.f32 %v3713, %v3856
      %v3858 = vpop.f32.mrb[0].mxu0
      %3859 = vdwg.mxu0
      %v3860 = vadd.f32 %v3298, %v3798
      %v3861 = vadd.f32 %v3299, %v3801
      %v3862 = vadd.f32 %v3300, %v3806
      %v3863 = vadd.f32 %v3301, %v3809
      %v3864 = vadd.f32 %v3302, %v3814
      %v3865 = vadd.f32 %v3303, %v3817
      %v3866 = vadd.f32 %v3304, %v3822
      %v3867 = vadd.f32 %v3305, %v3825
      %v3868 = vadd.f32 %v3306, %v3830
      %v3869 = vadd.f32 %v3307, %v3833
      %v3870 = vadd.f32 %v3308, %v3838
      %v3871 = vadd.f32 %v3309, %v3841
      %v3872 = vadd.f32 %v3310, %v3846
      %v3873 = vadd.f32 %v3311, %v3849
      %v3874 = vadd.f32 %v3312, %v3854
      %v3875 = vadd.f32 %v3313, %v3857
      %v3876 = vld [vmem:[%s15] sm:$0xff]
      %v3877 = vld [vmem:[%s15 + $0x8] sm:$0xff]
      %v3878 = vld [vmem:[%s15 + $0x10] sm:$0xff]
      %v3879 = vld [vmem:[%s15 + $0x18] sm:$0xff]
      %v3880 = vld [vmem:[%s15 + $0x20] sm:$0xff]
      %v3881 = vld [vmem:[%s15 + $0x28] sm:$0xff]
      %v3882 = vld [vmem:[%s15 + $0x30] sm:$0xff]
      %v3883 = vld [vmem:[%s15 + $0x38] sm:$0xff]
      %v3884 = vld [vmem:[%s15 + $0x40] sm:$0xff]
      %v3885 = vld [vmem:[%s15 + $0x48] sm:$0xff]
      %v3886 = vld [vmem:[%s15 + $0x50] sm:$0xff]
      %v3887 = vld [vmem:[%s15 + $0x58] sm:$0xff]
      %v3888 = vld [vmem:[%s15 + $0x60] sm:$0xff]
      %v3889 = vld [vmem:[%s15 + $0x68] sm:$0xff]
      %v3890 = vld [vmem:[%s15 + $0x70] sm:$0xff]
      %v3891 = vld [vmem:[%s15 + $0x78] sm:$0xff]
      %v3892 = vld [vmem:[%s16] sm:$0xff]
      %v3893 = vld [vmem:[%s16 + $0x8] sm:$0xff]
      %v3894 = vld [vmem:[%s16 + $0x10] sm:$0xff]
      %v3895 = vld [vmem:[%s16 + $0x18] sm:$0xff]
      %v3896 = vld [vmem:[%s16 + $0x20] sm:$0xff]
      %v3897 = vld [vmem:[%s16 + $0x28] sm:$0xff]
      %v3898 = vld [vmem:[%s16 + $0x30] sm:$0xff]
      %v3899 = vld [vmem:[%s16 + $0x38] sm:$0xff]
      %v3900 = vld [vmem:[%s16 + $0x40] sm:$0xff]
      %v3901 = vld [vmem:[%s16 + $0x48] sm:$0xff]
      %v3902 = vld [vmem:[%s16 + $0x50] sm:$0xff]
      %v3903 = vld [vmem:[%s16 + $0x58] sm:$0xff]
      %v3904 = vld [vmem:[%s16 + $0x60] sm:$0xff]
      %v3905 = vld [vmem:[%s16 + $0x68] sm:$0xff]
      %v3906 = vld [vmem:[%s16 + $0x70] sm:$0xff]
      %v3907 = vld [vmem:[%s16 + $0x78] sm:$0xff]
      %v3908 = vsel %vm2994, %v3860, 0.0
      %v3909 = vsel %vm2994, %v3861, 0.0
      %v3910 = vadd.f32 %v3908, %v3909
      %v3911 = vsel %vm2994, %v3862, 0.0
      %v3912 = vadd.f32 %v3910, %v3911
      %v3913 = vsel %vm2994, %v3863, 0.0
      %v3914 = vadd.f32 %v3912, %v3913
      %v3915 = vsel %vm2994, %v3864, 0.0
      %v3916 = vadd.f32 %v3914, %v3915
      %v3917 = vsel %vm2994, %v3865, 0.0
      %v3918 = vadd.f32 %v3916, %v3917
      %v3919 = vsel %vm2994, %v3866, 0.0
      %v3920 = vadd.f32 %v3918, %v3919
      %v3921 = vsel %vm2994, %v3867, 0.0
      %v3922 = vadd.f32 %v3920, %v3921
      %v3923 = vsel %vm2994, %v3868, 0.0
      %v3924 = vadd.f32 %v3922, %v3923
      %v3925 = vsel %vm2994, %v3869, 0.0
      %v3926 = vadd.f32 %v3924, %v3925
      %v3927 = vsel %vm2994, %v3870, 0.0
      %v3928 = vadd.f32 %v3926, %v3927
      %v3929 = vsel %vm2994, %v3871, 0.0
      %v3930 = vadd.f32 %v3928, %v3929
      %v3931 = vsel %vm2994, %v3872, 0.0
      %v3932 = vadd.f32 %v3930, %v3931
      %v3933 = vsel %vm2994, %v3873, 0.0
      %v3934 = vadd.f32 %v3932, %v3933
      %v3935 = vsel %vm2994, %v3874, 0.0
      %v3936 = vadd.f32 %v3934, %v3935
      %v3937 = vsel %vm2994, %v3875, 0.0
      %v3938 = vadd.f32 %v3936, %v3937
      %v3939 = vrot.slane %v3938, 4
      %v3940 = vadd.f32 %v3938, %v3939
      %v3941 = vrot.slane %v3940, 2
      %v3942 = vadd.f32 %v3940, %v3941
      %v3943 = vrot.slane %v3942, 1
      %v3944 = vadd.f32 %v3942, %v3943
      %v3945 = vmul.f32 %v3944, %v3032
      %v3946 = vsub.f32 %v3860, %v3945
      %v3947 = vsub.f32 %v3861, %v3945
      %v3948 = vsub.f32 %v3862, %v3945
      %v3949 = vsub.f32 %v3863, %v3945
      %v3950 = vsub.f32 %v3864, %v3945
      %v3951 = vsub.f32 %v3865, %v3945
      %v3952 = vsub.f32 %v3866, %v3945
      %v3953 = vsub.f32 %v3867, %v3945
      %v3954 = vsub.f32 %v3868, %v3945
      %v3955 = vsub.f32 %v3869, %v3945
      %v3956 = vsub.f32 %v3870, %v3945
      %v3957 = vsub.f32 %v3871, %v3945
      %v3958 = vsub.f32 %v3872, %v3945
      %v3959 = vsub.f32 %v3873, %v3945
      %v3960 = vsub.f32 %v3874, %v3945
      %v3961 = vsub.f32 %v3875, %v3945
      %v3962 = vmul.f32 %v3946, %v3946
      %v3963 = vmul.f32 %v3947, %v3947
      %v3964 = vmul.f32 %v3948, %v3948
      %v3965 = vmul.f32 %v3949, %v3949
      %v3966 = vmul.f32 %v3950, %v3950
      %v3967 = vmul.f32 %v3951, %v3951
      %v3968 = vmul.f32 %v3952, %v3952
      %v3969 = vmul.f32 %v3953, %v3953
      %v3970 = vmul.f32 %v3954, %v3954
      %v3971 = vmul.f32 %v3955, %v3955
      %v3972 = vmul.f32 %v3956, %v3956
      %v3973 = vmul.f32 %v3957, %v3957
      %v3974 = vmul.f32 %v3958, %v3958
      %v3975 = vmul.f32 %v3959, %v3959
      %v3976 = vmul.f32 %v3960, %v3960
      %v3977 = vmul.f32 %v3961, %v3961
      %v3978 = vsel %vm2994, %v3962, 0.0
      %v3979 = vsel %vm2994, %v3963, 0.0
      %v3980 = vadd.f32 %v3978, %v3979
      %v3981 = vsel %vm2994, %v3964, 0.0
      %v3982 = vadd.f32 %v3980, %v3981
      %v3983 = vsel %vm2994, %v3965, 0.0
      %v3984 = vadd.f32 %v3982, %v3983
      %v3985 = vsel %vm2994, %v3966, 0.0
      %v3986 = vadd.f32 %v3984, %v3985
      %v3987 = vsel %vm2994, %v3967, 0.0
      %v3988 = vadd.f32 %v3986, %v3987
      %v3989 = vsel %vm2994, %v3968, 0.0
      %v3990 = vadd.f32 %v3988, %v3989
      %v3991 = vsel %vm2994, %v3969, 0.0
      %v3992 = vadd.f32 %v3990, %v3991
      %v3993 = vsel %vm2994, %v3970, 0.0
      %v3994 = vadd.f32 %v3992, %v3993
      %v3995 = vsel %vm2994, %v3971, 0.0
      %v3996 = vadd.f32 %v3994, %v3995
      %v3997 = vsel %vm2994, %v3972, 0.0
      %v3998 = vadd.f32 %v3996, %v3997
      %v3999 = vsel %vm2994, %v3973, 0.0
      %v4000 = vadd.f32 %v3998, %v3999
      %v4001 = vsel %vm2994, %v3974, 0.0
      %v4002 = vadd.f32 %v4000, %v4001
      %v4003 = vsel %vm2994, %v3975, 0.0
      %v4004 = vadd.f32 %v4002, %v4003
      %v4005 = vsel %vm2994, %v3976, 0.0
      %v4006 = vadd.f32 %v4004, %v4005
      %v4007 = vsel %vm2994, %v3977, 0.0
      %v4008 = vadd.f32 %v4006, %v4007
      %v4009 = vrot.slane %v4008, 4
      %v4010 = vadd.f32 %v4008, %v4009
      %v4011 = vrot.slane %v4010, 2
      %v4012 = vadd.f32 %v4010, %v4011
      %v4013 = vrot.slane %v4012, 1
      %v4014 = vadd.f32 %v4012, %v4013
      %v4015 = vmul.f32 %v4014, %v3032
      %v4016 = vadd.f32 %v4015, 1e-05
      %v4017 = vrsqrt.pop %v4016
      %v4018 = vmul.f32 %v3946, %v4017
      %v4019 = vmul.f32 %v3947, %v4017
      %v4020 = vmul.f32 %v3948, %v4017
      %v4021 = vmul.f32 %v3949, %v4017
      %v4022 = vmul.f32 %v3950, %v4017
      %v4023 = vmul.f32 %v3951, %v4017
      %v4024 = vmul.f32 %v3952, %v4017
      %v4025 = vmul.f32 %v3953, %v4017
      %v4026 = vmul.f32 %v3954, %v4017
      %v4027 = vmul.f32 %v3955, %v4017
      %v4028 = vmul.f32 %v3956, %v4017
      %v4029 = vmul.f32 %v3957, %v4017
      %v4030 = vmul.f32 %v3958, %v4017
      %v4031 = vmul.f32 %v3959, %v4017
      %v4032 = vmul.f32 %v3960, %v4017
      %v4033 = vmul.f32 %v3961, %v4017
      %4035 = vset.pattern.permute.xlu0 0
      %4036 = vperm.xlu0 %4035, %v3876
      %v4037 = vpop.permute.xlu0 %4036
      %4040 = vset.pattern.permute.xlu0 0
      %4041 = vperm.xlu0 %4040, %v3877
      %v4042 = vpop.permute.xlu0 %4041
      %4045 = vset.pattern.permute.xlu0 0
      %4046 = vperm.xlu0 %4045, %v3878
      %v4047 = vpop.permute.xlu0 %4046
      %4050 = vset.pattern.permute.xlu0 0
      %4051 = vperm.xlu0 %4050, %v3879
      %v4052 = vpop.permute.xlu0 %4051
      %4055 = vset.pattern.permute.xlu0 0
      %4056 = vperm.xlu0 %4055, %v3880
      %v4057 = vpop.permute.xlu0 %4056
      %4060 = vset.pattern.permute.xlu0 0
      %4061 = vperm.xlu0 %4060, %v3881
      %v4062 = vpop.permute.xlu0 %4061
      %4065 = vset.pattern.permute.xlu0 0
      %4066 = vperm.xlu0 %4065, %v3882
      %v4067 = vpop.permute.xlu0 %4066
      %4070 = vset.pattern.permute.xlu0 0
      %4071 = vperm.xlu0 %4070, %v3883
      %v4072 = vpop.permute.xlu0 %4071
      %4075 = vset.pattern.permute.xlu0 0
      %4076 = vperm.xlu0 %4075, %v3884
      %v4077 = vpop.permute.xlu0 %4076
      %4080 = vset.pattern.permute.xlu0 0
      %4081 = vperm.xlu0 %4080, %v3885
      %v4082 = vpop.permute.xlu0 %4081
      %4085 = vset.pattern.permute.xlu0 0
      %4086 = vperm.xlu0 %4085, %v3886
      %v4087 = vpop.permute.xlu0 %4086
      %4090 = vset.pattern.permute.xlu0 0
      %4091 = vperm.xlu0 %4090, %v3887
      %v4092 = vpop.permute.xlu0 %4091
      %4095 = vset.pattern.permute.xlu0 0
      %4096 = vperm.xlu0 %4095, %v3888
      %v4097 = vpop.permute.xlu0 %4096
      %4100 = vset.pattern.permute.xlu0 0
      %4101 = vperm.xlu0 %4100, %v3889
      %v4102 = vpop.permute.xlu0 %4101
      %4105 = vset.pattern.permute.xlu0 0
      %4106 = vperm.xlu0 %4105, %v3890
      %v4107 = vpop.permute.xlu0 %4106
      %4110 = vset.pattern.permute.xlu0 0
      %4111 = vperm.xlu0 %4110, %v3891
      %v4112 = vpop.permute.xlu0 %4111
      %v4114 = vmul.f32 %v4018, %v4037
      %v4115 = vmul.f32 %v4019, %v4042
      %v4116 = vmul.f32 %v4020, %v4047
      %v4117 = vmul.f32 %v4021, %v4052
      %v4118 = vmul.f32 %v4022, %v4057
      %v4119 = vmul.f32 %v4023, %v4062
      %v4120 = vmul.f32 %v4024, %v4067
      %v4121 = vmul.f32 %v4025, %v4072
      %v4122 = vmul.f32 %v4026, %v4077
      %v4123 = vmul.f32 %v4027, %v4082
      %v4124 = vmul.f32 %v4028, %v4087
      %v4125 = vmul.f32 %v4029, %v4092
      %v4126 = vmul.f32 %v4030, %v4097
      %v4127 = vmul.f32 %v4031, %v4102
      %v4128 = vmul.f32 %v4032, %v4107
      %v4129 = vmul.f32 %v4033, %v4112
      %4131 = vset.pattern.permute.xlu0 0
      %4132 = vperm.xlu0 %4131, %v3892
      %v4133 = vpop.permute.xlu0 %4132
      %4136 = vset.pattern.permute.xlu0 0
      %4137 = vperm.xlu0 %4136, %v3893
      %v4138 = vpop.permute.xlu0 %4137
      %4141 = vset.pattern.permute.xlu0 0
      %4142 = vperm.xlu0 %4141, %v3894
      %v4143 = vpop.permute.xlu0 %4142
      %4146 = vset.pattern.permute.xlu0 0
      %4147 = vperm.xlu0 %4146, %v3895
      %v4148 = vpop.permute.xlu0 %4147
      %4151 = vset.pattern.permute.xlu0 0
      %4152 = vperm.xlu0 %4151, %v3896
      %v4153 = vpop.permute.xlu0 %4152
      %4156 = vset.pattern.permute.xlu0 0
      %4157 = vperm.xlu0 %4156, %v3897
      %v4158 = vpop.permute.xlu0 %4157
      %4161 = vset.pattern.permute.xlu0 0
      %4162 = vperm.xlu0 %4161, %v3898
      %v4163 = vpop.permute.xlu0 %4162
      %4166 = vset.pattern.permute.xlu0 0
      %4167 = vperm.xlu0 %4166, %v3899
      %v4168 = vpop.permute.xlu0 %4167
      %4171 = vset.pattern.permute.xlu0 0
      %4172 = vperm.xlu0 %4171, %v3900
      %v4173 = vpop.permute.xlu0 %4172
      %4176 = vset.pattern.permute.xlu0 0
      %4177 = vperm.xlu0 %4176, %v3901
      %v4178 = vpop.permute.xlu0 %4177
      %4181 = vset.pattern.permute.xlu0 0
      %4182 = vperm.xlu0 %4181, %v3902
      %v4183 = vpop.permute.xlu0 %4182
      %4186 = vset.pattern.permute.xlu0 0
      %4187 = vperm.xlu0 %4186, %v3903
      %v4188 = vpop.permute.xlu0 %4187
      %4191 = vset.pattern.permute.xlu0 0
      %4192 = vperm.xlu0 %4191, %v3904
      %v4193 = vpop.permute.xlu0 %4192
      %4196 = vset.pattern.permute.xlu0 0
      %4197 = vperm.xlu0 %4196, %v3905
      %v4198 = vpop.permute.xlu0 %4197
      %4201 = vset.pattern.permute.xlu0 0
      %4202 = vperm.xlu0 %4201, %v3906
      %v4203 = vpop.permute.xlu0 %4202
      %4206 = vset.pattern.permute.xlu0 0
      %4207 = vperm.xlu0 %4206, %v3907
      %v4208 = vpop.permute.xlu0 %4207
      %v4210 = vadd.f32 %v4114, %v4133
      %v4211 = vadd.f32 %v4115, %v4138
      %v4212 = vadd.f32 %v4116, %v4143
      %v4213 = vadd.f32 %v4117, %v4148
      %v4214 = vadd.f32 %v4118, %v4153
      %v4215 = vadd.f32 %v4119, %v4158
      %v4216 = vadd.f32 %v4120, %v4163
      %v4217 = vadd.f32 %v4121, %v4168
      %v4218 = vadd.f32 %v4122, %v4173
      %v4219 = vadd.f32 %v4123, %v4178
      %v4220 = vadd.f32 %v4124, %v4183
      %v4221 = vadd.f32 %v4125, %v4188
      %v4222 = vadd.f32 %v4126, %v4193
      %v4223 = vadd.f32 %v4127, %v4198
      %v4224 = vadd.f32 %v4128, %v4203
      %v4225 = vadd.f32 %v4129, %v4208
      %4226 = vst.msk [vmem:[%s617] sm:$0xff] %vm2994, %v4210
      %4227 = vst.msk [vmem:[%s617 + $0x8] sm:$0xff] %vm2994, %v4211
      %4228 = vst.msk [vmem:[%s617 + $0x10] sm:$0xff] %vm2994, %v4212
      %4229 = vst.msk [vmem:[%s617 + $0x18] sm:$0xff] %vm2994, %v4213
      %4230 = vst.msk [vmem:[%s617 + $0x20] sm:$0xff] %vm2994, %v4214
      %4231 = vst.msk [vmem:[%s617 + $0x28] sm:$0xff] %vm2994, %v4215
      %4232 = vst.msk [vmem:[%s617 + $0x30] sm:$0xff] %vm2994, %v4216
      %4233 = vst.msk [vmem:[%s617 + $0x38] sm:$0xff] %vm2994, %v4217
      %4234 = vst.msk [vmem:[%s617 + $0x40] sm:$0xff] %vm2994, %v4218
      %4235 = vst.msk [vmem:[%s617 + $0x48] sm:$0xff] %vm2994, %v4219
      %4236 = vst.msk [vmem:[%s617 + $0x50] sm:$0xff] %vm2994, %v4220
      %4237 = vst.msk [vmem:[%s617 + $0x58] sm:$0xff] %vm2994, %v4221
      %4238 = vst.msk [vmem:[%s617 + $0x60] sm:$0xff] %vm2994, %v4222
      %4239 = vst.msk [vmem:[%s617 + $0x68] sm:$0xff] %vm2994, %v4223
      %4240 = vst.msk [vmem:[%s617 + $0x70] sm:$0xff] %vm2994, %v4224
      %4241 = vst.msk [vmem:[%s617 + $0x78] sm:$0xff] %vm2994, %v4225
      %p4242 = scmp.lt.s32.totalorder %s39, 1
      %s4243 = scalar_select %p4242, %s39, 1
      %p4244 = scmp.lt.s32.totalorder %s40, 0
      %s4245 = scalar_select %p4244, %s40, 0
      %s4246 = smul.addr %s4243, 16
      %s4247 = sadd.s32 %s4245, %s4246
      %s4248 = smul.addr %s4247, 8
      %s4249 = scalar_lea.vmem %s18, %s4248
      // Predicated region
      $region89: #{tpu_custom_call.1} parent=87 // pred_check
        %p4250 = pneg %p438
      $region90: #{tpu_custom_call.1} parent=87 // pred_check_branch
        %4252 = sbr.rel (%p4250) target = $region92
      $region91: #{tpu_custom_call.1} parent=87 // pred_region
        _
      $region92: #{tpu_custom_call.1} parent=87 // pred_fallthru
        _
    $region88: #{tpu_custom_call.1} parent=5 // pred_fallthru
      _
    %p4253 = scmp.le.s32.totalorder 2, %s30
    // Predicated region
    $region93: #{tpu_custom_call.1} parent=5 // pred_check
      %p4254 = pneg %p4253
    $region94: #{tpu_custom_call.1} parent=5 // pred_check_branch
      %4256 = sbr.rel (%p4254) target = $region96
    $region95: #{tpu_custom_call.1} parent=5 // pred_region
      %s4257 = ssub.s32 %s30, 2
      // Predicated region
      $region97: #{tpu_custom_call.1} parent=95 // pred_check
        %p4258 = pneg %p444
      $region98: #{tpu_custom_call.1} parent=95 // pred_check_branch
        %4260 = sbr.rel (%p4258) target = $region100
      $region99: #{tpu_custom_call.1} parent=95 // pred_region
        %p4261 = scmp.lt.s32.totalorder %s41, 1
        %s4262 = scalar_select %p4261, %s41, 1
        %p4263 = scmp.lt.s32.totalorder %s42, 0
        %s4264 = scalar_select %p4263, %s42, 0
        %s4265 = smul.addr %s4262, 16
        %s4266 = sadd.s32 %s4264, %s4265
        %s4267 = smul.addr %s4266, 8
        %s4268 = scalar_lea.vmem %s18, %s4267
      $region100: #{tpu_custom_call.1} parent=95 // pred_fallthru
        _
    $region96: #{tpu_custom_call.1} parent=5 // pred_fallthru
      _
  $region6: #{tpu_custom_call.1} parent=0 // loop_footer
    %s34 = sadd.s32 1, %s30
  $region7: #{tpu_custom_call.1} parent=0 // loop_footer_branch
    %29 = sbr.rel target = $region3
  $region8: #{tpu_custom_call.1} parent=0 // loop_exit
    _

</llo_original>
